<compile_context>
chip_gen: v7x
topology: tpu7x:2x2x1
jax: 0.10.0
libtpu: 0.0.40
codegen_flags: <defaults>
</compile_context>

<pallas_src>
import functools

import jax
import jax.numpy as jnp
from jax import lax
from jax.experimental import pallas as pl
from jax.experimental.pallas import tpu as pltpu

EPS_BN = 1e-5
EPS_SQ = 1e-12   # guards zero-norm capsules (exact PyTorch would NaN there)
C = 256          # channel width of every conv stage / primary-caps GEMM


# ---------------------------------------------------------------------------
# In-kernel helpers (operate on VMEM-resident values)
# ---------------------------------------------------------------------------
def _bn_relu(y, gamma, beta, mask, inv_count):
  """Training-mode BatchNorm2d (biased variance) + ReLU over valid rows only."""
  ym = y * mask
  mu = jnp.sum(ym, axis=0, keepdims=True) * inv_count       # (1, C)
  d = (y - mu) * mask                                        # reused for var & x_hat
  var = jnp.sum(d * d, axis=0, keepdims=True) * inv_count
  xn = d * lax.rsqrt(var + EPS_BN)
  return jnp.maximum(xn * gamma + beta, 0.0) * mask          # invalid rows -> 0


def _conv_taps(x_f32, w_ref, row_stride):
  """Conv over the position axis (t-major rows: position step == row_stride rows).

  x_f32: (M, Cin) f32 activations. w_ref: (k, Cin, Cout) bf16 VMEM weight taps.
  Rows whose receptive field crosses the valid region produce garbage and are
  masked by the caller; they are never read for valid downstream rows.
  """
  k = w_ref.shape[0]
  cin = w_ref.shape[1]
  m = x_f32.shape[0]
  xb = x_f32.astype(jnp.bfloat16)                            # cast once, not per tap
  if k > 1:
    xb = jnp.concatenate(
        [xb, jnp.zeros(((k - 1) * row_stride, cin), jnp.bfloat16)], axis=0)
  acc = None
  for dk in range(k):
    z = jnp.dot(xb[dk * row_stride: dk * row_stride + m, :], w_ref[dk],
                preferred_element_type=jnp.float32)
    acc = z if acc is None else acc + z
  return acc


# ---------------------------------------------------------------------------
# Fused CapsuleNet forward kernel
# ---------------------------------------------------------------------------
def _capsnet_kernel(xg_ref, bnp_ref, w2_hbm, wp_hbm, wd_hbm, out_ref,
                    w2_buf, wp_buf, wd_buf, sem):
  m = xg_ref.shape[0]
  bsz = out_ref.shape[0]
  lmax = m // bsz
  k1 = w2_buf.shape[0]
  l3 = wd_buf.shape[0]
  l1 = lmax - k1 + 1
  l2 = l1 - k1 + 1

  # Prefetch the big weights HBM->VMEM; each wait() sits right before first use so
  # w2 / wp / wd DMA hides behind conv1+BN1 / conv2+BN2 / primary-caps compute.
  cp_w2 = pltpu.make_async_copy(w2_hbm, w2_buf, sem.at[0]); cp_w2.start()
  cp_wp = pltpu.make_async_copy(wp_hbm, wp_buf, sem.at[1]); cp_wp.start()
  cp_wd = pltpu.make_async_copy(wd_hbm, wd_buf, sem.at[2]); cp_wd.start()

  bnp = bnp_ref[...]                                         # packed (8, C) f32
  b1, g1, be1 = bnp[0:1, :], bnp[1:2, :], bnp[2:3, :]
  b2, g2, be2 = bnp[3:4, :], bnp[4:5, :], bnp[5:6, :]
  bp = bnp[6:7, :]

  # t-major row layout (row = t*B + b) -> validity masks are plain row-index compares.
  row = lax.broadcasted_iota(jnp.int32, (m, 1), 0)
  m1 = (row < l1 * bsz).astype(jnp.float32)
  m2 = (row < l2 * bsz).astype(jnp.float32)

  # ---- conv1: pre-projected embedding taps (no MXU) + BN1 + ReLU ----------------
  xg = xg_ref[...]                                           # (M, k1*C) f32
  xgp = jnp.concatenate(
      [xg, jnp.zeros(((k1 - 1) * bsz, k1 * C), jnp.float32)], axis=0)
  y1 = xgp[0:m, 0:C]
  for dk in range(1, k1):
    y1 = y1 + xgp[dk * bsz: dk * bsz + m, dk * C:(dk + 1) * C]
  y1 = y1 + b1
  h1 = _bn_relu(y1, g1, be1, m1, 1.0 / float(bsz * l1))

  # ---- conv2 (1 x k1) + BN2 + ReLU -----------------------------------------------
  cp_w2.wait()
  y2 = _conv_taps(h1, w2_buf, bsz) + b2
  h2 = _bn_relu(y2, g2, be2, m2, 1.0 / float(bsz * l2))

  # ---- primary capsules: 8 x Conv2d(256->32, (1,k2)); output column = cap*32 + ch -
  cp_wp.wait()
  y3 = _conv_taps(h2, wp_buf, bsz) + bp                      # (M, C) f32

  # squash(dim=-1) over the 8 components at stride-32 columns via two constant 0/1
  # GEMMs (reduction + broadcast on the MXU instead of lane-slice VPU/XLU work).
  rsum = lax.broadcasted_iota(jnp.int32, (C, 32), 0)
  csum = lax.broadcasted_iota(jnp.int32, (C, 32), 1)
  sel_sum = ((rsum % 32) == csum).astype(jnp.float32)        # (C, 32)
  rbc = lax.broadcasted_iota(jnp.int32, (32, C), 0)
  cbc = lax.broadcasted_iota(jnp.int32, (32, C), 1)
  sel_bcast = (rbc == (cbc % 32)).astype(jnp.float32)        # (32, C)

  y3sq = y3 * y3
  sn32 = jnp.dot(y3sq, sel_sum, preferred_element_type=jnp.float32)     # (M, 32)
  fac32 = sn32 * lax.rsqrt(sn32 + EPS_SQ) / (1.0 + sn32)                # sqrt(sn)/(1+sn)
  fac = jnp.dot(fac32, sel_bcast, preferred_element_type=jnp.float32)   # (M, C)
  u_sq = y3 * fac

  # ---- digit capsules: only the B*l3 valid rows (leading rows in t-major layout) --
  cp_wd.wait()
  u_valid = u_sq[0:l3 * bsz, :].astype(jnp.bfloat16)         # (B*l3, C)
  acc = jnp.zeros((bsz, 16), jnp.float32)
  for t in range(l3):
    acc = acc + jnp.dot(u_valid[t * bsz:(t + 1) * bsz, :], wd_buf[t],
                        preferred_element_type=jnp.float32)
  s = acc * (1.0 / float(32 * l3))                           # uniform-routing mean

  # squash(dim=-1), class norm; one lane-dense (B, 128) store (caps | norm | zeros).
  s128 = jnp.concatenate([s, jnp.zeros((bsz, 112), jnp.float32)], axis=1)
  sn = jnp.sum(s128 * s128, axis=-1, keepdims=True)
  caps = s128 * (sn * lax.rsqrt(sn + EPS_SQ) / (1.0 + sn))
  cls = jnp.sqrt(jnp.sum(caps * caps, axis=-1, keepdims=True))
  lane = lax.broadcasted_iota(jnp.int32, (bsz, 128), 1)
  out_ref[...] = jnp.where(lane == 16, cls, caps)


# ---------------------------------------------------------------------------
# One-time parameter preparation (hoisted out of the per-call path)
# ---------------------------------------------------------------------------
def prepare_params(params, *, k1, k2, lmax):
  l1 = lmax - k1 + 1
  l2 = l1 - k1 + 1
  l3 = l2 - k2 + 1
  # conv1 folded into the embedding table: embW[v, dk*C + c] = emb[v, :] @ w1[c, 0, :, dk]
  embW = jnp.einsum("ve,cek->vkc", params["emb"], params["w1"][:, 0])
  embW = embW.reshape(params["emb"].shape[0], k1 * C).astype(jnp.float32)
  w2 = jnp.transpose(params["w2"][:, :, 0], (2, 1, 0)).astype(jnp.bfloat16)       # (k1,C,C)
  wp = jnp.transpose(params["wp"][:, :, :, 0, :], (3, 2, 0, 1)
                     ).reshape(k2, C, C).astype(jnp.bfloat16)                     # (k2,C,C)
  # digit-caps route weights: node order n = ch*l3 + t folded into a per-position (C,16)
  # weight whose row index matches the primary-caps GEMM column cap*32 + ch; UNPADDED.
  wd = params["wd"][0].reshape(32, l3, 8, 16).transpose(1, 2, 0, 3)
  wd = wd.reshape(l3, C, 16).astype(jnp.bfloat16)                                 # (l3,C,16)
  bnp = jnp.stack([params["b1"], params["g1"], params["beta1"],
                   params["b2"], params["g2"], params["beta2"],
                   params["bp"].reshape(C),
                   jnp.zeros((C,), jnp.float32)], axis=0).astype(jnp.float32)     # (8,C)
  return {"embW": embW, "w2": w2, "wp": wp, "wd": wd, "bnp": bnp}


# ---------------------------------------------------------------------------
# Per-call forward: embedding gather (data-dependent glue) + one pallas_call
# ---------------------------------------------------------------------------
def capsule_net_forward(prep, ids, *, k1, k2):
  B, lmax = ids.shape
  l3 = prep["wd"].shape[0]
  M = B * lmax

  # pre-projected embedding gather into t-major rows (row = t*B + b)
  xg = jnp.take(prep["embW"], ids, axis=0)                   # (B, lmax, k1*C)
  xg = jnp.transpose(xg, (1, 0, 2)).reshape(M, k1 * C)

  flops = (2 * M * C * C * (k1 + k2) + 2 * M * C * 32 + 2 * M * 32 * C
           + 2 * l3 * B * C * 16 + 16 * M * C)
  bytes_accessed = (xg.size * 4 + prep["bnp"].size * 4 + prep["w2"].size * 2
                    + prep["wp"].size * 2 + prep["wd"].size * 2 + B * 128 * 4)

  out = pl.pallas_call(
      _capsnet_kernel,
      out_shape=jax.ShapeDtypeStruct((B, 128), jnp.float32),
      grid=(1,),
      in_specs=[
          pl.BlockSpec((M, k1 * C), lambda i: (0, 0)),
          pl.BlockSpec((8, C), lambda i: (0, 0)),
          pl.BlockSpec(memory_space=pl.ANY),     # w2: manual DMA, overlapped with conv1
          pl.BlockSpec(memory_space=pl.ANY),     # wp: overlapped with conv2
          pl.BlockSpec(memory_space=pl.ANY),     # wd: overlapped with primary caps
      ],
      out_specs=pl.BlockSpec((B, 128), lambda i: (0, 0)),
      scratch_shapes=[
          pltpu.VMEM((k1, C, C), jnp.bfloat16),
          pltpu.VMEM((k2, C, C), jnp.bfloat16),
          pltpu.VMEM((l3, C, 16), jnp.bfloat16),
          pltpu.SemaphoreType.DMA((3,)),
      ],
      compiler_params=pltpu.CompilerParams(dimension_semantics=("arbitrary",)),
      cost_estimate=pl.CostEstimate(flops=int(flops),
                                    transcendentals=int(M * 32 + 2 * C + 4 * B),
                                    bytes_accessed=int(bytes_accessed)),
  )(xg, prep["bnp"], prep["w2"], prep["wp"], prep["wd"])

  caps = out[:, :16]           # squashed digit capsule (16-dim)
  classes = out[:, 16:17]      # L2 norm of the squashed capsule
  return classes, caps[:, None, :]      # param['dim'] == 1 path


# ---------------------------------------------------------------------------
# Pure-JAX f32 reference (mirrors the PyTorch forward) for a numerical check
# ---------------------------------------------------------------------------
def _reference_forward(params, ids):
  B = ids.shape[0]
  x = params["emb"][ids]                                     # (B, L, E)
  x = jnp.transpose(x, (0, 2, 1))[:, None]                   # (B, 1, E, L)

  def conv(h, w, b):
    return lax.conv_general_dilated(h, w, (1, 1), "VALID") + b[None, :, None, None]

  def bn(y, g, be):
    mu = jnp.mean(y, axis=(0, 2, 3), keepdims=True)
    var = jnp.mean((y - mu) ** 2, axis=(0, 2, 3), keepdims=True)
    return ((y - mu) / jnp.sqrt(var + EPS_BN) * g[None, :, None, None]
            + be[None, :, None, None])

  def squash(t):
    sn = jnp.sum(t * t, axis=-1, keepdims=True)
    return sn / (1.0 + sn) * t / jnp.sqrt(sn)

  h1 = jnp.maximum(bn(conv(x, params["w1"], params["b1"]),
                      params["g1"], params["beta1"]), 0.0)
  h2 = jnp.maximum(bn(conv(h1, params["w2"], params["b2"]),
                      params["g2"], params["beta2"]), 0.0)
  u = jnp.concatenate(
      [conv(h2, params["wp"][i], params["bp"][i]).reshape(B, -1, 1) for i in range(8)],
      axis=-1)
  u = squash(u)                                              # (B, 32*l3, 8)
  priors = jnp.einsum("bnc,ncd->bnd", u, params["wd"][0])    # (B, N, 16)
  v = squash(jnp.mean(priors, axis=1))                       # (B, 16)
  classes = jnp.sqrt(jnp.sum(v * v, axis=-1, keepdims=True))
  return classes, v[:, None, :]


# ---------------------------------------------------------------------------
# Parameters (deterministic synthetic init — not a checkpoint)
# ---------------------------------------------------------------------------
def init_params(key, vocab, emb_size, k1, k2, n_route):
  ks = jax.random.split(key, 8)
  p = {}
  p["emb"] = jax.random.normal(ks[0], (vocab, emb_size), jnp.float32)
  p["w1"] = jax.random.normal(ks[1], (256, 1, emb_size, k1),
                              jnp.float32) / jnp.sqrt(emb_size * k1)
  p["b1"] = jax.random.normal(ks[2], (256,), jnp.float32) * 0.01
  p["g1"] = jnp.ones((256,), jnp.float32)        # BatchNorm2d default init
  p["beta1"] = jnp.zeros((256,), jnp.float32)
  p["w2"] = jax.random.normal(ks[3], (256, 256, 1, k1),
                              jnp.float32) / jnp.sqrt(256 * k1)
  p["b2"] = jax.random.normal(ks[4], (256,), jnp.float32) * 0.01
  p["g2"] = jnp.ones((256,), jnp.float32)
  p["beta2"] = jnp.zeros((256,), jnp.float32)
  # 8 primary-capsule Conv2d(256 -> 32, (1, k2)) weights, stacked
  p["wp"] = jax.random.normal(ks[5], (8, 32, 256, 1, k2),
                              jnp.float32) / jnp.sqrt(256 * k2)
  p["bp"] = jax.random.normal(ks[6], (8, 32), jnp.float32) * 0.01
  # digit capsule route_weights: (num_capsules=1, num_route_nodes, 8, 16)
  p["wd"] = jax.random.normal(ks[7], (1, n_route, 8, 16), jnp.float32)
  return p


# ---------------------------------------------------------------------------
if __name__ == "__main__":
  key = jax.random.PRNGKey(0)
  k_param, k_ids = jax.random.split(key)

  vocab = 30          # len(dictionary)
  emb_size = 20
  conv1_kernel = 3
  conv2_kernel = 3
  max_len = 16        # config['Max_Len']
  batch = 2

  l3 = max_len - 2 * conv1_kernel + 2 - conv2_kernel + 1
  n_route = 32 * 1 * l3

  params = init_params(k_param, vocab, emb_size, conv1_kernel, conv2_kernel,
                       n_route)
  ids = jax.random.randint(k_ids, (batch, max_len), 0, vocab, dtype=jnp.int32)

  # one-time parameter prep (reused across calls; NOT inside the per-call jit)
  prep = jax.block_until_ready(
      prepare_params(params, k1=conv1_kernel, k2=conv2_kernel, lmax=max_len))

  fwd = jax.jit(functools.partial(capsule_net_forward,
                                  k1=conv1_kernel, k2=conv2_kernel))
  classes, x = fwd(prep, ids)
  jax.block_until_ready((classes, x))

  assert classes.shape == (batch, 1), classes.shape
  assert x.shape == (batch, 1, 16), x.shape
  assert bool(jnp.all(jnp.isfinite(classes))) and bool(jnp.all(jnp.isfinite(x)))

  # numerical check vs. the pure-JAX f32 reference (loose tol: bf16 MXU operands)
  ref_classes, ref_x = _reference_forward(params, ids)
  assert bool(jnp.allclose(classes, ref_classes, rtol=2e-1, atol=3e-3)), (
      classes, ref_classes)
  assert bool(jnp.allclose(x, ref_x, rtol=2e-1, atol=3e-3)), (x, ref_x)

  print("KERNEL_OK")
</pallas_src>

<mosaic_0001>
module attributes {stable_mosaic.version = 11 : i64} {
  func.func @_capsnet_kernel(%arg0: i32, %arg1: memref<32x768xf32, #tpu.memory_space<vmem>>, %arg2: memref<8x256xf32, #tpu.memory_space<vmem>>, %arg3: memref<3x256x256xbf16, #tpu.memory_space<any>>, %arg4: memref<3x256x256xbf16, #tpu.memory_space<any>>, %arg5: memref<10x256x16xbf16, #tpu.memory_space<any>>, %arg6: memref<2x128xf32, #tpu.memory_space<vmem>>, %arg7: memref<3x256x256xbf16, #tpu.memory_space<vmem>>, %arg8: memref<3x256x256xbf16, #tpu.memory_space<vmem>>, %arg9: memref<10x256x16xbf16, #tpu.memory_space<vmem>>, %arg10: memref<3x!tpu.dma_semaphore, #tpu.memory_space<semaphore_mem>>) attributes {dimension_semantics = [#tpu.dimension_semantics<arbitrary>], iteration_bounds = array<i64: 1>, scalar_prefetch = 0 : i64, scratch_operands = 4 : i64, tpu.core_type = #tpu.core_type<tc>, window_params = [{pipeline_mode = #tpu.pipeline_mode<synchronous>, transform_indices = @transform_0, window_bounds = array<i64: 32, 768>}, {pipeline_mode = #tpu.pipeline_mode<synchronous>, transform_indices = @transform_1, window_bounds = array<i64: 8, 256>}, {}, {}, {}, {pipeline_mode = #tpu.pipeline_mode<synchronous>, transform_indices = @transform_5, window_bounds = array<i64: 2, 128>}]} {
    %c0_i32 = arith.constant 0 : i32
    %0 = tpu.memref_slice %arg10[%c0_i32] : memref<3x!tpu.dma_semaphore, #tpu.memory_space<semaphore_mem>> -> memref<1x!tpu.dma_semaphore, #tpu.memory_space<semaphore_mem>>
    %1 = tpu.memref_squeeze %0 : memref<1x!tpu.dma_semaphore, #tpu.memory_space<semaphore_mem>> -> memref<!tpu.dma_semaphore, #tpu.memory_space<semaphore_mem>>
    tpu.enqueue_dma source(%arg3 : memref<3x256x256xbf16, #tpu.memory_space<any>>) target(%arg7 : memref<3x256x256xbf16, #tpu.memory_space<vmem>>) target_semaphore(%1 : memref<!tpu.dma_semaphore, #tpu.memory_space<semaphore_mem>>)
    %c1_i32 = arith.constant 1 : i32
    %2 = tpu.memref_slice %arg10[%c1_i32] : memref<3x!tpu.dma_semaphore, #tpu.memory_space<semaphore_mem>> -> memref<1x!tpu.dma_semaphore, #tpu.memory_space<semaphore_mem>>
    %3 = tpu.memref_squeeze %2 : memref<1x!tpu.dma_semaphore, #tpu.memory_space<semaphore_mem>> -> memref<!tpu.dma_semaphore, #tpu.memory_space<semaphore_mem>>
    tpu.enqueue_dma source(%arg4 : memref<3x256x256xbf16, #tpu.memory_space<any>>) target(%arg8 : memref<3x256x256xbf16, #tpu.memory_space<vmem>>) target_semaphore(%3 : memref<!tpu.dma_semaphore, #tpu.memory_space<semaphore_mem>>)
    %c2_i32 = arith.constant 2 : i32
    %4 = tpu.memref_slice %arg10[%c2_i32] : memref<3x!tpu.dma_semaphore, #tpu.memory_space<semaphore_mem>> -> memref<1x!tpu.dma_semaphore, #tpu.memory_space<semaphore_mem>>
    %5 = tpu.memref_squeeze %4 : memref<1x!tpu.dma_semaphore, #tpu.memory_space<semaphore_mem>> -> memref<!tpu.dma_semaphore, #tpu.memory_space<semaphore_mem>>
    tpu.enqueue_dma source(%arg5 : memref<10x256x16xbf16, #tpu.memory_space<any>>) target(%arg9 : memref<10x256x16xbf16, #tpu.memory_space<vmem>>) target_semaphore(%5 : memref<!tpu.dma_semaphore, #tpu.memory_space<semaphore_mem>>)
    %c0 = arith.constant 0 : index
    %c0_0 = arith.constant 0 : index
    %6 = vector.load %arg2[%c0, %c0_0] : memref<8x256xf32, #tpu.memory_space<vmem>>, vector<8x256xf32>
    %7 = vector.extract_strided_slice %6 {offsets = [0, 0], sizes = [1, 256], strides = [1, 1]} : vector<8x256xf32> to vector<1x256xf32>
    %8 = vector.extract_strided_slice %6 {offsets = [1, 0], sizes = [1, 256], strides = [1, 1]} : vector<8x256xf32> to vector<1x256xf32>
    %9 = vector.extract_strided_slice %6 {offsets = [2, 0], sizes = [1, 256], strides = [1, 1]} : vector<8x256xf32> to vector<1x256xf32>
    %10 = vector.extract_strided_slice %6 {offsets = [3, 0], sizes = [1, 256], strides = [1, 1]} : vector<8x256xf32> to vector<1x256xf32>
    %11 = vector.extract_strided_slice %6 {offsets = [4, 0], sizes = [1, 256], strides = [1, 1]} : vector<8x256xf32> to vector<1x256xf32>
    %12 = vector.extract_strided_slice %6 {offsets = [5, 0], sizes = [1, 256], strides = [1, 1]} : vector<8x256xf32> to vector<1x256xf32>
    %13 = vector.extract_strided_slice %6 {offsets = [6, 0], sizes = [1, 256], strides = [1, 1]} : vector<8x256xf32> to vector<1x256xf32>
    %14 = tpu.iota {dimensions = array<i32: 0>} : vector<32x1xi32>
    %c28_i32 = arith.constant 28 : i32
    %15 = vector.broadcast %c28_i32 : i32 to vector<32x1xi32>
    %16 = arith.cmpi slt, %14, %15 : vector<32x1xi32>
    %17 = arith.extui %16 : vector<32x1xi1> to vector<32x1xi32>
    %18 = arith.sitofp %17 : vector<32x1xi32> to vector<32x1xf32>
    %c24_i32 = arith.constant 24 : i32
    %19 = vector.broadcast %c24_i32 : i32 to vector<32x1xi32>
    %20 = arith.cmpi slt, %14, %19 : vector<32x1xi32>
    %21 = arith.extui %20 : vector<32x1xi1> to vector<32x1xi32>
    %22 = arith.sitofp %21 : vector<32x1xi32> to vector<32x1xf32>
    %c0_1 = arith.constant 0 : index
    %c0_2 = arith.constant 0 : index
    %23 = vector.load %arg1[%c0_1, %c0_2] : memref<32x768xf32, #tpu.memory_space<vmem>>, vector<32x768xf32>
    %cst = arith.constant 0.000000e+00 : f32
    %24 = vector.broadcast %cst : f32 to vector<4x768xf32>
    %25 = tpu.concatenate %23, %24 in 0 : vector<32x768xf32>, vector<4x768xf32> -> vector<36x768xf32>
    %26 = vector.extract_strided_slice %25 {offsets = [0, 0], sizes = [32, 256], strides = [1, 1]} : vector<36x768xf32> to vector<32x256xf32>
    %27 = vector.extract_strided_slice %25 {offsets = [2, 256], sizes = [32, 256], strides = [1, 1]} : vector<36x768xf32> to vector<32x256xf32>
    %28 = arith.addf %26, %27 : vector<32x256xf32>
    %29 = vector.extract_strided_slice %25 {offsets = [4, 512], sizes = [32, 256], strides = [1, 1]} : vector<36x768xf32> to vector<32x256xf32>
    %30 = arith.addf %28, %29 : vector<32x256xf32>
    %31 = vector.broadcast %7 : vector<1x256xf32> to vector<32x256xf32>
    %32 = arith.addf %30, %31 : vector<32x256xf32>
    %33 = vector.broadcast %18 : vector<32x1xf32> to vector<32x256xf32>
    %34 = arith.mulf %32, %33 : vector<32x256xf32>
    %cst_3 = arith.constant dense<0.000000e+00> : vector<256xf32>
    %35 = vector.multi_reduction <add>, %34, %cst_3 [0] : vector<32x256xf32> to vector<256xf32>
    %36 = vector.shape_cast %35 : vector<256xf32> to vector<1x256xf32>
    %cst_4 = arith.constant 0.0357142873 : f32
    %37 = vector.broadcast %cst_4 : f32 to vector<1x256xf32>
    %38 = arith.mulf %36, %37 : vector<1x256xf32>
    %39 = vector.broadcast %38 : vector<1x256xf32> to vector<32x256xf32>
    %40 = arith.subf %32, %39 : vector<32x256xf32>
    %41 = vector.broadcast %18 : vector<32x1xf32> to vector<32x256xf32>
    %42 = arith.mulf %40, %41 : vector<32x256xf32>
    %43 = arith.mulf %42, %42 : vector<32x256xf32>
    %cst_5 = arith.constant dense<0.000000e+00> : vector<256xf32>
    %44 = vector.multi_reduction <add>, %43, %cst_5 [0] : vector<32x256xf32> to vector<256xf32>
    %45 = vector.shape_cast %44 : vector<256xf32> to vector<1x256xf32>
    %cst_6 = arith.constant 0.0357142873 : f32
    %46 = vector.broadcast %cst_6 : f32 to vector<1x256xf32>
    %47 = arith.mulf %45, %46 : vector<1x256xf32>
    %cst_7 = arith.constant 9.99999974E-6 : f32
    %48 = vector.broadcast %cst_7 : f32 to vector<1x256xf32>
    %49 = arith.addf %47, %48 : vector<1x256xf32>
    %50 = math.rsqrt %49 : vector<1x256xf32>
    %51 = vector.broadcast %50 : vector<1x256xf32> to vector<32x256xf32>
    %52 = arith.mulf %42, %51 : vector<32x256xf32>
    %53 = vector.broadcast %8 : vector<1x256xf32> to vector<32x256xf32>
    %54 = arith.mulf %52, %53 : vector<32x256xf32>
    %55 = vector.broadcast %9 : vector<1x256xf32> to vector<32x256xf32>
    %56 = arith.addf %54, %55 : vector<32x256xf32>
    %cst_8 = arith.constant 0.000000e+00 : f32
    %57 = vector.broadcast %cst_8 : f32 to vector<32x256xf32>
    %58 = arith.maximumf %56, %57 : vector<32x256xf32>
    %59 = vector.broadcast %18 : vector<32x1xf32> to vector<32x256xf32>
    %60 = arith.mulf %58, %59 : vector<32x256xf32>
    %c0_i32_9 = arith.constant 0 : i32
    %61 = tpu.memref_slice %arg10[%c0_i32_9] : memref<3x!tpu.dma_semaphore, #tpu.memory_space<semaphore_mem>> -> memref<1x!tpu.dma_semaphore, #tpu.memory_space<semaphore_mem>>
    %62 = tpu.memref_squeeze %61 : memref<1x!tpu.dma_semaphore, #tpu.memory_space<semaphore_mem>> -> memref<!tpu.dma_semaphore, #tpu.memory_space<semaphore_mem>>
    tpu.wait_dma2 semaphore(%62 : memref<!tpu.dma_semaphore, #tpu.memory_space<semaphore_mem>>) src(%arg3 : memref<3x256x256xbf16, #tpu.memory_space<any>>) dst(%arg7 : memref<3x256x256xbf16, #tpu.memory_space<vmem>>)
    %63 = arith.truncf %60 : vector<32x256xf32> to vector<32x256xbf16>
    %cst_10 = arith.constant 0.000000e+00 : bf16
    %64 = vector.broadcast %cst_10 : bf16 to vector<4x256xbf16>
    %65 = tpu.concatenate %63, %64 in 0 : vector<32x256xbf16>, vector<4x256xbf16> -> vector<36x256xbf16>
    %66 = vector.extract_strided_slice %65 {offsets = [0, 0], sizes = [32, 256], strides = [1, 1]} : vector<36x256xbf16> to vector<32x256xbf16>
    %c0_11 = arith.constant 0 : index
    %c0_12 = arith.constant 0 : index
    %c0_13 = arith.constant 0 : index
    %67 = vector.load %arg7[%c0_11, %c0_12, %c0_13] : memref<3x256x256xbf16, #tpu.memory_space<vmem>>, vector<1x256x256xbf16>
    %68 = vector.shape_cast %67 : vector<1x256x256xbf16> to vector<256x256xbf16>
    %cst_14 = arith.constant dense<0.000000e+00> : vector<32x256xf32>
    %69 = tpu.matmul %66, %68, %cst_14 {dimension_numbers = #tpu.dot_dimension_numbers<[1], [0], [0], [1], [0, 0, 1, 1], [], []>} : vector<32x256xbf16>, vector<256x256xbf16>, vector<32x256xf32> -> vector<32x256xf32>
    %70 = vector.extract_strided_slice %65 {offsets = [2, 0], sizes = [32, 256], strides = [1, 1]} : vector<36x256xbf16> to vector<32x256xbf16>
    %c1 = arith.constant 1 : index
    %c0_15 = arith.constant 0 : index
    %c0_16 = arith.constant 0 : index
    %71 = vector.load %arg7[%c1, %c0_15, %c0_16] : memref<3x256x256xbf16, #tpu.memory_space<vmem>>, vector<1x256x256xbf16>
    %72 = vector.shape_cast %71 : vector<1x256x256xbf16> to vector<256x256xbf16>
    %cst_17 = arith.constant dense<0.000000e+00> : vector<32x256xf32>
    %73 = tpu.matmul %70, %72, %cst_17 {dimension_numbers = #tpu.dot_dimension_numbers<[1], [0], [0], [1], [0, 0, 1, 1], [], []>} : vector<32x256xbf16>, vector<256x256xbf16>, vector<32x256xf32> -> vector<32x256xf32>
    %74 = arith.addf %69, %73 : vector<32x256xf32>
    %75 = vector.extract_strided_slice %65 {offsets = [4, 0], sizes = [32, 256], strides = [1, 1]} : vector<36x256xbf16> to vector<32x256xbf16>
    %c2 = arith.constant 2 : index
    %c0_18 = arith.constant 0 : index
    %c0_19 = arith.constant 0 : index
    %76 = vector.load %arg7[%c2, %c0_18, %c0_19] : memref<3x256x256xbf16, #tpu.memory_space<vmem>>, vector<1x256x256xbf16>
    %77 = vector.shape_cast %76 : vector<1x256x256xbf16> to vector<256x256xbf16>
    %cst_20 = arith.constant dense<0.000000e+00> : vector<32x256xf32>
    %78 = tpu.matmul %75, %77, %cst_20 {dimension_numbers = #tpu.dot_dimension_numbers<[1], [0], [0], [1], [0, 0, 1, 1], [], []>} : vector<32x256xbf16>, vector<256x256xbf16>, vector<32x256xf32> -> vector<32x256xf32>
    %79 = arith.addf %74, %78 : vector<32x256xf32>
    %80 = vector.broadcast %10 : vector<1x256xf32> to vector<32x256xf32>
    %81 = arith.addf %79, %80 : vector<32x256xf32>
    %82 = vector.broadcast %22 : vector<32x1xf32> to vector<32x256xf32>
    %83 = arith.mulf %81, %82 : vector<32x256xf32>
    %cst_21 = arith.constant dense<0.000000e+00> : vector<256xf32>
    %84 = vector.multi_reduction <add>, %83, %cst_21 [0] : vector<32x256xf32> to vector<256xf32>
    %85 = vector.shape_cast %84 : vector<256xf32> to vector<1x256xf32>
    %cst_22 = arith.constant 0.0416666679 : f32
    %86 = vector.broadcast %cst_22 : f32 to vector<1x256xf32>
    %87 = arith.mulf %85, %86 : vector<1x256xf32>
    %88 = vector.broadcast %87 : vector<1x256xf32> to vector<32x256xf32>
    %89 = arith.subf %81, %88 : vector<32x256xf32>
    %90 = vector.broadcast %22 : vector<32x1xf32> to vector<32x256xf32>
    %91 = arith.mulf %89, %90 : vector<32x256xf32>
    %92 = arith.mulf %91, %91 : vector<32x256xf32>
    %cst_23 = arith.constant dense<0.000000e+00> : vector<256xf32>
    %93 = vector.multi_reduction <add>, %92, %cst_23 [0] : vector<32x256xf32> to vector<256xf32>
    %94 = vector.shape_cast %93 : vector<256xf32> to vector<1x256xf32>
    %cst_24 = arith.constant 0.0416666679 : f32
    %95 = vector.broadcast %cst_24 : f32 to vector<1x256xf32>
    %96 = arith.mulf %94, %95 : vector<1x256xf32>
    %cst_25 = arith.constant 9.99999974E-6 : f32
    %97 = vector.broadcast %cst_25 : f32 to vector<1x256xf32>
    %98 = arith.addf %96, %97 : vector<1x256xf32>
    %99 = math.rsqrt %98 : vector<1x256xf32>
    %100 = vector.broadcast %99 : vector<1x256xf32> to vector<32x256xf32>
    %101 = arith.mulf %91, %100 : vector<32x256xf32>
    %102 = vector.broadcast %11 : vector<1x256xf32> to vector<32x256xf32>
    %103 = arith.mulf %101, %102 : vector<32x256xf32>
    %104 = vector.broadcast %12 : vector<1x256xf32> to vector<32x256xf32>
    %105 = arith.addf %103, %104 : vector<32x256xf32>
    %cst_26 = arith.constant 0.000000e+00 : f32
    %106 = vector.broadcast %cst_26 : f32 to vector<32x256xf32>
    %107 = arith.maximumf %105, %106 : vector<32x256xf32>
    %108 = vector.broadcast %22 : vector<32x1xf32> to vector<32x256xf32>
    %109 = arith.mulf %107, %108 : vector<32x256xf32>
    %c1_i32_27 = arith.constant 1 : i32
    %110 = tpu.memref_slice %arg10[%c1_i32_27] : memref<3x!tpu.dma_semaphore, #tpu.memory_space<semaphore_mem>> -> memref<1x!tpu.dma_semaphore, #tpu.memory_space<semaphore_mem>>
    %111 = tpu.memref_squeeze %110 : memref<1x!tpu.dma_semaphore, #tpu.memory_space<semaphore_mem>> -> memref<!tpu.dma_semaphore, #tpu.memory_space<semaphore_mem>>
    tpu.wait_dma2 semaphore(%111 : memref<!tpu.dma_semaphore, #tpu.memory_space<semaphore_mem>>) src(%arg4 : memref<3x256x256xbf16, #tpu.memory_space<any>>) dst(%arg8 : memref<3x256x256xbf16, #tpu.memory_space<vmem>>)
    %112 = arith.truncf %109 : vector<32x256xf32> to vector<32x256xbf16>
    %cst_28 = arith.constant 0.000000e+00 : bf16
    %113 = vector.broadcast %cst_28 : bf16 to vector<4x256xbf16>
    %114 = tpu.concatenate %112, %113 in 0 : vector<32x256xbf16>, vector<4x256xbf16> -> vector<36x256xbf16>
    %115 = vector.extract_strided_slice %114 {offsets = [0, 0], sizes = [32, 256], strides = [1, 1]} : vector<36x256xbf16> to vector<32x256xbf16>
    %c0_29 = arith.constant 0 : index
    %c0_30 = arith.constant 0 : index
    %c0_31 = arith.constant 0 : index
    %116 = vector.load %arg8[%c0_29, %c0_30, %c0_31] : memref<3x256x256xbf16, #tpu.memory_space<vmem>>, vector<1x256x256xbf16>
    %117 = vector.shape_cast %116 : vector<1x256x256xbf16> to vector<256x256xbf16>
    %cst_32 = arith.constant dense<0.000000e+00> : vector<32x256xf32>
    %118 = tpu.matmul %115, %117, %cst_32 {dimension_numbers = #tpu.dot_dimension_numbers<[1], [0], [0], [1], [0, 0, 1, 1], [], []>} : vector<32x256xbf16>, vector<256x256xbf16>, vector<32x256xf32> -> vector<32x256xf32>
    %119 = vector.extract_strided_slice %114 {offsets = [2, 0], sizes = [32, 256], strides = [1, 1]} : vector<36x256xbf16> to vector<32x256xbf16>
    %c1_33 = arith.constant 1 : index
    %c0_34 = arith.constant 0 : index
    %c0_35 = arith.constant 0 : index
    %120 = vector.load %arg8[%c1_33, %c0_34, %c0_35] : memref<3x256x256xbf16, #tpu.memory_space<vmem>>, vector<1x256x256xbf16>
    %121 = vector.shape_cast %120 : vector<1x256x256xbf16> to vector<256x256xbf16>
    %cst_36 = arith.constant dense<0.000000e+00> : vector<32x256xf32>
    %122 = tpu.matmul %119, %121, %cst_36 {dimension_numbers = #tpu.dot_dimension_numbers<[1], [0], [0], [1], [0, 0, 1, 1], [], []>} : vector<32x256xbf16>, vector<256x256xbf16>, vector<32x256xf32> -> vector<32x256xf32>
    %123 = arith.addf %118, %122 : vector<32x256xf32>
    %124 = vector.extract_strided_slice %114 {offsets = [4, 0], sizes = [32, 256], strides = [1, 1]} : vector<36x256xbf16> to vector<32x256xbf16>
    %c2_37 = arith.constant 2 : index
    %c0_38 = arith.constant 0 : index
    %c0_39 = arith.constant 0 : index
    %125 = vector.load %arg8[%c2_37, %c0_38, %c0_39] : memref<3x256x256xbf16, #tpu.memory_space<vmem>>, vector<1x256x256xbf16>
    %126 = vector.shape_cast %125 : vector<1x256x256xbf16> to vector<256x256xbf16>
    %cst_40 = arith.constant dense<0.000000e+00> : vector<32x256xf32>
    %127 = tpu.matmul %124, %126, %cst_40 {dimension_numbers = #tpu.dot_dimension_numbers<[1], [0], [0], [1], [0, 0, 1, 1], [], []>} : vector<32x256xbf16>, vector<256x256xbf16>, vector<32x256xf32> -> vector<32x256xf32>
    %128 = arith.addf %123, %127 : vector<32x256xf32>
    %129 = vector.broadcast %13 : vector<1x256xf32> to vector<32x256xf32>
    %130 = arith.addf %128, %129 : vector<32x256xf32>
    %131 = tpu.iota {dimensions = array<i32: 0>} : vector<256x32xi32>
    %132 = tpu.iota {dimensions = array<i32: 1>} : vector<256x32xi32>
    %c32_i32 = arith.constant 32 : i32
    %c0_i32_41 = arith.constant 0 : i32
    %133 = arith.cmpi eq, %c32_i32, %c0_i32_41 : i32
    %c1_i32_42 = arith.constant 1 : i32
    %134 = arith.select %133, %c1_i32_42, %c32_i32 : i32
    %135 = vector.broadcast %134 : i32 to vector<256x32xi32>
    %136 = arith.remsi %131, %135 : vector<256x32xi32>
    %c0_i32_43 = arith.constant 0 : i32
    %137 = vector.broadcast %c0_i32_43 : i32 to vector<256x32xi32>
    %138 = arith.cmpi ne, %136, %137 : vector<256x32xi32>
    %c0_i32_44 = arith.constant 0 : i32
    %139 = vector.broadcast %c0_i32_44 : i32 to vector<256x32xi32>
    %140 = arith.cmpi slt, %136, %139 : vector<256x32xi32>
    %c0_i32_45 = arith.constant 0 : i32
    %141 = arith.cmpi slt, %134, %c0_i32_45 : i32
    %142 = vector.broadcast %141 : i1 to vector<256x32xi1>
    %143 = vector.broadcast %142 : vector<256x32xi1> to vector<256x32xi1>
    %144 = arith.xori %140, %143 : vector<256x32xi1>
    %145 = arith.andi %144, %138 : vector<256x32xi1>
    %146 = vector.broadcast %134 : i32 to vector<256x32xi32>
    %147 = arith.addi %136, %146 : vector<256x32xi32>
    %148 = arith.select %145, %147, %136 : vector<256x32xi1>, vector<256x32xi32>
    %149 = arith.cmpi eq, %148, %132 : vector<256x32xi32>
    %150 = arith.extui %149 : vector<256x32xi1> to vector<256x32xi32>
    %151 = arith.sitofp %150 : vector<256x32xi32> to vector<256x32xf32>
    %152 = tpu.iota {dimensions = array<i32: 0>} : vector<32x256xi32>
    %153 = tpu.iota {dimensions = array<i32: 1>} : vector<32x256xi32>
    %c32_i32_46 = arith.constant 32 : i32
    %c0_i32_47 = arith.constant 0 : i32
    %154 = arith.cmpi eq, %c32_i32_46, %c0_i32_47 : i32
    %c1_i32_48 = arith.constant 1 : i32
    %155 = arith.select %154, %c1_i32_48, %c32_i32_46 : i32
    %156 = vector.broadcast %155 : i32 to vector<32x256xi32>
    %157 = arith.remsi %153, %156 : vector<32x256xi32>
    %c0_i32_49 = arith.constant 0 : i32
    %158 = vector.broadcast %c0_i32_49 : i32 to vector<32x256xi32>
    %159 = arith.cmpi ne, %157, %158 : vector<32x256xi32>
    %c0_i32_50 = arith.constant 0 : i32
    %160 = vector.broadcast %c0_i32_50 : i32 to vector<32x256xi32>
    %161 = arith.cmpi slt, %157, %160 : vector<32x256xi32>
    %c0_i32_51 = arith.constant 0 : i32
    %162 = arith.cmpi slt, %155, %c0_i32_51 : i32
    %163 = vector.broadcast %162 : i1 to vector<32x256xi1>
    %164 = vector.broadcast %163 : vector<32x256xi1> to vector<32x256xi1>
    %165 = arith.xori %161, %164 : vector<32x256xi1>
    %166 = arith.andi %165, %159 : vector<32x256xi1>
    %167 = vector.broadcast %155 : i32 to vector<32x256xi32>
    %168 = arith.addi %157, %167 : vector<32x256xi32>
    %169 = arith.select %166, %168, %157 : vector<32x256xi1>, vector<32x256xi32>
    %170 = arith.cmpi eq, %152, %169 : vector<32x256xi32>
    %171 = arith.extui %170 : vector<32x256xi1> to vector<32x256xi32>
    %172 = arith.sitofp %171 : vector<32x256xi32> to vector<32x256xf32>
    %173 = arith.mulf %130, %130 : vector<32x256xf32>
    %cst_52 = arith.constant dense<0.000000e+00> : vector<32x32xf32>
    %174 = tpu.matmul %173, %151, %cst_52 {dimension_numbers = #tpu.dot_dimension_numbers<[1], [0], [0], [1], [0, 0, 1, 1], [], []>} : vector<32x256xf32>, vector<256x32xf32>, vector<32x32xf32> -> vector<32x32xf32>
    %cst_53 = arith.constant 9.99999996E-13 : f32
    %175 = vector.broadcast %cst_53 : f32 to vector<32x32xf32>
    %176 = arith.addf %174, %175 : vector<32x32xf32>
    %177 = math.rsqrt %176 : vector<32x32xf32>
    %178 = arith.mulf %174, %177 : vector<32x32xf32>
    %cst_54 = arith.constant 1.000000e+00 : f32
    %179 = vector.broadcast %cst_54 : f32 to vector<32x32xf32>
    %180 = arith.addf %179, %174 : vector<32x32xf32>
    %181 = arith.divf %178, %180 : vector<32x32xf32>
    %cst_55 = arith.constant dense<0.000000e+00> : vector<32x256xf32>
    %182 = tpu.matmul %181, %172, %cst_55 {dimension_numbers = #tpu.dot_dimension_numbers<[1], [0], [0], [1], [0, 0, 1, 1], [], []>} : vector<32x32xf32>, vector<32x256xf32>, vector<32x256xf32> -> vector<32x256xf32>
    %183 = arith.mulf %130, %182 : vector<32x256xf32>
    %c2_i32_56 = arith.constant 2 : i32
    %184 = tpu.memref_slice %arg10[%c2_i32_56] : memref<3x!tpu.dma_semaphore, #tpu.memory_space<semaphore_mem>> -> memref<1x!tpu.dma_semaphore, #tpu.memory_space<semaphore_mem>>
    %185 = tpu.memref_squeeze %184 : memref<1x!tpu.dma_semaphore, #tpu.memory_space<semaphore_mem>> -> memref<!tpu.dma_semaphore, #tpu.memory_space<semaphore_mem>>
    tpu.wait_dma2 semaphore(%185 : memref<!tpu.dma_semaphore, #tpu.memory_space<semaphore_mem>>) src(%arg5 : memref<10x256x16xbf16, #tpu.memory_space<any>>) dst(%arg9 : memref<10x256x16xbf16, #tpu.memory_space<vmem>>)
    %186 = vector.extract_strided_slice %183 {offsets = [0, 0], sizes = [20, 256], strides = [1, 1]} : vector<32x256xf32> to vector<20x256xf32>
    %187 = arith.truncf %186 : vector<20x256xf32> to vector<20x256xbf16>
    %cst_57 = arith.constant 0.000000e+00 : f32
    %188 = vector.broadcast %cst_57 : f32 to vector<2x16xf32>
    %189 = vector.extract_strided_slice %187 {offsets = [0, 0], sizes = [2, 256], strides = [1, 1]} : vector<20x256xbf16> to vector<2x256xbf16>
    %c0_58 = arith.constant 0 : index
    %c0_59 = arith.constant 0 : index
    %c0_60 = arith.constant 0 : index
    %190 = vector.load %arg9[%c0_58, %c0_59, %c0_60] : memref<10x256x16xbf16, #tpu.memory_space<vmem>>, vector<1x256x16xbf16>
    %191 = vector.shape_cast %190 : vector<1x256x16xbf16> to vector<256x16xbf16>
    %cst_61 = arith.constant dense<0.000000e+00> : vector<2x16xf32>
    %192 = tpu.matmul %189, %191, %cst_61 {dimension_numbers = #tpu.dot_dimension_numbers<[1], [0], [0], [1], [0, 0, 1, 1], [], []>} : vector<2x256xbf16>, vector<256x16xbf16>, vector<2x16xf32> -> vector<2x16xf32>
    %193 = arith.addf %188, %192 : vector<2x16xf32>
    %194 = vector.extract_strided_slice %187 {offsets = [2, 0], sizes = [2, 256], strides = [1, 1]} : vector<20x256xbf16> to vector<2x256xbf16>
    %c1_62 = arith.constant 1 : index
    %c0_63 = arith.constant 0 : index
    %c0_64 = arith.constant 0 : index
    %195 = vector.load %arg9[%c1_62, %c0_63, %c0_64] : memref<10x256x16xbf16, #tpu.memory_space<vmem>>, vector<1x256x16xbf16>
    %196 = vector.shape_cast %195 : vector<1x256x16xbf16> to vector<256x16xbf16>
    %cst_65 = arith.constant dense<0.000000e+00> : vector<2x16xf32>
    %197 = tpu.matmul %194, %196, %cst_65 {dimension_numbers = #tpu.dot_dimension_numbers<[1], [0], [0], [1], [0, 0, 1, 1], [], []>} : vector<2x256xbf16>, vector<256x16xbf16>, vector<2x16xf32> -> vector<2x16xf32>
    %198 = arith.addf %193, %197 : vector<2x16xf32>
    %199 = vector.extract_strided_slice %187 {offsets = [4, 0], sizes = [2, 256], strides = [1, 1]} : vector<20x256xbf16> to vector<2x256xbf16>
    %c2_66 = arith.constant 2 : index
    %c0_67 = arith.constant 0 : index
    %c0_68 = arith.constant 0 : index
    %200 = vector.load %arg9[%c2_66, %c0_67, %c0_68] : memref<10x256x16xbf16, #tpu.memory_space<vmem>>, vector<1x256x16xbf16>
    %201 = vector.shape_cast %200 : vector<1x256x16xbf16> to vector<256x16xbf16>
    %cst_69 = arith.constant dense<0.000000e+00> : vector<2x16xf32>
    %202 = tpu.matmul %199, %201, %cst_69 {dimension_numbers = #tpu.dot_dimension_numbers<[1], [0], [0], [1], [0, 0, 1, 1], [], []>} : vector<2x256xbf16>, vector<256x16xbf16>, vector<2x16xf32> -> vector<2x16xf32>
    %203 = arith.addf %198, %202 : vector<2x16xf32>
    %204 = vector.extract_strided_slice %187 {offsets = [6, 0], sizes = [2, 256], strides = [1, 1]} : vector<20x256xbf16> to vector<2x256xbf16>
    %c3 = arith.constant 3 : index
    %c0_70 = arith.constant 0 : index
    %c0_71 = arith.constant 0 : index
    %205 = vector.load %arg9[%c3, %c0_70, %c0_71] : memref<10x256x16xbf16, #tpu.memory_space<vmem>>, vector<1x256x16xbf16>
    %206 = vector.shape_cast %205 : vector<1x256x16xbf16> to vector<256x16xbf16>
    %cst_72 = arith.constant dense<0.000000e+00> : vector<2x16xf32>
    %207 = tpu.matmul %204, %206, %cst_72 {dimension_numbers = #tpu.dot_dimension_numbers<[1], [0], [0], [1], [0, 0, 1, 1], [], []>} : vector<2x256xbf16>, vector<256x16xbf16>, vector<2x16xf32> -> vector<2x16xf32>
    %208 = arith.addf %203, %207 : vector<2x16xf32>
    %209 = vector.extract_strided_slice %187 {offsets = [8, 0], sizes = [2, 256], strides = [1, 1]} : vector<20x256xbf16> to vector<2x256xbf16>
    %c4 = arith.constant 4 : index
    %c0_73 = arith.constant 0 : index
    %c0_74 = arith.constant 0 : index
    %210 = vector.load %arg9[%c4, %c0_73, %c0_74] : memref<10x256x16xbf16, #tpu.memory_space<vmem>>, vector<1x256x16xbf16>
    %211 = vector.shape_cast %210 : vector<1x256x16xbf16> to vector<256x16xbf16>
    %cst_75 = arith.constant dense<0.000000e+00> : vector<2x16xf32>
    %212 = tpu.matmul %209, %211, %cst_75 {dimension_numbers = #tpu.dot_dimension_numbers<[1], [0], [0], [1], [0, 0, 1, 1], [], []>} : vector<2x256xbf16>, vector<256x16xbf16>, vector<2x16xf32> -> vector<2x16xf32>
    %213 = arith.addf %208, %212 : vector<2x16xf32>
    %214 = vector.extract_strided_slice %187 {offsets = [10, 0], sizes = [2, 256], strides = [1, 1]} : vector<20x256xbf16> to vector<2x256xbf16>
    %c5 = arith.constant 5 : index
    %c0_76 = arith.constant 0 : index
    %c0_77 = arith.constant 0 : index
    %215 = vector.load %arg9[%c5, %c0_76, %c0_77] : memref<10x256x16xbf16, #tpu.memory_space<vmem>>, vector<1x256x16xbf16>
    %216 = vector.shape_cast %215 : vector<1x256x16xbf16> to vector<256x16xbf16>
    %cst_78 = arith.constant dense<0.000000e+00> : vector<2x16xf32>
    %217 = tpu.matmul %214, %216, %cst_78 {dimension_numbers = #tpu.dot_dimension_numbers<[1], [0], [0], [1], [0, 0, 1, 1], [], []>} : vector<2x256xbf16>, vector<256x16xbf16>, vector<2x16xf32> -> vector<2x16xf32>
    %218 = arith.addf %213, %217 : vector<2x16xf32>
    %219 = vector.extract_strided_slice %187 {offsets = [12, 0], sizes = [2, 256], strides = [1, 1]} : vector<20x256xbf16> to vector<2x256xbf16>
    %c6 = arith.constant 6 : index
    %c0_79 = arith.constant 0 : index
    %c0_80 = arith.constant 0 : index
    %220 = vector.load %arg9[%c6, %c0_79, %c0_80] : memref<10x256x16xbf16, #tpu.memory_space<vmem>>, vector<1x256x16xbf16>
    %221 = vector.shape_cast %220 : vector<1x256x16xbf16> to vector<256x16xbf16>
    %cst_81 = arith.constant dense<0.000000e+00> : vector<2x16xf32>
    %222 = tpu.matmul %219, %221, %cst_81 {dimension_numbers = #tpu.dot_dimension_numbers<[1], [0], [0], [1], [0, 0, 1, 1], [], []>} : vector<2x256xbf16>, vector<256x16xbf16>, vector<2x16xf32> -> vector<2x16xf32>
    %223 = arith.addf %218, %222 : vector<2x16xf32>
    %224 = vector.extract_strided_slice %187 {offsets = [14, 0], sizes = [2, 256], strides = [1, 1]} : vector<20x256xbf16> to vector<2x256xbf16>
    %c7 = arith.constant 7 : index
    %c0_82 = arith.constant 0 : index
    %c0_83 = arith.constant 0 : index
    %225 = vector.load %arg9[%c7, %c0_82, %c0_83] : memref<10x256x16xbf16, #tpu.memory_space<vmem>>, vector<1x256x16xbf16>
    %226 = vector.shape_cast %225 : vector<1x256x16xbf16> to vector<256x16xbf16>
    %cst_84 = arith.constant dense<0.000000e+00> : vector<2x16xf32>
    %227 = tpu.matmul %224, %226, %cst_84 {dimension_numbers = #tpu.dot_dimension_numbers<[1], [0], [0], [1], [0, 0, 1, 1], [], []>} : vector<2x256xbf16>, vector<256x16xbf16>, vector<2x16xf32> -> vector<2x16xf32>
    %228 = arith.addf %223, %227 : vector<2x16xf32>
    %229 = vector.extract_strided_slice %187 {offsets = [16, 0], sizes = [2, 256], strides = [1, 1]} : vector<20x256xbf16> to vector<2x256xbf16>
    %c8 = arith.constant 8 : index
    %c0_85 = arith.constant 0 : index
    %c0_86 = arith.constant 0 : index
    %230 = vector.load %arg9[%c8, %c0_85, %c0_86] : memref<10x256x16xbf16, #tpu.memory_space<vmem>>, vector<1x256x16xbf16>
    %231 = vector.shape_cast %230 : vector<1x256x16xbf16> to vector<256x16xbf16>
    %cst_87 = arith.constant dense<0.000000e+00> : vector<2x16xf32>
    %232 = tpu.matmul %229, %231, %cst_87 {dimension_numbers = #tpu.dot_dimension_numbers<[1], [0], [0], [1], [0, 0, 1, 1], [], []>} : vector<2x256xbf16>, vector<256x16xbf16>, vector<2x16xf32> -> vector<2x16xf32>
    %233 = arith.addf %228, %232 : vector<2x16xf32>
    %234 = vector.extract_strided_slice %187 {offsets = [18, 0], sizes = [2, 256], strides = [1, 1]} : vector<20x256xbf16> to vector<2x256xbf16>
    %c9 = arith.constant 9 : index
    %c0_88 = arith.constant 0 : index
    %c0_89 = arith.constant 0 : index
    %235 = vector.load %arg9[%c9, %c0_88, %c0_89] : memref<10x256x16xbf16, #tpu.memory_space<vmem>>, vector<1x256x16xbf16>
    %236 = vector.shape_cast %235 : vector<1x256x16xbf16> to vector<256x16xbf16>
    %cst_90 = arith.constant dense<0.000000e+00> : vector<2x16xf32>
    %237 = tpu.matmul %234, %236, %cst_90 {dimension_numbers = #tpu.dot_dimension_numbers<[1], [0], [0], [1], [0, 0, 1, 1], [], []>} : vector<2x256xbf16>, vector<256x16xbf16>, vector<2x16xf32> -> vector<2x16xf32>
    %238 = arith.addf %233, %237 : vector<2x16xf32>
    %cst_91 = arith.constant 3.125000e-03 : f32
    %239 = vector.broadcast %cst_91 : f32 to vector<2x16xf32>
    %240 = arith.mulf %238, %239 : vector<2x16xf32>
    %cst_92 = arith.constant 0.000000e+00 : f32
    %241 = vector.broadcast %cst_92 : f32 to vector<2x112xf32>
    %242 = tpu.concatenate %240, %241 in 1 : vector<2x16xf32>, vector<2x112xf32> -> vector<2x128xf32>
    %243 = arith.mulf %242, %242 : vector<2x128xf32>
    %cst_93 = arith.constant dense<0.000000e+00> : vector<2xf32>
    %244 = vector.multi_reduction <add>, %243, %cst_93 [1] : vector<2x128xf32> to vector<2xf32>
    %245 = vector.shape_cast %244 : vector<2xf32> to vector<2x1xf32>
    %cst_94 = arith.constant 9.99999996E-13 : f32
    %246 = vector.broadcast %cst_94 : f32 to vector<2x1xf32>
    %247 = arith.addf %245, %246 : vector<2x1xf32>
    %248 = math.rsqrt %247 : vector<2x1xf32>
    %249 = arith.mulf %245, %248 : vector<2x1xf32>
    %cst_95 = arith.constant 1.000000e+00 : f32
    %250 = vector.broadcast %cst_95 : f32 to vector<2x1xf32>
    %251 = arith.addf %250, %245 : vector<2x1xf32>
    %252 = arith.divf %249, %251 : vector<2x1xf32>
    %253 = vector.broadcast %252 : vector<2x1xf32> to vector<2x128xf32>
    %254 = arith.mulf %242, %253 : vector<2x128xf32>
    %255 = arith.mulf %254, %254 : vector<2x128xf32>
    %cst_96 = arith.constant dense<0.000000e+00> : vector<2xf32>
    %256 = vector.multi_reduction <add>, %255, %cst_96 [1] : vector<2x128xf32> to vector<2xf32>
    %257 = vector.shape_cast %256 : vector<2xf32> to vector<2x1xf32>
    %258 = math.sqrt %257 : vector<2x1xf32>
    %259 = tpu.iota {dimensions = array<i32: 1>} : vector<2x128xi32>
    %c16_i32 = arith.constant 16 : i32
    %260 = vector.broadcast %c16_i32 : i32 to vector<2x128xi32>
    %261 = arith.cmpi eq, %259, %260 : vector<2x128xi32>
    %262 = vector.shape_cast %258 : vector<2x1xf32> to vector<2x1xf32>
    %263 = vector.broadcast %262 : vector<2x1xf32> to vector<2x128xf32>
    %264 = arith.select %261, %263, %254 : vector<2x128xi1>, vector<2x128xf32>
    %c0_97 = arith.constant 0 : index
    %c0_98 = arith.constant 0 : index
    %265 = vector.load %arg6[%c0_97, %c0_98] : memref<2x128xf32, #tpu.memory_space<vmem>>, vector<2x128xf32>
    tpu.vector_store %arg6[%c0_97, %c0_98], %264 {strides = array<i32>} : memref<2x128xf32, #tpu.memory_space<vmem>>, vector<2x128xf32>,
    return
  }
  func.func @transform_0(%arg0: i32) -> (i32, i32) {
    %c0_i32 = arith.constant 0 : i32
    %c0_i32_0 = arith.constant 0 : i32
    %c0_i32_1 = arith.constant 0 : i32
    return %c0_i32, %c0_i32_0 : i32, i32
  }
  func.func @transform_1(%arg0: i32) -> (i32, i32) {
    %c0_i32 = arith.constant 0 : i32
    %c0_i32_0 = arith.constant 0 : i32
    %c0_i32_1 = arith.constant 0 : i32
    return %c0_i32, %c0_i32_0 : i32, i32
  }
  func.func @transform_5(%arg0: i32) -> (i32, i32) {
    %c0_i32 = arith.constant 0 : i32
    %c0_i32_0 = arith.constant 0 : i32
    %c0_i32_1 = arith.constant 0 : i32
    return %c0_i32, %c0_i32_0 : i32, i32
  }
}

</mosaic_0001>

<llo_original>
// kernel: capsule_net_forward.1
$region0: #{capsule_net_forward.1}
  #allocation0 [shape = 'u32[]', space=smem, size = 0x4, offset = 0x4, fixed_abs, tag = 'smem constant byte address 0x4 - core index']
  #allocation1 [shape = 'u32[144,128]{1,0:T(1,128)}', space=vmem, size = 0x12000, scoped, tag = 'internal scratch']
  #allocation2 [shape = 'bf16[3,256,256]{2,1,0:T(16,128)(2,1)}', space=vmem, size = 0x60000, scoped, tag = 'scratch operand']
  #allocation3 [shape = 'bf16[3,256,256]{2,1,0:T(16,128)(2,1)}', space=vmem, size = 0x60000, scoped, tag = 'scratch operand']
  #allocation4 [shape = 'bf16[10,256,16]{2,1,0:T(16,128)(2,1)}', space=vmem, size = 0xa0000, scoped, tag = 'scratch operand']
  #allocation5 [shape = 's32[3]{0}', space=sflag, size = 0xc, scoped, tag = 'scratch operand']
  #allocation6 [shape = 's32[]', space=sflag, size = 0x4, offset = 0, fixed_abs, tag = 'sflag constant byte address 0x0 - dummy sync flag']
  #allocation7 [shape = 's32[]', space=sflag, size = 0x4, offset = 0, fixed_abs, tag = 'sflag constant byte address 0x0 - dummy sync flag']
  #allocation8 [shape = 's32[]', space=sflag, size = 0x4, offset = 0, fixed_abs, tag = 'sflag constant byte address 0x0 - dummy sync flag']
  %s0 = inlined_call_operand.vmem [shape: f32[32,768], index: 0, kind: input, shape index: {}]
  %s1 = inlined_call_operand.vmem [shape: f32[8,256], index: 1, kind: input, shape index: {}]
  %s2 = inlined_call_operand.vmem [shape: bf16[3,256,256], index: 2, kind: input, shape index: {}]
  %s3 = inlined_call_operand.vmem [shape: bf16[3,256,256], index: 3, kind: input, shape index: {}]
  %s4 = inlined_call_operand.vmem [shape: bf16[10,256,16], index: 4, kind: input, shape index: {}]
  %s5 = inlined_call_operand.vmem [shape: f32[2,128], index: 5, kind: output, shape index: {}]
  %s6 = sld [smem:[#allocation0]]
  $region126: #{capsule_net_forward.1} parent=0
    _
  %s8 = ssub.s32 1, %s6
  %s9 = scalar_select 0, %s8, %s6
  // Predicated region
  $region2: #{capsule_net_forward.1} parent=0 // pred_check
    _
  $region3: #{capsule_net_forward.1} parent=0 // pred_check_branch
    %11 = sbr.rel (0) target = $region5
  $region4: #{capsule_net_forward.1} parent=0 // pred_region
    _
  $region5: #{capsule_net_forward.1} parent=0 // pred_fallthru
    _
  // Predicated region
  $region6: #{capsule_net_forward.1} parent=0 // pred_check
    _
  $region7: #{capsule_net_forward.1} parent=0 // pred_check_branch
    %13 = sbr.rel (0) target = $region9
  $region8: #{capsule_net_forward.1} parent=0 // pred_region
    _
  $region9: #{capsule_net_forward.1} parent=0 // pred_fallthru
    _
  %p16 = scmp.lt.u32.totalorder 4, 8
  %p17 = pneg %p16
  // Predicated region
  $region10: #{capsule_net_forward.1} parent=0 // pred_check
    _
  $region11: #{capsule_net_forward.1} parent=0 // pred_check_branch
    %19 = sbr.rel (%p16) target = $region13
  $region12: #{capsule_net_forward.1} parent=0 // pred_region
    %s416 = sand.u32 4, 7
    %p417 = scmp.eq.s32.totalorder %s416, 0
    %p418 = pneg %p417
    // Predicated region
    $region25: #{capsule_net_forward.1} parent=12 // pred_check
      _
    $region26: #{capsule_net_forward.1} parent=12 // pred_check_branch
      %420 = sbr.rel (%p417) target = $region28
    $region27: #{capsule_net_forward.1} parent=12 // pred_region
      %s421 = sand.u32 4, 7
      %s422 = ssub.s32 4, %s421
      %s423 = scalar_lea.vmem %s2, %s422
      %s424 = ssub.s32 4, %s421
      %s425 = scalar_lea.vmem [#allocation2], %s424
      loop: start=0, step=1, limit=1
      $region29: #{capsule_net_forward.1} parent=27 // loop_pre_header
        _
      $region30: #{capsule_net_forward.1} parent=27 // loop_header
        %s427 = sphi 0, %s431
        %p428 = scmp.ge.s32.totalorder %s427, 1
        %s432 = sphi %s2, %s2
        %s433 = sphi [#allocation2], [#allocation2]
      $region31: #{capsule_net_forward.1} parent=27 // loop_header_branch
        %430 = sbr.rel (%p428) target = $region35
      $region32: #{capsule_net_forward.1} parent=27 // loop_body
        _
      $region33: #{capsule_net_forward.1} parent=27 // loop_footer
        %s431 = sadd.s32 1, %s427
      $region34: #{capsule_net_forward.1} parent=27 // loop_footer_branch
        %426 = sbr.rel target = $region30
      $region35: #{capsule_net_forward.1} parent=27 // loop_exit
        _
      %s434 = sshllo.u32 0, %s421
      loop: start=0, step=1, limit=1
      $region36: #{capsule_net_forward.1} parent=27 // loop_pre_header
        _
      $region37: #{capsule_net_forward.1} parent=27 // loop_header
        %s436 = sphi 0, %s440
        %p437 = scmp.ge.s32.totalorder %s436, 1
        %s441 = sphi %s423, %s423
        %s442 = sphi %s425, %s425
      $region38: #{capsule_net_forward.1} parent=27 // loop_header_branch
        %439 = sbr.rel (%p437) target = $region42
      $region39: #{capsule_net_forward.1} parent=27 // loop_body
        %v443 = vld [vmem:[%s441] sm:%s434]
        %444 = vst [vmem:[%s442] sm:%s434] %v443
        %v445 = vld [vmem:[%s441 + $0x8] sm:%s434]
        %446 = vst [vmem:[%s442 + $0x4] sm:%s434] %v445
        %v447 = vld [vmem:[%s441 + $0x4] sm:%s434]
        %448 = vst [vmem:[%s442 + $0x8] sm:%s434] %v447
        %v449 = vld [vmem:[%s441 + $0xc] sm:%s434]
        %450 = vst [vmem:[%s442 + $0xc] sm:%s434] %v449
        %v451 = vld [vmem:[%s441 + $0x10] sm:%s434]
        %452 = vst [vmem:[%s442 + $0x10] sm:%s434] %v451
        %v453 = vld [vmem:[%s441 + $0x18] sm:%s434]
        %454 = vst [vmem:[%s442 + $0x14] sm:%s434] %v453
        %v455 = vld [vmem:[%s441 + $0x14] sm:%s434]
        %456 = vst [vmem:[%s442 + $0x18] sm:%s434] %v455
        %v457 = vld [vmem:[%s441 + $0x1c] sm:%s434]
        %458 = vst [vmem:[%s442 + $0x1c] sm:%s434] %v457
        %v459 = vld [vmem:[%s441 + $0x20] sm:%s434]
        %460 = vst [vmem:[%s442 + $0x20] sm:%s434] %v459
        %v461 = vld [vmem:[%s441 + $0x28] sm:%s434]
        %462 = vst [vmem:[%s442 + $0x24] sm:%s434] %v461
        %v463 = vld [vmem:[%s441 + $0x24] sm:%s434]
        %464 = vst [vmem:[%s442 + $0x28] sm:%s434] %v463
        %v465 = vld [vmem:[%s441 + $0x2c] sm:%s434]
        %466 = vst [vmem:[%s442 + $0x2c] sm:%s434] %v465
        %v467 = vld [vmem:[%s441 + $0x30] sm:%s434]
        %468 = vst [vmem:[%s442 + $0x30] sm:%s434] %v467
        %v469 = vld [vmem:[%s441 + $0x38] sm:%s434]
        %470 = vst [vmem:[%s442 + $0x34] sm:%s434] %v469
        %v471 = vld [vmem:[%s441 + $0x34] sm:%s434]
        %472 = vst [vmem:[%s442 + $0x38] sm:%s434] %v471
        %v473 = vld [vmem:[%s441 + $0x3c] sm:%s434]
        %474 = vst [vmem:[%s442 + $0x3c] sm:%s434] %v473
        %v475 = vld [vmem:[%s441 + $0x40] sm:%s434]
        %476 = vst [vmem:[%s442 + $0x40] sm:%s434] %v475
        %v477 = vld [vmem:[%s441 + $0x48] sm:%s434]
        %478 = vst [vmem:[%s442 + $0x44] sm:%s434] %v477
        %v479 = vld [vmem:[%s441 + $0x44] sm:%s434]
        %480 = vst [vmem:[%s442 + $0x48] sm:%s434] %v479
        %v481 = vld [vmem:[%s441 + $0x4c] sm:%s434]
        %482 = vst [vmem:[%s442 + $0x4c] sm:%s434] %v481
        %v483 = vld [vmem:[%s441 + $0x50] sm:%s434]
        %484 = vst [vmem:[%s442 + $0x50] sm:%s434] %v483
        %v485 = vld [vmem:[%s441 + $0x58] sm:%s434]
        %486 = vst [vmem:[%s442 + $0x54] sm:%s434] %v485
        %v487 = vld [vmem:[%s441 + $0x54] sm:%s434]
        %488 = vst [vmem:[%s442 + $0x58] sm:%s434] %v487
        %v489 = vld [vmem:[%s441 + $0x5c] sm:%s434]
        %490 = vst [vmem:[%s442 + $0x5c] sm:%s434] %v489
        %v491 = vld [vmem:[%s441 + $0x60] sm:%s434]
        %492 = vst [vmem:[%s442 + $0x60] sm:%s434] %v491
        %v493 = vld [vmem:[%s441 + $0x68] sm:%s434]
        %494 = vst [vmem:[%s442 + $0x64] sm:%s434] %v493
        %v495 = vld [vmem:[%s441 + $0x64] sm:%s434]
        %496 = vst [vmem:[%s442 + $0x68] sm:%s434] %v495
        %v497 = vld [vmem:[%s441 + $0x6c] sm:%s434]
        %498 = vst [vmem:[%s442 + $0x6c] sm:%s434] %v497
        %v499 = vld [vmem:[%s441 + $0x70] sm:%s434]
        %500 = vst [vmem:[%s442 + $0x70] sm:%s434] %v499
        %v501 = vld [vmem:[%s441 + $0x78] sm:%s434]
        %502 = vst [vmem:[%s442 + $0x74] sm:%s434] %v501
        %v503 = vld [vmem:[%s441 + $0x74] sm:%s434]
        %504 = vst [vmem:[%s442 + $0x78] sm:%s434] %v503
        %v505 = vld [vmem:[%s441 + $0x7c] sm:%s434]
        %506 = vst [vmem:[%s442 + $0x7c] sm:%s434] %v505
        %v507 = vld [vmem:[%s441 + $0x80] sm:%s434]
        %508 = vst [vmem:[%s442 + $0x80] sm:%s434] %v507
        %v509 = vld [vmem:[%s441 + $0x88] sm:%s434]
        %510 = vst [vmem:[%s442 + $0x84] sm:%s434] %v509
        %v511 = vld [vmem:[%s441 + $0x84] sm:%s434]
        %512 = vst [vmem:[%s442 + $0x88] sm:%s434] %v511
        %v513 = vld [vmem:[%s441 + $0x8c] sm:%s434]
        %514 = vst [vmem:[%s442 + $0x8c] sm:%s434] %v513
        %v515 = vld [vmem:[%s441 + $0x90] sm:%s434]
        %516 = vst [vmem:[%s442 + $0x90] sm:%s434] %v515
        %v517 = vld [vmem:[%s441 + $0x98] sm:%s434]
        %518 = vst [vmem:[%s442 + $0x94] sm:%s434] %v517
        %v519 = vld [vmem:[%s441 + $0x94] sm:%s434]
        %520 = vst [vmem:[%s442 + $0x98] sm:%s434] %v519
        %v521 = vld [vmem:[%s441 + $0x9c] sm:%s434]
        %522 = vst [vmem:[%s442 + $0x9c] sm:%s434] %v521
        %v523 = vld [vmem:[%s441 + $0xa0] sm:%s434]
        %524 = vst [vmem:[%s442 + $0xa0] sm:%s434] %v523
        %v525 = vld [vmem:[%s441 + $0xa8] sm:%s434]
        %526 = vst [vmem:[%s442 + $0xa4] sm:%s434] %v525
        %v527 = vld [vmem:[%s441 + $0xa4] sm:%s434]
        %528 = vst [vmem:[%s442 + $0xa8] sm:%s434] %v527
        %v529 = vld [vmem:[%s441 + $0xac] sm:%s434]
        %530 = vst [vmem:[%s442 + $0xac] sm:%s434] %v529
        %v531 = vld [vmem:[%s441 + $0xb0] sm:%s434]
        %532 = vst [vmem:[%s442 + $0xb0] sm:%s434] %v531
        %v533 = vld [vmem:[%s441 + $0xb8] sm:%s434]
        %534 = vst [vmem:[%s442 + $0xb4] sm:%s434] %v533
        %v535 = vld [vmem:[%s441 + $0xb4] sm:%s434]
        %536 = vst [vmem:[%s442 + $0xb8] sm:%s434] %v535
        %v537 = vld [vmem:[%s441 + $0xbc] sm:%s434]
        %538 = vst [vmem:[%s442 + $0xbc] sm:%s434] %v537
        %v539 = vld [vmem:[%s441 + $0xc0] sm:%s434]
        %540 = vst [vmem:[%s442 + $0xc0] sm:%s434] %v539
        %v541 = vld [vmem:[%s441 + $0xc8] sm:%s434]
        %542 = vst [vmem:[%s442 + $0xc4] sm:%s434] %v541
        %v543 = vld [vmem:[%s441 + $0xc4] sm:%s434]
        %544 = vst [vmem:[%s442 + $0xc8] sm:%s434] %v543
        %v545 = vld [vmem:[%s441 + $0xcc] sm:%s434]
        %546 = vst [vmem:[%s442 + $0xcc] sm:%s434] %v545
        %v547 = vld [vmem:[%s441 + $0xd0] sm:%s434]
        %548 = vst [vmem:[%s442 + $0xd0] sm:%s434] %v547
        %v549 = vld [vmem:[%s441 + $0xd8] sm:%s434]
        %550 = vst [vmem:[%s442 + $0xd4] sm:%s434] %v549
        %v551 = vld [vmem:[%s441 + $0xd4] sm:%s434]
        %552 = vst [vmem:[%s442 + $0xd8] sm:%s434] %v551
        %v553 = vld [vmem:[%s441 + $0xdc] sm:%s434]
        %554 = vst [vmem:[%s442 + $0xdc] sm:%s434] %v553
        %v555 = vld [vmem:[%s441 + $0xe0] sm:%s434]
        %556 = vst [vmem:[%s442 + $0xe0] sm:%s434] %v555
        %v557 = vld [vmem:[%s441 + $0xe8] sm:%s434]
        %558 = vst [vmem:[%s442 + $0xe4] sm:%s434] %v557
        %v559 = vld [vmem:[%s441 + $0xe4] sm:%s434]
        %560 = vst [vmem:[%s442 + $0xe8] sm:%s434] %v559
        %v561 = vld [vmem:[%s441 + $0xec] sm:%s434]
        %562 = vst [vmem:[%s442 + $0xec] sm:%s434] %v561
        %v563 = vld [vmem:[%s441 + $0xf0] sm:%s434]
        %564 = vst [vmem:[%s442 + $0xf0] sm:%s434] %v563
        %v565 = vld [vmem:[%s441 + $0xf8] sm:%s434]
        %566 = vst [vmem:[%s442 + $0xf4] sm:%s434] %v565
        %v567 = vld [vmem:[%s441 + $0xf4] sm:%s434]
        %568 = vst [vmem:[%s442 + $0xf8] sm:%s434] %v567
        %v569 = vld [vmem:[%s441 + $0xfc] sm:%s434]
        %570 = vst [vmem:[%s442 + $0xfc] sm:%s434] %v569
        %v571 = vld [vmem:[%s441 + $0x100] sm:%s434]
        %572 = vst [vmem:[%s442 + $0x100] sm:%s434] %v571
        %v573 = vld [vmem:[%s441 + $0x108] sm:%s434]
        %574 = vst [vmem:[%s442 + $0x104] sm:%s434] %v573
        %v575 = vld [vmem:[%s441 + $0x104] sm:%s434]
        %576 = vst [vmem:[%s442 + $0x108] sm:%s434] %v575
        %v577 = vld [vmem:[%s441 + $0x10c] sm:%s434]
        %578 = vst [vmem:[%s442 + $0x10c] sm:%s434] %v577
        %v579 = vld [vmem:[%s441 + $0x110] sm:%s434]
        %580 = vst [vmem:[%s442 + $0x110] sm:%s434] %v579
        %v581 = vld [vmem:[%s441 + $0x118] sm:%s434]
        %582 = vst [vmem:[%s442 + $0x114] sm:%s434] %v581
        %v583 = vld [vmem:[%s441 + $0x114] sm:%s434]
        %584 = vst [vmem:[%s442 + $0x118] sm:%s434] %v583
        %v585 = vld [vmem:[%s441 + $0x11c] sm:%s434]
        %586 = vst [vmem:[%s442 + $0x11c] sm:%s434] %v585
        %v587 = vld [vmem:[%s441 + $0x120] sm:%s434]
        %588 = vst [vmem:[%s442 + $0x120] sm:%s434] %v587
        %v589 = vld [vmem:[%s441 + $0x128] sm:%s434]
        %590 = vst [vmem:[%s442 + $0x124] sm:%s434] %v589
        %v591 = vld [vmem:[%s441 + $0x124] sm:%s434]
        %592 = vst [vmem:[%s442 + $0x128] sm:%s434] %v591
        %v593 = vld [vmem:[%s441 + $0x12c] sm:%s434]
        %594 = vst [vmem:[%s442 + $0x12c] sm:%s434] %v593
        %v595 = vld [vmem:[%s441 + $0x130] sm:%s434]
        %596 = vst [vmem:[%s442 + $0x130] sm:%s434] %v595
        %v597 = vld [vmem:[%s441 + $0x138] sm:%s434]
        %598 = vst [vmem:[%s442 + $0x134] sm:%s434] %v597
        %v599 = vld [vmem:[%s441 + $0x134] sm:%s434]
        %600 = vst [vmem:[%s442 + $0x138] sm:%s434] %v599
        %v601 = vld [vmem:[%s441 + $0x13c] sm:%s434]
        %602 = vst [vmem:[%s442 + $0x13c] sm:%s434] %v601
        %v603 = vld [vmem:[%s441 + $0x140] sm:%s434]
        %604 = vst [vmem:[%s442 + $0x140] sm:%s434] %v603
        %v605 = vld [vmem:[%s441 + $0x148] sm:%s434]
        %606 = vst [vmem:[%s442 + $0x144] sm:%s434] %v605
        %v607 = vld [vmem:[%s441 + $0x144] sm:%s434]
        %608 = vst [vmem:[%s442 + $0x148] sm:%s434] %v607
        %v609 = vld [vmem:[%s441 + $0x14c] sm:%s434]
        %610 = vst [vmem:[%s442 + $0x14c] sm:%s434] %v609
        %v611 = vld [vmem:[%s441 + $0x150] sm:%s434]
        %612 = vst [vmem:[%s442 + $0x150] sm:%s434] %v611
        %v613 = vld [vmem:[%s441 + $0x158] sm:%s434]
        %614 = vst [vmem:[%s442 + $0x154] sm:%s434] %v613
        %v615 = vld [vmem:[%s441 + $0x154] sm:%s434]
        %616 = vst [vmem:[%s442 + $0x158] sm:%s434] %v615
        %v617 = vld [vmem:[%s441 + $0x15c] sm:%s434]
        %618 = vst [vmem:[%s442 + $0x15c] sm:%s434] %v617
        %v619 = vld [vmem:[%s441 + $0x160] sm:%s434]
        %620 = vst [vmem:[%s442 + $0x160] sm:%s434] %v619
        %v621 = vld [vmem:[%s441 + $0x168] sm:%s434]
        %622 = vst [vmem:[%s442 + $0x164] sm:%s434] %v621
        %v623 = vld [vmem:[%s441 + $0x164] sm:%s434]
        %624 = vst [vmem:[%s442 + $0x168] sm:%s434] %v623
        %v625 = vld [vmem:[%s441 + $0x16c] sm:%s434]
        %626 = vst [vmem:[%s442 + $0x16c] sm:%s434] %v625
        %v627 = vld [vmem:[%s441 + $0x170] sm:%s434]
        %628 = vst [vmem:[%s442 + $0x170] sm:%s434] %v627
        %v629 = vld [vmem:[%s441 + $0x178] sm:%s434]
        %630 = vst [vmem:[%s442 + $0x174] sm:%s434] %v629
        %v631 = vld [vmem:[%s441 + $0x174] sm:%s434]
        %632 = vst [vmem:[%s442 + $0x178] sm:%s434] %v631
        %v633 = vld [vmem:[%s441 + $0x17c] sm:%s434]
        %634 = vst [vmem:[%s442 + $0x17c] sm:%s434] %v633
        %v635 = vld [vmem:[%s441 + $0x180] sm:%s434]
        %636 = vst [vmem:[%s442 + $0x180] sm:%s434] %v635
        %v637 = vld [vmem:[%s441 + $0x188] sm:%s434]
        %638 = vst [vmem:[%s442 + $0x184] sm:%s434] %v637
        %v639 = vld [vmem:[%s441 + $0x184] sm:%s434]
        %640 = vst [vmem:[%s442 + $0x188] sm:%s434] %v639
        %v641 = vld [vmem:[%s441 + $0x18c] sm:%s434]
        %642 = vst [vmem:[%s442 + $0x18c] sm:%s434] %v641
        %v643 = vld [vmem:[%s441 + $0x190] sm:%s434]
        %644 = vst [vmem:[%s442 + $0x190] sm:%s434] %v643
        %v645 = vld [vmem:[%s441 + $0x198] sm:%s434]
        %646 = vst [vmem:[%s442 + $0x194] sm:%s434] %v645
        %v647 = vld [vmem:[%s441 + $0x194] sm:%s434]
        %648 = vst [vmem:[%s442 + $0x198] sm:%s434] %v647
        %v649 = vld [vmem:[%s441 + $0x19c] sm:%s434]
        %650 = vst [vmem:[%s442 + $0x19c] sm:%s434] %v649
        %v651 = vld [vmem:[%s441 + $0x1a0] sm:%s434]
        %652 = vst [vmem:[%s442 + $0x1a0] sm:%s434] %v651
        %v653 = vld [vmem:[%s441 + $0x1a8] sm:%s434]
        %654 = vst [vmem:[%s442 + $0x1a4] sm:%s434] %v653
        %v655 = vld [vmem:[%s441 + $0x1a4] sm:%s434]
        %656 = vst [vmem:[%s442 + $0x1a8] sm:%s434] %v655
        %v657 = vld [vmem:[%s441 + $0x1ac] sm:%s434]
        %658 = vst [vmem:[%s442 + $0x1ac] sm:%s434] %v657
        %v659 = vld [vmem:[%s441 + $0x1b0] sm:%s434]
        %660 = vst [vmem:[%s442 + $0x1b0] sm:%s434] %v659
        %v661 = vld [vmem:[%s441 + $0x1b8] sm:%s434]
        %662 = vst [vmem:[%s442 + $0x1b4] sm:%s434] %v661
        %v663 = vld [vmem:[%s441 + $0x1b4] sm:%s434]
        %664 = vst [vmem:[%s442 + $0x1b8] sm:%s434] %v663
        %v665 = vld [vmem:[%s441 + $0x1bc] sm:%s434]
        %666 = vst [vmem:[%s442 + $0x1bc] sm:%s434] %v665
        %v667 = vld [vmem:[%s441 + $0x1c0] sm:%s434]
        %668 = vst [vmem:[%s442 + $0x1c0] sm:%s434] %v667
        %v669 = vld [vmem:[%s441 + $0x1c8] sm:%s434]
        %670 = vst [vmem:[%s442 + $0x1c4] sm:%s434] %v669
        %v671 = vld [vmem:[%s441 + $0x1c4] sm:%s434]
        %672 = vst [vmem:[%s442 + $0x1c8] sm:%s434] %v671
        %v673 = vld [vmem:[%s441 + $0x1cc] sm:%s434]
        %674 = vst [vmem:[%s442 + $0x1cc] sm:%s434] %v673
        %v675 = vld [vmem:[%s441 + $0x1d0] sm:%s434]
        %676 = vst [vmem:[%s442 + $0x1d0] sm:%s434] %v675
        %v677 = vld [vmem:[%s441 + $0x1d8] sm:%s434]
        %678 = vst [vmem:[%s442 + $0x1d4] sm:%s434] %v677
        %v679 = vld [vmem:[%s441 + $0x1d4] sm:%s434]
        %680 = vst [vmem:[%s442 + $0x1d8] sm:%s434] %v679
        %v681 = vld [vmem:[%s441 + $0x1dc] sm:%s434]
        %682 = vst [vmem:[%s442 + $0x1dc] sm:%s434] %v681
        %v683 = vld [vmem:[%s441 + $0x1e0] sm:%s434]
        %684 = vst [vmem:[%s442 + $0x1e0] sm:%s434] %v683
        %v685 = vld [vmem:[%s441 + $0x1e8] sm:%s434]
        %686 = vst [vmem:[%s442 + $0x1e4] sm:%s434] %v685
        %v687 = vld [vmem:[%s441 + $0x1e4] sm:%s434]
        %688 = vst [vmem:[%s442 + $0x1e8] sm:%s434] %v687
        %v689 = vld [vmem:[%s441 + $0x1ec] sm:%s434]
        %690 = vst [vmem:[%s442 + $0x1ec] sm:%s434] %v689
        %v691 = vld [vmem:[%s441 + $0x1f0] sm:%s434]
        %692 = vst [vmem:[%s442 + $0x1f0] sm:%s434] %v691
        %v693 = vld [vmem:[%s441 + $0x1f8] sm:%s434]
        %694 = vst [vmem:[%s442 + $0x1f4] sm:%s434] %v693
        %v695 = vld [vmem:[%s441 + $0x1f4] sm:%s434]
        %696 = vst [vmem:[%s442 + $0x1f8] sm:%s434] %v695
        %v697 = vld [vmem:[%s441 + $0x1fc] sm:%s434]
        %698 = vst [vmem:[%s442 + $0x1fc] sm:%s434] %v697
        %v699 = vld [vmem:[%s441 + $0x200] sm:%s434]
        %700 = vst [vmem:[%s442 + $0x200] sm:%s434] %v699
        %v701 = vld [vmem:[%s441 + $0x208] sm:%s434]
        %702 = vst [vmem:[%s442 + $0x204] sm:%s434] %v701
        %v703 = vld [vmem:[%s441 + $0x204] sm:%s434]
        %704 = vst [vmem:[%s442 + $0x208] sm:%s434] %v703
        %v705 = vld [vmem:[%s441 + $0x20c] sm:%s434]
        %706 = vst [vmem:[%s442 + $0x20c] sm:%s434] %v705
        %v707 = vld [vmem:[%s441 + $0x210] sm:%s434]
        %708 = vst [vmem:[%s442 + $0x210] sm:%s434] %v707
        %v709 = vld [vmem:[%s441 + $0x218] sm:%s434]
        %710 = vst [vmem:[%s442 + $0x214] sm:%s434] %v709
        %v711 = vld [vmem:[%s441 + $0x214] sm:%s434]
        %712 = vst [vmem:[%s442 + $0x218] sm:%s434] %v711
        %v713 = vld [vmem:[%s441 + $0x21c] sm:%s434]
        %714 = vst [vmem:[%s442 + $0x21c] sm:%s434] %v713
        %v715 = vld [vmem:[%s441 + $0x220] sm:%s434]
        %716 = vst [vmem:[%s442 + $0x220] sm:%s434] %v715
        %v717 = vld [vmem:[%s441 + $0x228] sm:%s434]
        %718 = vst [vmem:[%s442 + $0x224] sm:%s434] %v717
        %v719 = vld [vmem:[%s441 + $0x224] sm:%s434]
        %720 = vst [vmem:[%s442 + $0x228] sm:%s434] %v719
        %v721 = vld [vmem:[%s441 + $0x22c] sm:%s434]
        %722 = vst [vmem:[%s442 + $0x22c] sm:%s434] %v721
        %v723 = vld [vmem:[%s441 + $0x230] sm:%s434]
        %724 = vst [vmem:[%s442 + $0x230] sm:%s434] %v723
        %v725 = vld [vmem:[%s441 + $0x238] sm:%s434]
        %726 = vst [vmem:[%s442 + $0x234] sm:%s434] %v725
        %v727 = vld [vmem:[%s441 + $0x234] sm:%s434]
        %728 = vst [vmem:[%s442 + $0x238] sm:%s434] %v727
        %v729 = vld [vmem:[%s441 + $0x23c] sm:%s434]
        %730 = vst [vmem:[%s442 + $0x23c] sm:%s434] %v729
        %v731 = vld [vmem:[%s441 + $0x240] sm:%s434]
        %732 = vst [vmem:[%s442 + $0x240] sm:%s434] %v731
        %v733 = vld [vmem:[%s441 + $0x248] sm:%s434]
        %734 = vst [vmem:[%s442 + $0x244] sm:%s434] %v733
        %v735 = vld [vmem:[%s441 + $0x244] sm:%s434]
        %736 = vst [vmem:[%s442 + $0x248] sm:%s434] %v735
        %v737 = vld [vmem:[%s441 + $0x24c] sm:%s434]
        %738 = vst [vmem:[%s442 + $0x24c] sm:%s434] %v737
        %v739 = vld [vmem:[%s441 + $0x250] sm:%s434]
        %740 = vst [vmem:[%s442 + $0x250] sm:%s434] %v739
        %v741 = vld [vmem:[%s441 + $0x258] sm:%s434]
        %742 = vst [vmem:[%s442 + $0x254] sm:%s434] %v741
        %v743 = vld [vmem:[%s441 + $0x254] sm:%s434]
        %744 = vst [vmem:[%s442 + $0x258] sm:%s434] %v743
        %v745 = vld [vmem:[%s441 + $0x25c] sm:%s434]
        %746 = vst [vmem:[%s442 + $0x25c] sm:%s434] %v745
        %v747 = vld [vmem:[%s441 + $0x260] sm:%s434]
        %748 = vst [vmem:[%s442 + $0x260] sm:%s434] %v747
        %v749 = vld [vmem:[%s441 + $0x268] sm:%s434]
        %750 = vst [vmem:[%s442 + $0x264] sm:%s434] %v749
        %v751 = vld [vmem:[%s441 + $0x264] sm:%s434]
        %752 = vst [vmem:[%s442 + $0x268] sm:%s434] %v751
        %v753 = vld [vmem:[%s441 + $0x26c] sm:%s434]
        %754 = vst [vmem:[%s442 + $0x26c] sm:%s434] %v753
        %v755 = vld [vmem:[%s441 + $0x270] sm:%s434]
        %756 = vst [vmem:[%s442 + $0x270] sm:%s434] %v755
        %v757 = vld [vmem:[%s441 + $0x278] sm:%s434]
        %758 = vst [vmem:[%s442 + $0x274] sm:%s434] %v757
        %v759 = vld [vmem:[%s441 + $0x274] sm:%s434]
        %760 = vst [vmem:[%s442 + $0x278] sm:%s434] %v759
        %v761 = vld [vmem:[%s441 + $0x27c] sm:%s434]
        %762 = vst [vmem:[%s442 + $0x27c] sm:%s434] %v761
        %v763 = vld [vmem:[%s441 + $0x280] sm:%s434]
        %764 = vst [vmem:[%s442 + $0x280] sm:%s434] %v763
        %v765 = vld [vmem:[%s441 + $0x288] sm:%s434]
        %766 = vst [vmem:[%s442 + $0x284] sm:%s434] %v765
        %v767 = vld [vmem:[%s441 + $0x284] sm:%s434]
        %768 = vst [vmem:[%s442 + $0x288] sm:%s434] %v767
        %v769 = vld [vmem:[%s441 + $0x28c] sm:%s434]
        %770 = vst [vmem:[%s442 + $0x28c] sm:%s434] %v769
        %v771 = vld [vmem:[%s441 + $0x290] sm:%s434]
        %772 = vst [vmem:[%s442 + $0x290] sm:%s434] %v771
        %v773 = vld [vmem:[%s441 + $0x298] sm:%s434]
        %774 = vst [vmem:[%s442 + $0x294] sm:%s434] %v773
        %v775 = vld [vmem:[%s441 + $0x294] sm:%s434]
        %776 = vst [vmem:[%s442 + $0x298] sm:%s434] %v775
        %v777 = vld [vmem:[%s441 + $0x29c] sm:%s434]
        %778 = vst [vmem:[%s442 + $0x29c] sm:%s434] %v777
        %v779 = vld [vmem:[%s441 + $0x2a0] sm:%s434]
        %780 = vst [vmem:[%s442 + $0x2a0] sm:%s434] %v779
        %v781 = vld [vmem:[%s441 + $0x2a8] sm:%s434]
        %782 = vst [vmem:[%s442 + $0x2a4] sm:%s434] %v781
        %v783 = vld [vmem:[%s441 + $0x2a4] sm:%s434]
        %784 = vst [vmem:[%s442 + $0x2a8] sm:%s434] %v783
        %v785 = vld [vmem:[%s441 + $0x2ac] sm:%s434]
        %786 = vst [vmem:[%s442 + $0x2ac] sm:%s434] %v785
        %v787 = vld [vmem:[%s441 + $0x2b0] sm:%s434]
        %788 = vst [vmem:[%s442 + $0x2b0] sm:%s434] %v787
        %v789 = vld [vmem:[%s441 + $0x2b8] sm:%s434]
        %790 = vst [vmem:[%s442 + $0x2b4] sm:%s434] %v789
        %v791 = vld [vmem:[%s441 + $0x2b4] sm:%s434]
        %792 = vst [vmem:[%s442 + $0x2b8] sm:%s434] %v791
        %v793 = vld [vmem:[%s441 + $0x2bc] sm:%s434]
        %794 = vst [vmem:[%s442 + $0x2bc] sm:%s434] %v793
        %v795 = vld [vmem:[%s441 + $0x2c0] sm:%s434]
        %796 = vst [vmem:[%s442 + $0x2c0] sm:%s434] %v795
        %v797 = vld [vmem:[%s441 + $0x2c8] sm:%s434]
        %798 = vst [vmem:[%s442 + $0x2c4] sm:%s434] %v797
        %v799 = vld [vmem:[%s441 + $0x2c4] sm:%s434]
        %800 = vst [vmem:[%s442 + $0x2c8] sm:%s434] %v799
        %v801 = vld [vmem:[%s441 + $0x2cc] sm:%s434]
        %802 = vst [vmem:[%s442 + $0x2cc] sm:%s434] %v801
        %v803 = vld [vmem:[%s441 + $0x2d0] sm:%s434]
        %804 = vst [vmem:[%s442 + $0x2d0] sm:%s434] %v803
        %v805 = vld [vmem:[%s441 + $0x2d8] sm:%s434]
        %806 = vst [vmem:[%s442 + $0x2d4] sm:%s434] %v805
        %v807 = vld [vmem:[%s441 + $0x2d4] sm:%s434]
        %808 = vst [vmem:[%s442 + $0x2d8] sm:%s434] %v807
        %v809 = vld [vmem:[%s441 + $0x2dc] sm:%s434]
        %810 = vst [vmem:[%s442 + $0x2dc] sm:%s434] %v809
        %v811 = vld [vmem:[%s441 + $0x2e0] sm:%s434]
        %812 = vst [vmem:[%s442 + $0x2e0] sm:%s434] %v811
        %v813 = vld [vmem:[%s441 + $0x2e8] sm:%s434]
        %814 = vst [vmem:[%s442 + $0x2e4] sm:%s434] %v813
        %v815 = vld [vmem:[%s441 + $0x2e4] sm:%s434]
        %816 = vst [vmem:[%s442 + $0x2e8] sm:%s434] %v815
        %v817 = vld [vmem:[%s441 + $0x2ec] sm:%s434]
        %818 = vst [vmem:[%s442 + $0x2ec] sm:%s434] %v817
        %v819 = vld [vmem:[%s441 + $0x2f0] sm:%s434]
        %820 = vst [vmem:[%s442 + $0x2f0] sm:%s434] %v819
        %v821 = vld [vmem:[%s441 + $0x2f8] sm:%s434]
        %822 = vst [vmem:[%s442 + $0x2f4] sm:%s434] %v821
        %v823 = vld [vmem:[%s441 + $0x2f4] sm:%s434]
        %824 = vst [vmem:[%s442 + $0x2f8] sm:%s434] %v823
        %v825 = vld [vmem:[%s441 + $0x2fc] sm:%s434]
        %826 = vst [vmem:[%s442 + $0x2fc] sm:%s434] %v825
      $region40: #{capsule_net_forward.1} parent=27 // loop_footer
        %s440 = sadd.s32 1, %s436
      $region41: #{capsule_net_forward.1} parent=27 // loop_footer_branch
        %435 = sbr.rel target = $region37
      $region42: #{capsule_net_forward.1} parent=27 // loop_exit
        _
    $region28: #{capsule_net_forward.1} parent=12 // pred_fallthru
      _
  $region13: #{capsule_net_forward.1} parent=0 // pred_fallthru
    _
  // Predicated region
  $region14: #{capsule_net_forward.1} parent=0 // pred_check
    %p20 = pneg %p16
  $region15: #{capsule_net_forward.1} parent=0 // pred_check_branch
    %22 = sbr.rel (%p20) target = $region17
  $region16: #{capsule_net_forward.1} parent=0 // pred_region
    %s23 = sshllo.u32 0, 4
    loop: start=0, step=1, limit=1
    $region18: #{capsule_net_forward.1} parent=16 // loop_pre_header
      _
    $region19: #{capsule_net_forward.1} parent=16 // loop_header
      %s25 = sphi 0, %s29
      %p26 = scmp.ge.s32.totalorder %s25, 1
      %s30 = sphi %s2, %s2
      %s31 = sphi [#allocation2], [#allocation2]
    $region20: #{capsule_net_forward.1} parent=16 // loop_header_branch
      %28 = sbr.rel (%p26) target = $region24
    $region21: #{capsule_net_forward.1} parent=16 // loop_body
      %v32 = vld [vmem:[%s30] sm:%s23]
      %33 = vst [vmem:[%s31] sm:%s23] %v32
      %v34 = vld [vmem:[%s30 + $0x8] sm:%s23]
      %35 = vst [vmem:[%s31 + $0x4] sm:%s23] %v34
      %v36 = vld [vmem:[%s30 + $0x4] sm:%s23]
      %37 = vst [vmem:[%s31 + $0x8] sm:%s23] %v36
      %v38 = vld [vmem:[%s30 + $0xc] sm:%s23]
      %39 = vst [vmem:[%s31 + $0xc] sm:%s23] %v38
      %v40 = vld [vmem:[%s30 + $0x10] sm:%s23]
      %41 = vst [vmem:[%s31 + $0x10] sm:%s23] %v40
      %v42 = vld [vmem:[%s30 + $0x18] sm:%s23]
      %43 = vst [vmem:[%s31 + $0x14] sm:%s23] %v42
      %v44 = vld [vmem:[%s30 + $0x14] sm:%s23]
      %45 = vst [vmem:[%s31 + $0x18] sm:%s23] %v44
      %v46 = vld [vmem:[%s30 + $0x1c] sm:%s23]
      %47 = vst [vmem:[%s31 + $0x1c] sm:%s23] %v46
      %v48 = vld [vmem:[%s30 + $0x20] sm:%s23]
      %49 = vst [vmem:[%s31 + $0x20] sm:%s23] %v48
      %v50 = vld [vmem:[%s30 + $0x28] sm:%s23]
      %51 = vst [vmem:[%s31 + $0x24] sm:%s23] %v50
      %v52 = vld [vmem:[%s30 + $0x24] sm:%s23]
      %53 = vst [vmem:[%s31 + $0x28] sm:%s23] %v52
      %v54 = vld [vmem:[%s30 + $0x2c] sm:%s23]
      %55 = vst [vmem:[%s31 + $0x2c] sm:%s23] %v54
      %v56 = vld [vmem:[%s30 + $0x30] sm:%s23]
      %57 = vst [vmem:[%s31 + $0x30] sm:%s23] %v56
      %v58 = vld [vmem:[%s30 + $0x38] sm:%s23]
      %59 = vst [vmem:[%s31 + $0x34] sm:%s23] %v58
      %v60 = vld [vmem:[%s30 + $0x34] sm:%s23]
      %61 = vst [vmem:[%s31 + $0x38] sm:%s23] %v60
      %v62 = vld [vmem:[%s30 + $0x3c] sm:%s23]
      %63 = vst [vmem:[%s31 + $0x3c] sm:%s23] %v62
      %v64 = vld [vmem:[%s30 + $0x40] sm:%s23]
      %65 = vst [vmem:[%s31 + $0x40] sm:%s23] %v64
      %v66 = vld [vmem:[%s30 + $0x48] sm:%s23]
      %67 = vst [vmem:[%s31 + $0x44] sm:%s23] %v66
      %v68 = vld [vmem:[%s30 + $0x44] sm:%s23]
      %69 = vst [vmem:[%s31 + $0x48] sm:%s23] %v68
      %v70 = vld [vmem:[%s30 + $0x4c] sm:%s23]
      %71 = vst [vmem:[%s31 + $0x4c] sm:%s23] %v70
      %v72 = vld [vmem:[%s30 + $0x50] sm:%s23]
      %73 = vst [vmem:[%s31 + $0x50] sm:%s23] %v72
      %v74 = vld [vmem:[%s30 + $0x58] sm:%s23]
      %75 = vst [vmem:[%s31 + $0x54] sm:%s23] %v74
      %v76 = vld [vmem:[%s30 + $0x54] sm:%s23]
      %77 = vst [vmem:[%s31 + $0x58] sm:%s23] %v76
      %v78 = vld [vmem:[%s30 + $0x5c] sm:%s23]
      %79 = vst [vmem:[%s31 + $0x5c] sm:%s23] %v78
      %v80 = vld [vmem:[%s30 + $0x60] sm:%s23]
      %81 = vst [vmem:[%s31 + $0x60] sm:%s23] %v80
      %v82 = vld [vmem:[%s30 + $0x68] sm:%s23]
      %83 = vst [vmem:[%s31 + $0x64] sm:%s23] %v82
      %v84 = vld [vmem:[%s30 + $0x64] sm:%s23]
      %85 = vst [vmem:[%s31 + $0x68] sm:%s23] %v84
      %v86 = vld [vmem:[%s30 + $0x6c] sm:%s23]
      %87 = vst [vmem:[%s31 + $0x6c] sm:%s23] %v86
      %v88 = vld [vmem:[%s30 + $0x70] sm:%s23]
      %89 = vst [vmem:[%s31 + $0x70] sm:%s23] %v88
      %v90 = vld [vmem:[%s30 + $0x78] sm:%s23]
      %91 = vst [vmem:[%s31 + $0x74] sm:%s23] %v90
      %v92 = vld [vmem:[%s30 + $0x74] sm:%s23]
      %93 = vst [vmem:[%s31 + $0x78] sm:%s23] %v92
      %v94 = vld [vmem:[%s30 + $0x7c] sm:%s23]
      %95 = vst [vmem:[%s31 + $0x7c] sm:%s23] %v94
      %v96 = vld [vmem:[%s30 + $0x80] sm:%s23]
      %97 = vst [vmem:[%s31 + $0x80] sm:%s23] %v96
      %v98 = vld [vmem:[%s30 + $0x88] sm:%s23]
      %99 = vst [vmem:[%s31 + $0x84] sm:%s23] %v98
      %v100 = vld [vmem:[%s30 + $0x84] sm:%s23]
      %101 = vst [vmem:[%s31 + $0x88] sm:%s23] %v100
      %v102 = vld [vmem:[%s30 + $0x8c] sm:%s23]
      %103 = vst [vmem:[%s31 + $0x8c] sm:%s23] %v102
      %v104 = vld [vmem:[%s30 + $0x90] sm:%s23]
      %105 = vst [vmem:[%s31 + $0x90] sm:%s23] %v104
      %v106 = vld [vmem:[%s30 + $0x98] sm:%s23]
      %107 = vst [vmem:[%s31 + $0x94] sm:%s23] %v106
      %v108 = vld [vmem:[%s30 + $0x94] sm:%s23]
      %109 = vst [vmem:[%s31 + $0x98] sm:%s23] %v108
      %v110 = vld [vmem:[%s30 + $0x9c] sm:%s23]
      %111 = vst [vmem:[%s31 + $0x9c] sm:%s23] %v110
      %v112 = vld [vmem:[%s30 + $0xa0] sm:%s23]
      %113 = vst [vmem:[%s31 + $0xa0] sm:%s23] %v112
      %v114 = vld [vmem:[%s30 + $0xa8] sm:%s23]
      %115 = vst [vmem:[%s31 + $0xa4] sm:%s23] %v114
      %v116 = vld [vmem:[%s30 + $0xa4] sm:%s23]
      %117 = vst [vmem:[%s31 + $0xa8] sm:%s23] %v116
      %v118 = vld [vmem:[%s30 + $0xac] sm:%s23]
      %119 = vst [vmem:[%s31 + $0xac] sm:%s23] %v118
      %v120 = vld [vmem:[%s30 + $0xb0] sm:%s23]
      %121 = vst [vmem:[%s31 + $0xb0] sm:%s23] %v120
      %v122 = vld [vmem:[%s30 + $0xb8] sm:%s23]
      %123 = vst [vmem:[%s31 + $0xb4] sm:%s23] %v122
      %v124 = vld [vmem:[%s30 + $0xb4] sm:%s23]
      %125 = vst [vmem:[%s31 + $0xb8] sm:%s23] %v124
      %v126 = vld [vmem:[%s30 + $0xbc] sm:%s23]
      %127 = vst [vmem:[%s31 + $0xbc] sm:%s23] %v126
      %v128 = vld [vmem:[%s30 + $0xc0] sm:%s23]
      %129 = vst [vmem:[%s31 + $0xc0] sm:%s23] %v128
      %v130 = vld [vmem:[%s30 + $0xc8] sm:%s23]
      %131 = vst [vmem:[%s31 + $0xc4] sm:%s23] %v130
      %v132 = vld [vmem:[%s30 + $0xc4] sm:%s23]
      %133 = vst [vmem:[%s31 + $0xc8] sm:%s23] %v132
      %v134 = vld [vmem:[%s30 + $0xcc] sm:%s23]
      %135 = vst [vmem:[%s31 + $0xcc] sm:%s23] %v134
      %v136 = vld [vmem:[%s30 + $0xd0] sm:%s23]
      %137 = vst [vmem:[%s31 + $0xd0] sm:%s23] %v136
      %v138 = vld [vmem:[%s30 + $0xd8] sm:%s23]
      %139 = vst [vmem:[%s31 + $0xd4] sm:%s23] %v138
      %v140 = vld [vmem:[%s30 + $0xd4] sm:%s23]
      %141 = vst [vmem:[%s31 + $0xd8] sm:%s23] %v140
      %v142 = vld [vmem:[%s30 + $0xdc] sm:%s23]
      %143 = vst [vmem:[%s31 + $0xdc] sm:%s23] %v142
      %v144 = vld [vmem:[%s30 + $0xe0] sm:%s23]
      %145 = vst [vmem:[%s31 + $0xe0] sm:%s23] %v144
      %v146 = vld [vmem:[%s30 + $0xe8] sm:%s23]
      %147 = vst [vmem:[%s31 + $0xe4] sm:%s23] %v146
      %v148 = vld [vmem:[%s30 + $0xe4] sm:%s23]
      %149 = vst [vmem:[%s31 + $0xe8] sm:%s23] %v148
      %v150 = vld [vmem:[%s30 + $0xec] sm:%s23]
      %151 = vst [vmem:[%s31 + $0xec] sm:%s23] %v150
      %v152 = vld [vmem:[%s30 + $0xf0] sm:%s23]
      %153 = vst [vmem:[%s31 + $0xf0] sm:%s23] %v152
      %v154 = vld [vmem:[%s30 + $0xf8] sm:%s23]
      %155 = vst [vmem:[%s31 + $0xf4] sm:%s23] %v154
      %v156 = vld [vmem:[%s30 + $0xf4] sm:%s23]
      %157 = vst [vmem:[%s31 + $0xf8] sm:%s23] %v156
      %v158 = vld [vmem:[%s30 + $0xfc] sm:%s23]
      %159 = vst [vmem:[%s31 + $0xfc] sm:%s23] %v158
      %v160 = vld [vmem:[%s30 + $0x100] sm:%s23]
      %161 = vst [vmem:[%s31 + $0x100] sm:%s23] %v160
      %v162 = vld [vmem:[%s30 + $0x108] sm:%s23]
      %163 = vst [vmem:[%s31 + $0x104] sm:%s23] %v162
      %v164 = vld [vmem:[%s30 + $0x104] sm:%s23]
      %165 = vst [vmem:[%s31 + $0x108] sm:%s23] %v164
      %v166 = vld [vmem:[%s30 + $0x10c] sm:%s23]
      %167 = vst [vmem:[%s31 + $0x10c] sm:%s23] %v166
      %v168 = vld [vmem:[%s30 + $0x110] sm:%s23]
      %169 = vst [vmem:[%s31 + $0x110] sm:%s23] %v168
      %v170 = vld [vmem:[%s30 + $0x118] sm:%s23]
      %171 = vst [vmem:[%s31 + $0x114] sm:%s23] %v170
      %v172 = vld [vmem:[%s30 + $0x114] sm:%s23]
      %173 = vst [vmem:[%s31 + $0x118] sm:%s23] %v172
      %v174 = vld [vmem:[%s30 + $0x11c] sm:%s23]
      %175 = vst [vmem:[%s31 + $0x11c] sm:%s23] %v174
      %v176 = vld [vmem:[%s30 + $0x120] sm:%s23]
      %177 = vst [vmem:[%s31 + $0x120] sm:%s23] %v176
      %v178 = vld [vmem:[%s30 + $0x128] sm:%s23]
      %179 = vst [vmem:[%s31 + $0x124] sm:%s23] %v178
      %v180 = vld [vmem:[%s30 + $0x124] sm:%s23]
      %181 = vst [vmem:[%s31 + $0x128] sm:%s23] %v180
      %v182 = vld [vmem:[%s30 + $0x12c] sm:%s23]
      %183 = vst [vmem:[%s31 + $0x12c] sm:%s23] %v182
      %v184 = vld [vmem:[%s30 + $0x130] sm:%s23]
      %185 = vst [vmem:[%s31 + $0x130] sm:%s23] %v184
      %v186 = vld [vmem:[%s30 + $0x138] sm:%s23]
      %187 = vst [vmem:[%s31 + $0x134] sm:%s23] %v186
      %v188 = vld [vmem:[%s30 + $0x134] sm:%s23]
      %189 = vst [vmem:[%s31 + $0x138] sm:%s23] %v188
      %v190 = vld [vmem:[%s30 + $0x13c] sm:%s23]
      %191 = vst [vmem:[%s31 + $0x13c] sm:%s23] %v190
      %v192 = vld [vmem:[%s30 + $0x140] sm:%s23]
      %193 = vst [vmem:[%s31 + $0x140] sm:%s23] %v192
      %v194 = vld [vmem:[%s30 + $0x148] sm:%s23]
      %195 = vst [vmem:[%s31 + $0x144] sm:%s23] %v194
      %v196 = vld [vmem:[%s30 + $0x144] sm:%s23]
      %197 = vst [vmem:[%s31 + $0x148] sm:%s23] %v196
      %v198 = vld [vmem:[%s30 + $0x14c] sm:%s23]
      %199 = vst [vmem:[%s31 + $0x14c] sm:%s23] %v198
      %v200 = vld [vmem:[%s30 + $0x150] sm:%s23]
      %201 = vst [vmem:[%s31 + $0x150] sm:%s23] %v200
      %v202 = vld [vmem:[%s30 + $0x158] sm:%s23]
      %203 = vst [vmem:[%s31 + $0x154] sm:%s23] %v202
      %v204 = vld [vmem:[%s30 + $0x154] sm:%s23]
      %205 = vst [vmem:[%s31 + $0x158] sm:%s23] %v204
      %v206 = vld [vmem:[%s30 + $0x15c] sm:%s23]
      %207 = vst [vmem:[%s31 + $0x15c] sm:%s23] %v206
      %v208 = vld [vmem:[%s30 + $0x160] sm:%s23]
      %209 = vst [vmem:[%s31 + $0x160] sm:%s23] %v208
      %v210 = vld [vmem:[%s30 + $0x168] sm:%s23]
      %211 = vst [vmem:[%s31 + $0x164] sm:%s23] %v210
      %v212 = vld [vmem:[%s30 + $0x164] sm:%s23]
      %213 = vst [vmem:[%s31 + $0x168] sm:%s23] %v212
      %v214 = vld [vmem:[%s30 + $0x16c] sm:%s23]
      %215 = vst [vmem:[%s31 + $0x16c] sm:%s23] %v214
      %v216 = vld [vmem:[%s30 + $0x170] sm:%s23]
      %217 = vst [vmem:[%s31 + $0x170] sm:%s23] %v216
      %v218 = vld [vmem:[%s30 + $0x178] sm:%s23]
      %219 = vst [vmem:[%s31 + $0x174] sm:%s23] %v218
      %v220 = vld [vmem:[%s30 + $0x174] sm:%s23]
      %221 = vst [vmem:[%s31 + $0x178] sm:%s23] %v220
      %v222 = vld [vmem:[%s30 + $0x17c] sm:%s23]
      %223 = vst [vmem:[%s31 + $0x17c] sm:%s23] %v222
      %v224 = vld [vmem:[%s30 + $0x180] sm:%s23]
      %225 = vst [vmem:[%s31 + $0x180] sm:%s23] %v224
      %v226 = vld [vmem:[%s30 + $0x188] sm:%s23]
      %227 = vst [vmem:[%s31 + $0x184] sm:%s23] %v226
      %v228 = vld [vmem:[%s30 + $0x184] sm:%s23]
      %229 = vst [vmem:[%s31 + $0x188] sm:%s23] %v228
      %v230 = vld [vmem:[%s30 + $0x18c] sm:%s23]
      %231 = vst [vmem:[%s31 + $0x18c] sm:%s23] %v230
      %v232 = vld [vmem:[%s30 + $0x190] sm:%s23]
      %233 = vst [vmem:[%s31 + $0x190] sm:%s23] %v232
      %v234 = vld [vmem:[%s30 + $0x198] sm:%s23]
      %235 = vst [vmem:[%s31 + $0x194] sm:%s23] %v234
      %v236 = vld [vmem:[%s30 + $0x194] sm:%s23]
      %237 = vst [vmem:[%s31 + $0x198] sm:%s23] %v236
      %v238 = vld [vmem:[%s30 + $0x19c] sm:%s23]
      %239 = vst [vmem:[%s31 + $0x19c] sm:%s23] %v238
      %v240 = vld [vmem:[%s30 + $0x1a0] sm:%s23]
      %241 = vst [vmem:[%s31 + $0x1a0] sm:%s23] %v240
      %v242 = vld [vmem:[%s30 + $0x1a8] sm:%s23]
      %243 = vst [vmem:[%s31 + $0x1a4] sm:%s23] %v242
      %v244 = vld [vmem:[%s30 + $0x1a4] sm:%s23]
      %245 = vst [vmem:[%s31 + $0x1a8] sm:%s23] %v244
      %v246 = vld [vmem:[%s30 + $0x1ac] sm:%s23]
      %247 = vst [vmem:[%s31 + $0x1ac] sm:%s23] %v246
      %v248 = vld [vmem:[%s30 + $0x1b0] sm:%s23]
      %249 = vst [vmem:[%s31 + $0x1b0] sm:%s23] %v248
      %v250 = vld [vmem:[%s30 + $0x1b8] sm:%s23]
      %251 = vst [vmem:[%s31 + $0x1b4] sm:%s23] %v250
      %v252 = vld [vmem:[%s30 + $0x1b4] sm:%s23]
      %253 = vst [vmem:[%s31 + $0x1b8] sm:%s23] %v252
      %v254 = vld [vmem:[%s30 + $0x1bc] sm:%s23]
      %255 = vst [vmem:[%s31 + $0x1bc] sm:%s23] %v254
      %v256 = vld [vmem:[%s30 + $0x1c0] sm:%s23]
      %257 = vst [vmem:[%s31 + $0x1c0] sm:%s23] %v256
      %v258 = vld [vmem:[%s30 + $0x1c8] sm:%s23]
      %259 = vst [vmem:[%s31 + $0x1c4] sm:%s23] %v258
      %v260 = vld [vmem:[%s30 + $0x1c4] sm:%s23]
      %261 = vst [vmem:[%s31 + $0x1c8] sm:%s23] %v260
      %v262 = vld [vmem:[%s30 + $0x1cc] sm:%s23]
      %263 = vst [vmem:[%s31 + $0x1cc] sm:%s23] %v262
      %v264 = vld [vmem:[%s30 + $0x1d0] sm:%s23]
      %265 = vst [vmem:[%s31 + $0x1d0] sm:%s23] %v264
      %v266 = vld [vmem:[%s30 + $0x1d8] sm:%s23]
      %267 = vst [vmem:[%s31 + $0x1d4] sm:%s23] %v266
      %v268 = vld [vmem:[%s30 + $0x1d4] sm:%s23]
      %269 = vst [vmem:[%s31 + $0x1d8] sm:%s23] %v268
      %v270 = vld [vmem:[%s30 + $0x1dc] sm:%s23]
      %271 = vst [vmem:[%s31 + $0x1dc] sm:%s23] %v270
      %v272 = vld [vmem:[%s30 + $0x1e0] sm:%s23]
      %273 = vst [vmem:[%s31 + $0x1e0] sm:%s23] %v272
      %v274 = vld [vmem:[%s30 + $0x1e8] sm:%s23]
      %275 = vst [vmem:[%s31 + $0x1e4] sm:%s23] %v274
      %v276 = vld [vmem:[%s30 + $0x1e4] sm:%s23]
      %277 = vst [vmem:[%s31 + $0x1e8] sm:%s23] %v276
      %v278 = vld [vmem:[%s30 + $0x1ec] sm:%s23]
      %279 = vst [vmem:[%s31 + $0x1ec] sm:%s23] %v278
      %v280 = vld [vmem:[%s30 + $0x1f0] sm:%s23]
      %281 = vst [vmem:[%s31 + $0x1f0] sm:%s23] %v280
      %v282 = vld [vmem:[%s30 + $0x1f8] sm:%s23]
      %283 = vst [vmem:[%s31 + $0x1f4] sm:%s23] %v282
      %v284 = vld [vmem:[%s30 + $0x1f4] sm:%s23]
      %285 = vst [vmem:[%s31 + $0x1f8] sm:%s23] %v284
      %v286 = vld [vmem:[%s30 + $0x1fc] sm:%s23]
      %287 = vst [vmem:[%s31 + $0x1fc] sm:%s23] %v286
      %v288 = vld [vmem:[%s30 + $0x200] sm:%s23]
      %289 = vst [vmem:[%s31 + $0x200] sm:%s23] %v288
      %v290 = vld [vmem:[%s30 + $0x208] sm:%s23]
      %291 = vst [vmem:[%s31 + $0x204] sm:%s23] %v290
      %v292 = vld [vmem:[%s30 + $0x204] sm:%s23]
      %293 = vst [vmem:[%s31 + $0x208] sm:%s23] %v292
      %v294 = vld [vmem:[%s30 + $0x20c] sm:%s23]
      %295 = vst [vmem:[%s31 + $0x20c] sm:%s23] %v294
      %v296 = vld [vmem:[%s30 + $0x210] sm:%s23]
      %297 = vst [vmem:[%s31 + $0x210] sm:%s23] %v296
      %v298 = vld [vmem:[%s30 + $0x218] sm:%s23]
      %299 = vst [vmem:[%s31 + $0x214] sm:%s23] %v298
      %v300 = vld [vmem:[%s30 + $0x214] sm:%s23]
      %301 = vst [vmem:[%s31 + $0x218] sm:%s23] %v300
      %v302 = vld [vmem:[%s30 + $0x21c] sm:%s23]
      %303 = vst [vmem:[%s31 + $0x21c] sm:%s23] %v302
      %v304 = vld [vmem:[%s30 + $0x220] sm:%s23]
      %305 = vst [vmem:[%s31 + $0x220] sm:%s23] %v304
      %v306 = vld [vmem:[%s30 + $0x228] sm:%s23]
      %307 = vst [vmem:[%s31 + $0x224] sm:%s23] %v306
      %v308 = vld [vmem:[%s30 + $0x224] sm:%s23]
      %309 = vst [vmem:[%s31 + $0x228] sm:%s23] %v308
      %v310 = vld [vmem:[%s30 + $0x22c] sm:%s23]
      %311 = vst [vmem:[%s31 + $0x22c] sm:%s23] %v310
      %v312 = vld [vmem:[%s30 + $0x230] sm:%s23]
      %313 = vst [vmem:[%s31 + $0x230] sm:%s23] %v312
      %v314 = vld [vmem:[%s30 + $0x238] sm:%s23]
      %315 = vst [vmem:[%s31 + $0x234] sm:%s23] %v314
      %v316 = vld [vmem:[%s30 + $0x234] sm:%s23]
      %317 = vst [vmem:[%s31 + $0x238] sm:%s23] %v316
      %v318 = vld [vmem:[%s30 + $0x23c] sm:%s23]
      %319 = vst [vmem:[%s31 + $0x23c] sm:%s23] %v318
      %v320 = vld [vmem:[%s30 + $0x240] sm:%s23]
      %321 = vst [vmem:[%s31 + $0x240] sm:%s23] %v320
      %v322 = vld [vmem:[%s30 + $0x248] sm:%s23]
      %323 = vst [vmem:[%s31 + $0x244] sm:%s23] %v322
      %v324 = vld [vmem:[%s30 + $0x244] sm:%s23]
      %325 = vst [vmem:[%s31 + $0x248] sm:%s23] %v324
      %v326 = vld [vmem:[%s30 + $0x24c] sm:%s23]
      %327 = vst [vmem:[%s31 + $0x24c] sm:%s23] %v326
      %v328 = vld [vmem:[%s30 + $0x250] sm:%s23]
      %329 = vst [vmem:[%s31 + $0x250] sm:%s23] %v328
      %v330 = vld [vmem:[%s30 + $0x258] sm:%s23]
      %331 = vst [vmem:[%s31 + $0x254] sm:%s23] %v330
      %v332 = vld [vmem:[%s30 + $0x254] sm:%s23]
      %333 = vst [vmem:[%s31 + $0x258] sm:%s23] %v332
      %v334 = vld [vmem:[%s30 + $0x25c] sm:%s23]
      %335 = vst [vmem:[%s31 + $0x25c] sm:%s23] %v334
      %v336 = vld [vmem:[%s30 + $0x260] sm:%s23]
      %337 = vst [vmem:[%s31 + $0x260] sm:%s23] %v336
      %v338 = vld [vmem:[%s30 + $0x268] sm:%s23]
      %339 = vst [vmem:[%s31 + $0x264] sm:%s23] %v338
      %v340 = vld [vmem:[%s30 + $0x264] sm:%s23]
      %341 = vst [vmem:[%s31 + $0x268] sm:%s23] %v340
      %v342 = vld [vmem:[%s30 + $0x26c] sm:%s23]
      %343 = vst [vmem:[%s31 + $0x26c] sm:%s23] %v342
      %v344 = vld [vmem:[%s30 + $0x270] sm:%s23]
      %345 = vst [vmem:[%s31 + $0x270] sm:%s23] %v344
      %v346 = vld [vmem:[%s30 + $0x278] sm:%s23]
      %347 = vst [vmem:[%s31 + $0x274] sm:%s23] %v346
      %v348 = vld [vmem:[%s30 + $0x274] sm:%s23]
      %349 = vst [vmem:[%s31 + $0x278] sm:%s23] %v348
      %v350 = vld [vmem:[%s30 + $0x27c] sm:%s23]
      %351 = vst [vmem:[%s31 + $0x27c] sm:%s23] %v350
      %v352 = vld [vmem:[%s30 + $0x280] sm:%s23]
      %353 = vst [vmem:[%s31 + $0x280] sm:%s23] %v352
      %v354 = vld [vmem:[%s30 + $0x288] sm:%s23]
      %355 = vst [vmem:[%s31 + $0x284] sm:%s23] %v354
      %v356 = vld [vmem:[%s30 + $0x284] sm:%s23]
      %357 = vst [vmem:[%s31 + $0x288] sm:%s23] %v356
      %v358 = vld [vmem:[%s30 + $0x28c] sm:%s23]
      %359 = vst [vmem:[%s31 + $0x28c] sm:%s23] %v358
      %v360 = vld [vmem:[%s30 + $0x290] sm:%s23]
      %361 = vst [vmem:[%s31 + $0x290] sm:%s23] %v360
      %v362 = vld [vmem:[%s30 + $0x298] sm:%s23]
      %363 = vst [vmem:[%s31 + $0x294] sm:%s23] %v362
      %v364 = vld [vmem:[%s30 + $0x294] sm:%s23]
      %365 = vst [vmem:[%s31 + $0x298] sm:%s23] %v364
      %v366 = vld [vmem:[%s30 + $0x29c] sm:%s23]
      %367 = vst [vmem:[%s31 + $0x29c] sm:%s23] %v366
      %v368 = vld [vmem:[%s30 + $0x2a0] sm:%s23]
      %369 = vst [vmem:[%s31 + $0x2a0] sm:%s23] %v368
      %v370 = vld [vmem:[%s30 + $0x2a8] sm:%s23]
      %371 = vst [vmem:[%s31 + $0x2a4] sm:%s23] %v370
      %v372 = vld [vmem:[%s30 + $0x2a4] sm:%s23]
      %373 = vst [vmem:[%s31 + $0x2a8] sm:%s23] %v372
      %v374 = vld [vmem:[%s30 + $0x2ac] sm:%s23]
      %375 = vst [vmem:[%s31 + $0x2ac] sm:%s23] %v374
      %v376 = vld [vmem:[%s30 + $0x2b0] sm:%s23]
      %377 = vst [vmem:[%s31 + $0x2b0] sm:%s23] %v376
      %v378 = vld [vmem:[%s30 + $0x2b8] sm:%s23]
      %379 = vst [vmem:[%s31 + $0x2b4] sm:%s23] %v378
      %v380 = vld [vmem:[%s30 + $0x2b4] sm:%s23]
      %381 = vst [vmem:[%s31 + $0x2b8] sm:%s23] %v380
      %v382 = vld [vmem:[%s30 + $0x2bc] sm:%s23]
      %383 = vst [vmem:[%s31 + $0x2bc] sm:%s23] %v382
      %v384 = vld [vmem:[%s30 + $0x2c0] sm:%s23]
      %385 = vst [vmem:[%s31 + $0x2c0] sm:%s23] %v384
      %v386 = vld [vmem:[%s30 + $0x2c8] sm:%s23]
      %387 = vst [vmem:[%s31 + $0x2c4] sm:%s23] %v386
      %v388 = vld [vmem:[%s30 + $0x2c4] sm:%s23]
      %389 = vst [vmem:[%s31 + $0x2c8] sm:%s23] %v388
      %v390 = vld [vmem:[%s30 + $0x2cc] sm:%s23]
      %391 = vst [vmem:[%s31 + $0x2cc] sm:%s23] %v390
      %v392 = vld [vmem:[%s30 + $0x2d0] sm:%s23]
      %393 = vst [vmem:[%s31 + $0x2d0] sm:%s23] %v392
      %v394 = vld [vmem:[%s30 + $0x2d8] sm:%s23]
      %395 = vst [vmem:[%s31 + $0x2d4] sm:%s23] %v394
      %v396 = vld [vmem:[%s30 + $0x2d4] sm:%s23]
      %397 = vst [vmem:[%s31 + $0x2d8] sm:%s23] %v396
      %v398 = vld [vmem:[%s30 + $0x2dc] sm:%s23]
      %399 = vst [vmem:[%s31 + $0x2dc] sm:%s23] %v398
      %v400 = vld [vmem:[%s30 + $0x2e0] sm:%s23]
      %401 = vst [vmem:[%s31 + $0x2e0] sm:%s23] %v400
      %v402 = vld [vmem:[%s30 + $0x2e8] sm:%s23]
      %403 = vst [vmem:[%s31 + $0x2e4] sm:%s23] %v402
      %v404 = vld [vmem:[%s30 + $0x2e4] sm:%s23]
      %405 = vst [vmem:[%s31 + $0x2e8] sm:%s23] %v404
      %v406 = vld [vmem:[%s30 + $0x2ec] sm:%s23]
      %407 = vst [vmem:[%s31 + $0x2ec] sm:%s23] %v406
      %v408 = vld [vmem:[%s30 + $0x2f0] sm:%s23]
      %409 = vst [vmem:[%s31 + $0x2f0] sm:%s23] %v408
      %v410 = vld [vmem:[%s30 + $0x2f8] sm:%s23]
      %411 = vst [vmem:[%s31 + $0x2f4] sm:%s23] %v410
      %v412 = vld [vmem:[%s30 + $0x2f4] sm:%s23]
      %413 = vst [vmem:[%s31 + $0x2f8] sm:%s23] %v412
      %v414 = vld [vmem:[%s30 + $0x2fc] sm:%s23]
      %415 = vst [vmem:[%s31 + $0x2fc] sm:%s23] %v414
    $region22: #{capsule_net_forward.1} parent=16 // loop_footer
      %s29 = sadd.s32 1, %s25
    $region23: #{capsule_net_forward.1} parent=16 // loop_footer_branch
      %24 = sbr.rel target = $region19
    $region24: #{capsule_net_forward.1} parent=16 // loop_exit
      _
  $region17: #{capsule_net_forward.1} parent=0 // pred_fallthru
    _
  // Predicated region
  $region43: #{capsule_net_forward.1} parent=0 // pred_check
    _
  $region44: #{capsule_net_forward.1} parent=0 // pred_check_branch
    %829 = sbr.rel (0) target = $region46
  $region45: #{capsule_net_forward.1} parent=0 // pred_region
    %830 = vsyncadd [#allocation5], 12288
  $region46: #{capsule_net_forward.1} parent=0 // pred_fallthru
    _
  %s831 = scalar_lea.sflag [#allocation5], 1
  %p833 = scmp.lt.u32.totalorder 4, 8
  %p834 = pneg %p833
  // Predicated region
  $region47: #{capsule_net_forward.1} parent=0 // pred_check
    _
  $region48: #{capsule_net_forward.1} parent=0 // pred_check_branch
    %836 = sbr.rel (%p833) target = $region50
  $region49: #{capsule_net_forward.1} parent=0 // pred_region
    %s1233 = sand.u32 4, 7
    %p1234 = scmp.eq.s32.totalorder %s1233, 0
    %p1235 = pneg %p1234
    // Predicated region
    $region62: #{capsule_net_forward.1} parent=49 // pred_check
      _
    $region63: #{capsule_net_forward.1} parent=49 // pred_check_branch
      %1237 = sbr.rel (%p1234) target = $region65
    $region64: #{capsule_net_forward.1} parent=49 // pred_region
      %s1238 = sand.u32 4, 7
      %s1239 = ssub.s32 4, %s1238
      %s1240 = scalar_lea.vmem %s3, %s1239
      %s1241 = ssub.s32 4, %s1238
      %s1242 = scalar_lea.vmem [#allocation3], %s1241
      loop: start=0, step=1, limit=1
      $region66: #{capsule_net_forward.1} parent=64 // loop_pre_header
        _
      $region67: #{capsule_net_forward.1} parent=64 // loop_header
        %s1244 = sphi 0, %s1248
        %p1245 = scmp.ge.s32.totalorder %s1244, 1
        %s1249 = sphi %s3, %s3
        %s1250 = sphi [#allocation3], [#allocation3]
      $region68: #{capsule_net_forward.1} parent=64 // loop_header_branch
        %1247 = sbr.rel (%p1245) target = $region72
      $region69: #{capsule_net_forward.1} parent=64 // loop_body
        _
      $region70: #{capsule_net_forward.1} parent=64 // loop_footer
        %s1248 = sadd.s32 1, %s1244
      $region71: #{capsule_net_forward.1} parent=64 // loop_footer_branch
        %1243 = sbr.rel target = $region67
      $region72: #{capsule_net_forward.1} parent=64 // loop_exit
        _
      %s1251 = sshllo.u32 0, %s1238
      loop: start=0, step=1, limit=1
      $region73: #{capsule_net_forward.1} parent=64 // loop_pre_header
        _
      $region74: #{capsule_net_forward.1} parent=64 // loop_header
        %s1253 = sphi 0, %s1257
        %p1254 = scmp.ge.s32.totalorder %s1253, 1
        %s1258 = sphi %s1240, %s1240
        %s1259 = sphi %s1242, %s1242
      $region75: #{capsule_net_forward.1} parent=64 // loop_header_branch
        %1256 = sbr.rel (%p1254) target = $region79
      $region76: #{capsule_net_forward.1} parent=64 // loop_body
        %v1260 = vld [vmem:[%s1258] sm:%s1251]
        %1261 = vst [vmem:[%s1259] sm:%s1251] %v1260
        %v1262 = vld [vmem:[%s1258 + $0x8] sm:%s1251]
        %1263 = vst [vmem:[%s1259 + $0x4] sm:%s1251] %v1262
        %v1264 = vld [vmem:[%s1258 + $0x4] sm:%s1251]
        %1265 = vst [vmem:[%s1259 + $0x8] sm:%s1251] %v1264
        %v1266 = vld [vmem:[%s1258 + $0xc] sm:%s1251]
        %1267 = vst [vmem:[%s1259 + $0xc] sm:%s1251] %v1266
        %v1268 = vld [vmem:[%s1258 + $0x10] sm:%s1251]
        %1269 = vst [vmem:[%s1259 + $0x10] sm:%s1251] %v1268
        %v1270 = vld [vmem:[%s1258 + $0x18] sm:%s1251]
        %1271 = vst [vmem:[%s1259 + $0x14] sm:%s1251] %v1270
        %v1272 = vld [vmem:[%s1258 + $0x14] sm:%s1251]
        %1273 = vst [vmem:[%s1259 + $0x18] sm:%s1251] %v1272
        %v1274 = vld [vmem:[%s1258 + $0x1c] sm:%s1251]
        %1275 = vst [vmem:[%s1259 + $0x1c] sm:%s1251] %v1274
        %v1276 = vld [vmem:[%s1258 + $0x20] sm:%s1251]
        %1277 = vst [vmem:[%s1259 + $0x20] sm:%s1251] %v1276
        %v1278 = vld [vmem:[%s1258 + $0x28] sm:%s1251]
        %1279 = vst [vmem:[%s1259 + $0x24] sm:%s1251] %v1278
        %v1280 = vld [vmem:[%s1258 + $0x24] sm:%s1251]
        %1281 = vst [vmem:[%s1259 + $0x28] sm:%s1251] %v1280
        %v1282 = vld [vmem:[%s1258 + $0x2c] sm:%s1251]
        %1283 = vst [vmem:[%s1259 + $0x2c] sm:%s1251] %v1282
        %v1284 = vld [vmem:[%s1258 + $0x30] sm:%s1251]
        %1285 = vst [vmem:[%s1259 + $0x30] sm:%s1251] %v1284
        %v1286 = vld [vmem:[%s1258 + $0x38] sm:%s1251]
        %1287 = vst [vmem:[%s1259 + $0x34] sm:%s1251] %v1286
        %v1288 = vld [vmem:[%s1258 + $0x34] sm:%s1251]
        %1289 = vst [vmem:[%s1259 + $0x38] sm:%s1251] %v1288
        %v1290 = vld [vmem:[%s1258 + $0x3c] sm:%s1251]
        %1291 = vst [vmem:[%s1259 + $0x3c] sm:%s1251] %v1290
        %v1292 = vld [vmem:[%s1258 + $0x40] sm:%s1251]
        %1293 = vst [vmem:[%s1259 + $0x40] sm:%s1251] %v1292
        %v1294 = vld [vmem:[%s1258 + $0x48] sm:%s1251]
        %1295 = vst [vmem:[%s1259 + $0x44] sm:%s1251] %v1294
        %v1296 = vld [vmem:[%s1258 + $0x44] sm:%s1251]
        %1297 = vst [vmem:[%s1259 + $0x48] sm:%s1251] %v1296
        %v1298 = vld [vmem:[%s1258 + $0x4c] sm:%s1251]
        %1299 = vst [vmem:[%s1259 + $0x4c] sm:%s1251] %v1298
        %v1300 = vld [vmem:[%s1258 + $0x50] sm:%s1251]
        %1301 = vst [vmem:[%s1259 + $0x50] sm:%s1251] %v1300
        %v1302 = vld [vmem:[%s1258 + $0x58] sm:%s1251]
        %1303 = vst [vmem:[%s1259 + $0x54] sm:%s1251] %v1302
        %v1304 = vld [vmem:[%s1258 + $0x54] sm:%s1251]
        %1305 = vst [vmem:[%s1259 + $0x58] sm:%s1251] %v1304
        %v1306 = vld [vmem:[%s1258 + $0x5c] sm:%s1251]
        %1307 = vst [vmem:[%s1259 + $0x5c] sm:%s1251] %v1306
        %v1308 = vld [vmem:[%s1258 + $0x60] sm:%s1251]
        %1309 = vst [vmem:[%s1259 + $0x60] sm:%s1251] %v1308
        %v1310 = vld [vmem:[%s1258 + $0x68] sm:%s1251]
        %1311 = vst [vmem:[%s1259 + $0x64] sm:%s1251] %v1310
        %v1312 = vld [vmem:[%s1258 + $0x64] sm:%s1251]
        %1313 = vst [vmem:[%s1259 + $0x68] sm:%s1251] %v1312
        %v1314 = vld [vmem:[%s1258 + $0x6c] sm:%s1251]
        %1315 = vst [vmem:[%s1259 + $0x6c] sm:%s1251] %v1314
        %v1316 = vld [vmem:[%s1258 + $0x70] sm:%s1251]
        %1317 = vst [vmem:[%s1259 + $0x70] sm:%s1251] %v1316
        %v1318 = vld [vmem:[%s1258 + $0x78] sm:%s1251]
        %1319 = vst [vmem:[%s1259 + $0x74] sm:%s1251] %v1318
        %v1320 = vld [vmem:[%s1258 + $0x74] sm:%s1251]
        %1321 = vst [vmem:[%s1259 + $0x78] sm:%s1251] %v1320
        %v1322 = vld [vmem:[%s1258 + $0x7c] sm:%s1251]
        %1323 = vst [vmem:[%s1259 + $0x7c] sm:%s1251] %v1322
        %v1324 = vld [vmem:[%s1258 + $0x80] sm:%s1251]
        %1325 = vst [vmem:[%s1259 + $0x80] sm:%s1251] %v1324
        %v1326 = vld [vmem:[%s1258 + $0x88] sm:%s1251]
        %1327 = vst [vmem:[%s1259 + $0x84] sm:%s1251] %v1326
        %v1328 = vld [vmem:[%s1258 + $0x84] sm:%s1251]
        %1329 = vst [vmem:[%s1259 + $0x88] sm:%s1251] %v1328
        %v1330 = vld [vmem:[%s1258 + $0x8c] sm:%s1251]
        %1331 = vst [vmem:[%s1259 + $0x8c] sm:%s1251] %v1330
        %v1332 = vld [vmem:[%s1258 + $0x90] sm:%s1251]
        %1333 = vst [vmem:[%s1259 + $0x90] sm:%s1251] %v1332
        %v1334 = vld [vmem:[%s1258 + $0x98] sm:%s1251]
        %1335 = vst [vmem:[%s1259 + $0x94] sm:%s1251] %v1334
        %v1336 = vld [vmem:[%s1258 + $0x94] sm:%s1251]
        %1337 = vst [vmem:[%s1259 + $0x98] sm:%s1251] %v1336
        %v1338 = vld [vmem:[%s1258 + $0x9c] sm:%s1251]
        %1339 = vst [vmem:[%s1259 + $0x9c] sm:%s1251] %v1338
        %v1340 = vld [vmem:[%s1258 + $0xa0] sm:%s1251]
        %1341 = vst [vmem:[%s1259 + $0xa0] sm:%s1251] %v1340
        %v1342 = vld [vmem:[%s1258 + $0xa8] sm:%s1251]
        %1343 = vst [vmem:[%s1259 + $0xa4] sm:%s1251] %v1342
        %v1344 = vld [vmem:[%s1258 + $0xa4] sm:%s1251]
        %1345 = vst [vmem:[%s1259 + $0xa8] sm:%s1251] %v1344
        %v1346 = vld [vmem:[%s1258 + $0xac] sm:%s1251]
        %1347 = vst [vmem:[%s1259 + $0xac] sm:%s1251] %v1346
        %v1348 = vld [vmem:[%s1258 + $0xb0] sm:%s1251]
        %1349 = vst [vmem:[%s1259 + $0xb0] sm:%s1251] %v1348
        %v1350 = vld [vmem:[%s1258 + $0xb8] sm:%s1251]
        %1351 = vst [vmem:[%s1259 + $0xb4] sm:%s1251] %v1350
        %v1352 = vld [vmem:[%s1258 + $0xb4] sm:%s1251]
        %1353 = vst [vmem:[%s1259 + $0xb8] sm:%s1251] %v1352
        %v1354 = vld [vmem:[%s1258 + $0xbc] sm:%s1251]
        %1355 = vst [vmem:[%s1259 + $0xbc] sm:%s1251] %v1354
        %v1356 = vld [vmem:[%s1258 + $0xc0] sm:%s1251]
        %1357 = vst [vmem:[%s1259 + $0xc0] sm:%s1251] %v1356
        %v1358 = vld [vmem:[%s1258 + $0xc8] sm:%s1251]
        %1359 = vst [vmem:[%s1259 + $0xc4] sm:%s1251] %v1358
        %v1360 = vld [vmem:[%s1258 + $0xc4] sm:%s1251]
        %1361 = vst [vmem:[%s1259 + $0xc8] sm:%s1251] %v1360
        %v1362 = vld [vmem:[%s1258 + $0xcc] sm:%s1251]
        %1363 = vst [vmem:[%s1259 + $0xcc] sm:%s1251] %v1362
        %v1364 = vld [vmem:[%s1258 + $0xd0] sm:%s1251]
        %1365 = vst [vmem:[%s1259 + $0xd0] sm:%s1251] %v1364
        %v1366 = vld [vmem:[%s1258 + $0xd8] sm:%s1251]
        %1367 = vst [vmem:[%s1259 + $0xd4] sm:%s1251] %v1366
        %v1368 = vld [vmem:[%s1258 + $0xd4] sm:%s1251]
        %1369 = vst [vmem:[%s1259 + $0xd8] sm:%s1251] %v1368
        %v1370 = vld [vmem:[%s1258 + $0xdc] sm:%s1251]
        %1371 = vst [vmem:[%s1259 + $0xdc] sm:%s1251] %v1370
        %v1372 = vld [vmem:[%s1258 + $0xe0] sm:%s1251]
        %1373 = vst [vmem:[%s1259 + $0xe0] sm:%s1251] %v1372
        %v1374 = vld [vmem:[%s1258 + $0xe8] sm:%s1251]
        %1375 = vst [vmem:[%s1259 + $0xe4] sm:%s1251] %v1374
        %v1376 = vld [vmem:[%s1258 + $0xe4] sm:%s1251]
        %1377 = vst [vmem:[%s1259 + $0xe8] sm:%s1251] %v1376
        %v1378 = vld [vmem:[%s1258 + $0xec] sm:%s1251]
        %1379 = vst [vmem:[%s1259 + $0xec] sm:%s1251] %v1378
        %v1380 = vld [vmem:[%s1258 + $0xf0] sm:%s1251]
        %1381 = vst [vmem:[%s1259 + $0xf0] sm:%s1251] %v1380
        %v1382 = vld [vmem:[%s1258 + $0xf8] sm:%s1251]
        %1383 = vst [vmem:[%s1259 + $0xf4] sm:%s1251] %v1382
        %v1384 = vld [vmem:[%s1258 + $0xf4] sm:%s1251]
        %1385 = vst [vmem:[%s1259 + $0xf8] sm:%s1251] %v1384
        %v1386 = vld [vmem:[%s1258 + $0xfc] sm:%s1251]
        %1387 = vst [vmem:[%s1259 + $0xfc] sm:%s1251] %v1386
        %v1388 = vld [vmem:[%s1258 + $0x100] sm:%s1251]
        %1389 = vst [vmem:[%s1259 + $0x100] sm:%s1251] %v1388
        %v1390 = vld [vmem:[%s1258 + $0x108] sm:%s1251]
        %1391 = vst [vmem:[%s1259 + $0x104] sm:%s1251] %v1390
        %v1392 = vld [vmem:[%s1258 + $0x104] sm:%s1251]
        %1393 = vst [vmem:[%s1259 + $0x108] sm:%s1251] %v1392
        %v1394 = vld [vmem:[%s1258 + $0x10c] sm:%s1251]
        %1395 = vst [vmem:[%s1259 + $0x10c] sm:%s1251] %v1394
        %v1396 = vld [vmem:[%s1258 + $0x110] sm:%s1251]
        %1397 = vst [vmem:[%s1259 + $0x110] sm:%s1251] %v1396
        %v1398 = vld [vmem:[%s1258 + $0x118] sm:%s1251]
        %1399 = vst [vmem:[%s1259 + $0x114] sm:%s1251] %v1398
        %v1400 = vld [vmem:[%s1258 + $0x114] sm:%s1251]
        %1401 = vst [vmem:[%s1259 + $0x118] sm:%s1251] %v1400
        %v1402 = vld [vmem:[%s1258 + $0x11c] sm:%s1251]
        %1403 = vst [vmem:[%s1259 + $0x11c] sm:%s1251] %v1402
        %v1404 = vld [vmem:[%s1258 + $0x120] sm:%s1251]
        %1405 = vst [vmem:[%s1259 + $0x120] sm:%s1251] %v1404
        %v1406 = vld [vmem:[%s1258 + $0x128] sm:%s1251]
        %1407 = vst [vmem:[%s1259 + $0x124] sm:%s1251] %v1406
        %v1408 = vld [vmem:[%s1258 + $0x124] sm:%s1251]
        %1409 = vst [vmem:[%s1259 + $0x128] sm:%s1251] %v1408
        %v1410 = vld [vmem:[%s1258 + $0x12c] sm:%s1251]
        %1411 = vst [vmem:[%s1259 + $0x12c] sm:%s1251] %v1410
        %v1412 = vld [vmem:[%s1258 + $0x130] sm:%s1251]
        %1413 = vst [vmem:[%s1259 + $0x130] sm:%s1251] %v1412
        %v1414 = vld [vmem:[%s1258 + $0x138] sm:%s1251]
        %1415 = vst [vmem:[%s1259 + $0x134] sm:%s1251] %v1414
        %v1416 = vld [vmem:[%s1258 + $0x134] sm:%s1251]
        %1417 = vst [vmem:[%s1259 + $0x138] sm:%s1251] %v1416
        %v1418 = vld [vmem:[%s1258 + $0x13c] sm:%s1251]
        %1419 = vst [vmem:[%s1259 + $0x13c] sm:%s1251] %v1418
        %v1420 = vld [vmem:[%s1258 + $0x140] sm:%s1251]
        %1421 = vst [vmem:[%s1259 + $0x140] sm:%s1251] %v1420
        %v1422 = vld [vmem:[%s1258 + $0x148] sm:%s1251]
        %1423 = vst [vmem:[%s1259 + $0x144] sm:%s1251] %v1422
        %v1424 = vld [vmem:[%s1258 + $0x144] sm:%s1251]
        %1425 = vst [vmem:[%s1259 + $0x148] sm:%s1251] %v1424
        %v1426 = vld [vmem:[%s1258 + $0x14c] sm:%s1251]
        %1427 = vst [vmem:[%s1259 + $0x14c] sm:%s1251] %v1426
        %v1428 = vld [vmem:[%s1258 + $0x150] sm:%s1251]
        %1429 = vst [vmem:[%s1259 + $0x150] sm:%s1251] %v1428
        %v1430 = vld [vmem:[%s1258 + $0x158] sm:%s1251]
        %1431 = vst [vmem:[%s1259 + $0x154] sm:%s1251] %v1430
        %v1432 = vld [vmem:[%s1258 + $0x154] sm:%s1251]
        %1433 = vst [vmem:[%s1259 + $0x158] sm:%s1251] %v1432
        %v1434 = vld [vmem:[%s1258 + $0x15c] sm:%s1251]
        %1435 = vst [vmem:[%s1259 + $0x15c] sm:%s1251] %v1434
        %v1436 = vld [vmem:[%s1258 + $0x160] sm:%s1251]
        %1437 = vst [vmem:[%s1259 + $0x160] sm:%s1251] %v1436
        %v1438 = vld [vmem:[%s1258 + $0x168] sm:%s1251]
        %1439 = vst [vmem:[%s1259 + $0x164] sm:%s1251] %v1438
        %v1440 = vld [vmem:[%s1258 + $0x164] sm:%s1251]
        %1441 = vst [vmem:[%s1259 + $0x168] sm:%s1251] %v1440
        %v1442 = vld [vmem:[%s1258 + $0x16c] sm:%s1251]
        %1443 = vst [vmem:[%s1259 + $0x16c] sm:%s1251] %v1442
        %v1444 = vld [vmem:[%s1258 + $0x170] sm:%s1251]
        %1445 = vst [vmem:[%s1259 + $0x170] sm:%s1251] %v1444
        %v1446 = vld [vmem:[%s1258 + $0x178] sm:%s1251]
        %1447 = vst [vmem:[%s1259 + $0x174] sm:%s1251] %v1446
        %v1448 = vld [vmem:[%s1258 + $0x174] sm:%s1251]
        %1449 = vst [vmem:[%s1259 + $0x178] sm:%s1251] %v1448
        %v1450 = vld [vmem:[%s1258 + $0x17c] sm:%s1251]
        %1451 = vst [vmem:[%s1259 + $0x17c] sm:%s1251] %v1450
        %v1452 = vld [vmem:[%s1258 + $0x180] sm:%s1251]
        %1453 = vst [vmem:[%s1259 + $0x180] sm:%s1251] %v1452
        %v1454 = vld [vmem:[%s1258 + $0x188] sm:%s1251]
        %1455 = vst [vmem:[%s1259 + $0x184] sm:%s1251] %v1454
        %v1456 = vld [vmem:[%s1258 + $0x184] sm:%s1251]
        %1457 = vst [vmem:[%s1259 + $0x188] sm:%s1251] %v1456
        %v1458 = vld [vmem:[%s1258 + $0x18c] sm:%s1251]
        %1459 = vst [vmem:[%s1259 + $0x18c] sm:%s1251] %v1458
        %v1460 = vld [vmem:[%s1258 + $0x190] sm:%s1251]
        %1461 = vst [vmem:[%s1259 + $0x190] sm:%s1251] %v1460
        %v1462 = vld [vmem:[%s1258 + $0x198] sm:%s1251]
        %1463 = vst [vmem:[%s1259 + $0x194] sm:%s1251] %v1462
        %v1464 = vld [vmem:[%s1258 + $0x194] sm:%s1251]
        %1465 = vst [vmem:[%s1259 + $0x198] sm:%s1251] %v1464
        %v1466 = vld [vmem:[%s1258 + $0x19c] sm:%s1251]
        %1467 = vst [vmem:[%s1259 + $0x19c] sm:%s1251] %v1466
        %v1468 = vld [vmem:[%s1258 + $0x1a0] sm:%s1251]
        %1469 = vst [vmem:[%s1259 + $0x1a0] sm:%s1251] %v1468
        %v1470 = vld [vmem:[%s1258 + $0x1a8] sm:%s1251]
        %1471 = vst [vmem:[%s1259 + $0x1a4] sm:%s1251] %v1470
        %v1472 = vld [vmem:[%s1258 + $0x1a4] sm:%s1251]
        %1473 = vst [vmem:[%s1259 + $0x1a8] sm:%s1251] %v1472
        %v1474 = vld [vmem:[%s1258 + $0x1ac] sm:%s1251]
        %1475 = vst [vmem:[%s1259 + $0x1ac] sm:%s1251] %v1474
        %v1476 = vld [vmem:[%s1258 + $0x1b0] sm:%s1251]
        %1477 = vst [vmem:[%s1259 + $0x1b0] sm:%s1251] %v1476
        %v1478 = vld [vmem:[%s1258 + $0x1b8] sm:%s1251]
        %1479 = vst [vmem:[%s1259 + $0x1b4] sm:%s1251] %v1478
        %v1480 = vld [vmem:[%s1258 + $0x1b4] sm:%s1251]
        %1481 = vst [vmem:[%s1259 + $0x1b8] sm:%s1251] %v1480
        %v1482 = vld [vmem:[%s1258 + $0x1bc] sm:%s1251]
        %1483 = vst [vmem:[%s1259 + $0x1bc] sm:%s1251] %v1482
        %v1484 = vld [vmem:[%s1258 + $0x1c0] sm:%s1251]
        %1485 = vst [vmem:[%s1259 + $0x1c0] sm:%s1251] %v1484
        %v1486 = vld [vmem:[%s1258 + $0x1c8] sm:%s1251]
        %1487 = vst [vmem:[%s1259 + $0x1c4] sm:%s1251] %v1486
        %v1488 = vld [vmem:[%s1258 + $0x1c4] sm:%s1251]
        %1489 = vst [vmem:[%s1259 + $0x1c8] sm:%s1251] %v1488
        %v1490 = vld [vmem:[%s1258 + $0x1cc] sm:%s1251]
        %1491 = vst [vmem:[%s1259 + $0x1cc] sm:%s1251] %v1490
        %v1492 = vld [vmem:[%s1258 + $0x1d0] sm:%s1251]
        %1493 = vst [vmem:[%s1259 + $0x1d0] sm:%s1251] %v1492
        %v1494 = vld [vmem:[%s1258 + $0x1d8] sm:%s1251]
        %1495 = vst [vmem:[%s1259 + $0x1d4] sm:%s1251] %v1494
        %v1496 = vld [vmem:[%s1258 + $0x1d4] sm:%s1251]
        %1497 = vst [vmem:[%s1259 + $0x1d8] sm:%s1251] %v1496
        %v1498 = vld [vmem:[%s1258 + $0x1dc] sm:%s1251]
        %1499 = vst [vmem:[%s1259 + $0x1dc] sm:%s1251] %v1498
        %v1500 = vld [vmem:[%s1258 + $0x1e0] sm:%s1251]
        %1501 = vst [vmem:[%s1259 + $0x1e0] sm:%s1251] %v1500
        %v1502 = vld [vmem:[%s1258 + $0x1e8] sm:%s1251]
        %1503 = vst [vmem:[%s1259 + $0x1e4] sm:%s1251] %v1502
        %v1504 = vld [vmem:[%s1258 + $0x1e4] sm:%s1251]
        %1505 = vst [vmem:[%s1259 + $0x1e8] sm:%s1251] %v1504
        %v1506 = vld [vmem:[%s1258 + $0x1ec] sm:%s1251]
        %1507 = vst [vmem:[%s1259 + $0x1ec] sm:%s1251] %v1506
        %v1508 = vld [vmem:[%s1258 + $0x1f0] sm:%s1251]
        %1509 = vst [vmem:[%s1259 + $0x1f0] sm:%s1251] %v1508
        %v1510 = vld [vmem:[%s1258 + $0x1f8] sm:%s1251]
        %1511 = vst [vmem:[%s1259 + $0x1f4] sm:%s1251] %v1510
        %v1512 = vld [vmem:[%s1258 + $0x1f4] sm:%s1251]
        %1513 = vst [vmem:[%s1259 + $0x1f8] sm:%s1251] %v1512
        %v1514 = vld [vmem:[%s1258 + $0x1fc] sm:%s1251]
        %1515 = vst [vmem:[%s1259 + $0x1fc] sm:%s1251] %v1514
        %v1516 = vld [vmem:[%s1258 + $0x200] sm:%s1251]
        %1517 = vst [vmem:[%s1259 + $0x200] sm:%s1251] %v1516
        %v1518 = vld [vmem:[%s1258 + $0x208] sm:%s1251]
        %1519 = vst [vmem:[%s1259 + $0x204] sm:%s1251] %v1518
        %v1520 = vld [vmem:[%s1258 + $0x204] sm:%s1251]
        %1521 = vst [vmem:[%s1259 + $0x208] sm:%s1251] %v1520
        %v1522 = vld [vmem:[%s1258 + $0x20c] sm:%s1251]
        %1523 = vst [vmem:[%s1259 + $0x20c] sm:%s1251] %v1522
        %v1524 = vld [vmem:[%s1258 + $0x210] sm:%s1251]
        %1525 = vst [vmem:[%s1259 + $0x210] sm:%s1251] %v1524
        %v1526 = vld [vmem:[%s1258 + $0x218] sm:%s1251]
        %1527 = vst [vmem:[%s1259 + $0x214] sm:%s1251] %v1526
        %v1528 = vld [vmem:[%s1258 + $0x214] sm:%s1251]
        %1529 = vst [vmem:[%s1259 + $0x218] sm:%s1251] %v1528
        %v1530 = vld [vmem:[%s1258 + $0x21c] sm:%s1251]
        %1531 = vst [vmem:[%s1259 + $0x21c] sm:%s1251] %v1530
        %v1532 = vld [vmem:[%s1258 + $0x220] sm:%s1251]
        %1533 = vst [vmem:[%s1259 + $0x220] sm:%s1251] %v1532
        %v1534 = vld [vmem:[%s1258 + $0x228] sm:%s1251]
        %1535 = vst [vmem:[%s1259 + $0x224] sm:%s1251] %v1534
        %v1536 = vld [vmem:[%s1258 + $0x224] sm:%s1251]
        %1537 = vst [vmem:[%s1259 + $0x228] sm:%s1251] %v1536
        %v1538 = vld [vmem:[%s1258 + $0x22c] sm:%s1251]
        %1539 = vst [vmem:[%s1259 + $0x22c] sm:%s1251] %v1538
        %v1540 = vld [vmem:[%s1258 + $0x230] sm:%s1251]
        %1541 = vst [vmem:[%s1259 + $0x230] sm:%s1251] %v1540
        %v1542 = vld [vmem:[%s1258 + $0x238] sm:%s1251]
        %1543 = vst [vmem:[%s1259 + $0x234] sm:%s1251] %v1542
        %v1544 = vld [vmem:[%s1258 + $0x234] sm:%s1251]
        %1545 = vst [vmem:[%s1259 + $0x238] sm:%s1251] %v1544
        %v1546 = vld [vmem:[%s1258 + $0x23c] sm:%s1251]
        %1547 = vst [vmem:[%s1259 + $0x23c] sm:%s1251] %v1546
        %v1548 = vld [vmem:[%s1258 + $0x240] sm:%s1251]
        %1549 = vst [vmem:[%s1259 + $0x240] sm:%s1251] %v1548
        %v1550 = vld [vmem:[%s1258 + $0x248] sm:%s1251]
        %1551 = vst [vmem:[%s1259 + $0x244] sm:%s1251] %v1550
        %v1552 = vld [vmem:[%s1258 + $0x244] sm:%s1251]
        %1553 = vst [vmem:[%s1259 + $0x248] sm:%s1251] %v1552
        %v1554 = vld [vmem:[%s1258 + $0x24c] sm:%s1251]
        %1555 = vst [vmem:[%s1259 + $0x24c] sm:%s1251] %v1554
        %v1556 = vld [vmem:[%s1258 + $0x250] sm:%s1251]
        %1557 = vst [vmem:[%s1259 + $0x250] sm:%s1251] %v1556
        %v1558 = vld [vmem:[%s1258 + $0x258] sm:%s1251]
        %1559 = vst [vmem:[%s1259 + $0x254] sm:%s1251] %v1558
        %v1560 = vld [vmem:[%s1258 + $0x254] sm:%s1251]
        %1561 = vst [vmem:[%s1259 + $0x258] sm:%s1251] %v1560
        %v1562 = vld [vmem:[%s1258 + $0x25c] sm:%s1251]
        %1563 = vst [vmem:[%s1259 + $0x25c] sm:%s1251] %v1562
        %v1564 = vld [vmem:[%s1258 + $0x260] sm:%s1251]
        %1565 = vst [vmem:[%s1259 + $0x260] sm:%s1251] %v1564
        %v1566 = vld [vmem:[%s1258 + $0x268] sm:%s1251]
        %1567 = vst [vmem:[%s1259 + $0x264] sm:%s1251] %v1566
        %v1568 = vld [vmem:[%s1258 + $0x264] sm:%s1251]
        %1569 = vst [vmem:[%s1259 + $0x268] sm:%s1251] %v1568
        %v1570 = vld [vmem:[%s1258 + $0x26c] sm:%s1251]
        %1571 = vst [vmem:[%s1259 + $0x26c] sm:%s1251] %v1570
        %v1572 = vld [vmem:[%s1258 + $0x270] sm:%s1251]
        %1573 = vst [vmem:[%s1259 + $0x270] sm:%s1251] %v1572
        %v1574 = vld [vmem:[%s1258 + $0x278] sm:%s1251]
        %1575 = vst [vmem:[%s1259 + $0x274] sm:%s1251] %v1574
        %v1576 = vld [vmem:[%s1258 + $0x274] sm:%s1251]
        %1577 = vst [vmem:[%s1259 + $0x278] sm:%s1251] %v1576
        %v1578 = vld [vmem:[%s1258 + $0x27c] sm:%s1251]
        %1579 = vst [vmem:[%s1259 + $0x27c] sm:%s1251] %v1578
        %v1580 = vld [vmem:[%s1258 + $0x280] sm:%s1251]
        %1581 = vst [vmem:[%s1259 + $0x280] sm:%s1251] %v1580
        %v1582 = vld [vmem:[%s1258 + $0x288] sm:%s1251]
        %1583 = vst [vmem:[%s1259 + $0x284] sm:%s1251] %v1582
        %v1584 = vld [vmem:[%s1258 + $0x284] sm:%s1251]
        %1585 = vst [vmem:[%s1259 + $0x288] sm:%s1251] %v1584
        %v1586 = vld [vmem:[%s1258 + $0x28c] sm:%s1251]
        %1587 = vst [vmem:[%s1259 + $0x28c] sm:%s1251] %v1586
        %v1588 = vld [vmem:[%s1258 + $0x290] sm:%s1251]
        %1589 = vst [vmem:[%s1259 + $0x290] sm:%s1251] %v1588
        %v1590 = vld [vmem:[%s1258 + $0x298] sm:%s1251]
        %1591 = vst [vmem:[%s1259 + $0x294] sm:%s1251] %v1590
        %v1592 = vld [vmem:[%s1258 + $0x294] sm:%s1251]
        %1593 = vst [vmem:[%s1259 + $0x298] sm:%s1251] %v1592
        %v1594 = vld [vmem:[%s1258 + $0x29c] sm:%s1251]
        %1595 = vst [vmem:[%s1259 + $0x29c] sm:%s1251] %v1594
        %v1596 = vld [vmem:[%s1258 + $0x2a0] sm:%s1251]
        %1597 = vst [vmem:[%s1259 + $0x2a0] sm:%s1251] %v1596
        %v1598 = vld [vmem:[%s1258 + $0x2a8] sm:%s1251]
        %1599 = vst [vmem:[%s1259 + $0x2a4] sm:%s1251] %v1598
        %v1600 = vld [vmem:[%s1258 + $0x2a4] sm:%s1251]
        %1601 = vst [vmem:[%s1259 + $0x2a8] sm:%s1251] %v1600
        %v1602 = vld [vmem:[%s1258 + $0x2ac] sm:%s1251]
        %1603 = vst [vmem:[%s1259 + $0x2ac] sm:%s1251] %v1602
        %v1604 = vld [vmem:[%s1258 + $0x2b0] sm:%s1251]
        %1605 = vst [vmem:[%s1259 + $0x2b0] sm:%s1251] %v1604
        %v1606 = vld [vmem:[%s1258 + $0x2b8] sm:%s1251]
        %1607 = vst [vmem:[%s1259 + $0x2b4] sm:%s1251] %v1606
        %v1608 = vld [vmem:[%s1258 + $0x2b4] sm:%s1251]
        %1609 = vst [vmem:[%s1259 + $0x2b8] sm:%s1251] %v1608
        %v1610 = vld [vmem:[%s1258 + $0x2bc] sm:%s1251]
        %1611 = vst [vmem:[%s1259 + $0x2bc] sm:%s1251] %v1610
        %v1612 = vld [vmem:[%s1258 + $0x2c0] sm:%s1251]
        %1613 = vst [vmem:[%s1259 + $0x2c0] sm:%s1251] %v1612
        %v1614 = vld [vmem:[%s1258 + $0x2c8] sm:%s1251]
        %1615 = vst [vmem:[%s1259 + $0x2c4] sm:%s1251] %v1614
        %v1616 = vld [vmem:[%s1258 + $0x2c4] sm:%s1251]
        %1617 = vst [vmem:[%s1259 + $0x2c8] sm:%s1251] %v1616
        %v1618 = vld [vmem:[%s1258 + $0x2cc] sm:%s1251]
        %1619 = vst [vmem:[%s1259 + $0x2cc] sm:%s1251] %v1618
        %v1620 = vld [vmem:[%s1258 + $0x2d0] sm:%s1251]
        %1621 = vst [vmem:[%s1259 + $0x2d0] sm:%s1251] %v1620
        %v1622 = vld [vmem:[%s1258 + $0x2d8] sm:%s1251]
        %1623 = vst [vmem:[%s1259 + $0x2d4] sm:%s1251] %v1622
        %v1624 = vld [vmem:[%s1258 + $0x2d4] sm:%s1251]
        %1625 = vst [vmem:[%s1259 + $0x2d8] sm:%s1251] %v1624
        %v1626 = vld [vmem:[%s1258 + $0x2dc] sm:%s1251]
        %1627 = vst [vmem:[%s1259 + $0x2dc] sm:%s1251] %v1626
        %v1628 = vld [vmem:[%s1258 + $0x2e0] sm:%s1251]
        %1629 = vst [vmem:[%s1259 + $0x2e0] sm:%s1251] %v1628
        %v1630 = vld [vmem:[%s1258 + $0x2e8] sm:%s1251]
        %1631 = vst [vmem:[%s1259 + $0x2e4] sm:%s1251] %v1630
        %v1632 = vld [vmem:[%s1258 + $0x2e4] sm:%s1251]
        %1633 = vst [vmem:[%s1259 + $0x2e8] sm:%s1251] %v1632
        %v1634 = vld [vmem:[%s1258 + $0x2ec] sm:%s1251]
        %1635 = vst [vmem:[%s1259 + $0x2ec] sm:%s1251] %v1634
        %v1636 = vld [vmem:[%s1258 + $0x2f0] sm:%s1251]
        %1637 = vst [vmem:[%s1259 + $0x2f0] sm:%s1251] %v1636
        %v1638 = vld [vmem:[%s1258 + $0x2f8] sm:%s1251]
        %1639 = vst [vmem:[%s1259 + $0x2f4] sm:%s1251] %v1638
        %v1640 = vld [vmem:[%s1258 + $0x2f4] sm:%s1251]
        %1641 = vst [vmem:[%s1259 + $0x2f8] sm:%s1251] %v1640
        %v1642 = vld [vmem:[%s1258 + $0x2fc] sm:%s1251]
        %1643 = vst [vmem:[%s1259 + $0x2fc] sm:%s1251] %v1642
      $region77: #{capsule_net_forward.1} parent=64 // loop_footer
        %s1257 = sadd.s32 1, %s1253
      $region78: #{capsule_net_forward.1} parent=64 // loop_footer_branch
        %1252 = sbr.rel target = $region74
      $region79: #{capsule_net_forward.1} parent=64 // loop_exit
        _
    $region65: #{capsule_net_forward.1} parent=49 // pred_fallthru
      _
  $region50: #{capsule_net_forward.1} parent=0 // pred_fallthru
    _
  // Predicated region
  $region51: #{capsule_net_forward.1} parent=0 // pred_check
    %p837 = pneg %p833
  $region52: #{capsule_net_forward.1} parent=0 // pred_check_branch
    %839 = sbr.rel (%p837) target = $region54
  $region53: #{capsule_net_forward.1} parent=0 // pred_region
    %s840 = sshllo.u32 0, 4
    loop: start=0, step=1, limit=1
    $region55: #{capsule_net_forward.1} parent=53 // loop_pre_header
      _
    $region56: #{capsule_net_forward.1} parent=53 // loop_header
      %s842 = sphi 0, %s846
      %p843 = scmp.ge.s32.totalorder %s842, 1
      %s847 = sphi %s3, %s3
      %s848 = sphi [#allocation3], [#allocation3]
    $region57: #{capsule_net_forward.1} parent=53 // loop_header_branch
      %845 = sbr.rel (%p843) target = $region61
    $region58: #{capsule_net_forward.1} parent=53 // loop_body
      %v849 = vld [vmem:[%s847] sm:%s840]
      %850 = vst [vmem:[%s848] sm:%s840] %v849
      %v851 = vld [vmem:[%s847 + $0x8] sm:%s840]
      %852 = vst [vmem:[%s848 + $0x4] sm:%s840] %v851
      %v853 = vld [vmem:[%s847 + $0x4] sm:%s840]
      %854 = vst [vmem:[%s848 + $0x8] sm:%s840] %v853
      %v855 = vld [vmem:[%s847 + $0xc] sm:%s840]
      %856 = vst [vmem:[%s848 + $0xc] sm:%s840] %v855
      %v857 = vld [vmem:[%s847 + $0x10] sm:%s840]
      %858 = vst [vmem:[%s848 + $0x10] sm:%s840] %v857
      %v859 = vld [vmem:[%s847 + $0x18] sm:%s840]
      %860 = vst [vmem:[%s848 + $0x14] sm:%s840] %v859
      %v861 = vld [vmem:[%s847 + $0x14] sm:%s840]
      %862 = vst [vmem:[%s848 + $0x18] sm:%s840] %v861
      %v863 = vld [vmem:[%s847 + $0x1c] sm:%s840]
      %864 = vst [vmem:[%s848 + $0x1c] sm:%s840] %v863
      %v865 = vld [vmem:[%s847 + $0x20] sm:%s840]
      %866 = vst [vmem:[%s848 + $0x20] sm:%s840] %v865
      %v867 = vld [vmem:[%s847 + $0x28] sm:%s840]
      %868 = vst [vmem:[%s848 + $0x24] sm:%s840] %v867
      %v869 = vld [vmem:[%s847 + $0x24] sm:%s840]
      %870 = vst [vmem:[%s848 + $0x28] sm:%s840] %v869
      %v871 = vld [vmem:[%s847 + $0x2c] sm:%s840]
      %872 = vst [vmem:[%s848 + $0x2c] sm:%s840] %v871
      %v873 = vld [vmem:[%s847 + $0x30] sm:%s840]
      %874 = vst [vmem:[%s848 + $0x30] sm:%s840] %v873
      %v875 = vld [vmem:[%s847 + $0x38] sm:%s840]
      %876 = vst [vmem:[%s848 + $0x34] sm:%s840] %v875
      %v877 = vld [vmem:[%s847 + $0x34] sm:%s840]
      %878 = vst [vmem:[%s848 + $0x38] sm:%s840] %v877
      %v879 = vld [vmem:[%s847 + $0x3c] sm:%s840]
      %880 = vst [vmem:[%s848 + $0x3c] sm:%s840] %v879
      %v881 = vld [vmem:[%s847 + $0x40] sm:%s840]
      %882 = vst [vmem:[%s848 + $0x40] sm:%s840] %v881
      %v883 = vld [vmem:[%s847 + $0x48] sm:%s840]
      %884 = vst [vmem:[%s848 + $0x44] sm:%s840] %v883
      %v885 = vld [vmem:[%s847 + $0x44] sm:%s840]
      %886 = vst [vmem:[%s848 + $0x48] sm:%s840] %v885
      %v887 = vld [vmem:[%s847 + $0x4c] sm:%s840]
      %888 = vst [vmem:[%s848 + $0x4c] sm:%s840] %v887
      %v889 = vld [vmem:[%s847 + $0x50] sm:%s840]
      %890 = vst [vmem:[%s848 + $0x50] sm:%s840] %v889
      %v891 = vld [vmem:[%s847 + $0x58] sm:%s840]
      %892 = vst [vmem:[%s848 + $0x54] sm:%s840] %v891
      %v893 = vld [vmem:[%s847 + $0x54] sm:%s840]
      %894 = vst [vmem:[%s848 + $0x58] sm:%s840] %v893
      %v895 = vld [vmem:[%s847 + $0x5c] sm:%s840]
      %896 = vst [vmem:[%s848 + $0x5c] sm:%s840] %v895
      %v897 = vld [vmem:[%s847 + $0x60] sm:%s840]
      %898 = vst [vmem:[%s848 + $0x60] sm:%s840] %v897
      %v899 = vld [vmem:[%s847 + $0x68] sm:%s840]
      %900 = vst [vmem:[%s848 + $0x64] sm:%s840] %v899
      %v901 = vld [vmem:[%s847 + $0x64] sm:%s840]
      %902 = vst [vmem:[%s848 + $0x68] sm:%s840] %v901
      %v903 = vld [vmem:[%s847 + $0x6c] sm:%s840]
      %904 = vst [vmem:[%s848 + $0x6c] sm:%s840] %v903
      %v905 = vld [vmem:[%s847 + $0x70] sm:%s840]
      %906 = vst [vmem:[%s848 + $0x70] sm:%s840] %v905
      %v907 = vld [vmem:[%s847 + $0x78] sm:%s840]
      %908 = vst [vmem:[%s848 + $0x74] sm:%s840] %v907
      %v909 = vld [vmem:[%s847 + $0x74] sm:%s840]
      %910 = vst [vmem:[%s848 + $0x78] sm:%s840] %v909
      %v911 = vld [vmem:[%s847 + $0x7c] sm:%s840]
      %912 = vst [vmem:[%s848 + $0x7c] sm:%s840] %v911
      %v913 = vld [vmem:[%s847 + $0x80] sm:%s840]
      %914 = vst [vmem:[%s848 + $0x80] sm:%s840] %v913
      %v915 = vld [vmem:[%s847 + $0x88] sm:%s840]
      %916 = vst [vmem:[%s848 + $0x84] sm:%s840] %v915
      %v917 = vld [vmem:[%s847 + $0x84] sm:%s840]
      %918 = vst [vmem:[%s848 + $0x88] sm:%s840] %v917
      %v919 = vld [vmem:[%s847 + $0x8c] sm:%s840]
      %920 = vst [vmem:[%s848 + $0x8c] sm:%s840] %v919
      %v921 = vld [vmem:[%s847 + $0x90] sm:%s840]
      %922 = vst [vmem:[%s848 + $0x90] sm:%s840] %v921
      %v923 = vld [vmem:[%s847 + $0x98] sm:%s840]
      %924 = vst [vmem:[%s848 + $0x94] sm:%s840] %v923
      %v925 = vld [vmem:[%s847 + $0x94] sm:%s840]
      %926 = vst [vmem:[%s848 + $0x98] sm:%s840] %v925
      %v927 = vld [vmem:[%s847 + $0x9c] sm:%s840]
      %928 = vst [vmem:[%s848 + $0x9c] sm:%s840] %v927
      %v929 = vld [vmem:[%s847 + $0xa0] sm:%s840]
      %930 = vst [vmem:[%s848 + $0xa0] sm:%s840] %v929
      %v931 = vld [vmem:[%s847 + $0xa8] sm:%s840]
      %932 = vst [vmem:[%s848 + $0xa4] sm:%s840] %v931
      %v933 = vld [vmem:[%s847 + $0xa4] sm:%s840]
      %934 = vst [vmem:[%s848 + $0xa8] sm:%s840] %v933
      %v935 = vld [vmem:[%s847 + $0xac] sm:%s840]
      %936 = vst [vmem:[%s848 + $0xac] sm:%s840] %v935
      %v937 = vld [vmem:[%s847 + $0xb0] sm:%s840]
      %938 = vst [vmem:[%s848 + $0xb0] sm:%s840] %v937
      %v939 = vld [vmem:[%s847 + $0xb8] sm:%s840]
      %940 = vst [vmem:[%s848 + $0xb4] sm:%s840] %v939
      %v941 = vld [vmem:[%s847 + $0xb4] sm:%s840]
      %942 = vst [vmem:[%s848 + $0xb8] sm:%s840] %v941
      %v943 = vld [vmem:[%s847 + $0xbc] sm:%s840]
      %944 = vst [vmem:[%s848 + $0xbc] sm:%s840] %v943
      %v945 = vld [vmem:[%s847 + $0xc0] sm:%s840]
      %946 = vst [vmem:[%s848 + $0xc0] sm:%s840] %v945
      %v947 = vld [vmem:[%s847 + $0xc8] sm:%s840]
      %948 = vst [vmem:[%s848 + $0xc4] sm:%s840] %v947
      %v949 = vld [vmem:[%s847 + $0xc4] sm:%s840]
      %950 = vst [vmem:[%s848 + $0xc8] sm:%s840] %v949
      %v951 = vld [vmem:[%s847 + $0xcc] sm:%s840]
      %952 = vst [vmem:[%s848 + $0xcc] sm:%s840] %v951
      %v953 = vld [vmem:[%s847 + $0xd0] sm:%s840]
      %954 = vst [vmem:[%s848 + $0xd0] sm:%s840] %v953
      %v955 = vld [vmem:[%s847 + $0xd8] sm:%s840]
      %956 = vst [vmem:[%s848 + $0xd4] sm:%s840] %v955
      %v957 = vld [vmem:[%s847 + $0xd4] sm:%s840]
      %958 = vst [vmem:[%s848 + $0xd8] sm:%s840] %v957
      %v959 = vld [vmem:[%s847 + $0xdc] sm:%s840]
      %960 = vst [vmem:[%s848 + $0xdc] sm:%s840] %v959
      %v961 = vld [vmem:[%s847 + $0xe0] sm:%s840]
      %962 = vst [vmem:[%s848 + $0xe0] sm:%s840] %v961
      %v963 = vld [vmem:[%s847 + $0xe8] sm:%s840]
      %964 = vst [vmem:[%s848 + $0xe4] sm:%s840] %v963
      %v965 = vld [vmem:[%s847 + $0xe4] sm:%s840]
      %966 = vst [vmem:[%s848 + $0xe8] sm:%s840] %v965
      %v967 = vld [vmem:[%s847 + $0xec] sm:%s840]
      %968 = vst [vmem:[%s848 + $0xec] sm:%s840] %v967
      %v969 = vld [vmem:[%s847 + $0xf0] sm:%s840]
      %970 = vst [vmem:[%s848 + $0xf0] sm:%s840] %v969
      %v971 = vld [vmem:[%s847 + $0xf8] sm:%s840]
      %972 = vst [vmem:[%s848 + $0xf4] sm:%s840] %v971
      %v973 = vld [vmem:[%s847 + $0xf4] sm:%s840]
      %974 = vst [vmem:[%s848 + $0xf8] sm:%s840] %v973
      %v975 = vld [vmem:[%s847 + $0xfc] sm:%s840]
      %976 = vst [vmem:[%s848 + $0xfc] sm:%s840] %v975
      %v977 = vld [vmem:[%s847 + $0x100] sm:%s840]
      %978 = vst [vmem:[%s848 + $0x100] sm:%s840] %v977
      %v979 = vld [vmem:[%s847 + $0x108] sm:%s840]
      %980 = vst [vmem:[%s848 + $0x104] sm:%s840] %v979
      %v981 = vld [vmem:[%s847 + $0x104] sm:%s840]
      %982 = vst [vmem:[%s848 + $0x108] sm:%s840] %v981
      %v983 = vld [vmem:[%s847 + $0x10c] sm:%s840]
      %984 = vst [vmem:[%s848 + $0x10c] sm:%s840] %v983
      %v985 = vld [vmem:[%s847 + $0x110] sm:%s840]
      %986 = vst [vmem:[%s848 + $0x110] sm:%s840] %v985
      %v987 = vld [vmem:[%s847 + $0x118] sm:%s840]
      %988 = vst [vmem:[%s848 + $0x114] sm:%s840] %v987
      %v989 = vld [vmem:[%s847 + $0x114] sm:%s840]
      %990 = vst [vmem:[%s848 + $0x118] sm:%s840] %v989
      %v991 = vld [vmem:[%s847 + $0x11c] sm:%s840]
      %992 = vst [vmem:[%s848 + $0x11c] sm:%s840] %v991
      %v993 = vld [vmem:[%s847 + $0x120] sm:%s840]
      %994 = vst [vmem:[%s848 + $0x120] sm:%s840] %v993
      %v995 = vld [vmem:[%s847 + $0x128] sm:%s840]
      %996 = vst [vmem:[%s848 + $0x124] sm:%s840] %v995
      %v997 = vld [vmem:[%s847 + $0x124] sm:%s840]
      %998 = vst [vmem:[%s848 + $0x128] sm:%s840] %v997
      %v999 = vld [vmem:[%s847 + $0x12c] sm:%s840]
      %1000 = vst [vmem:[%s848 + $0x12c] sm:%s840] %v999
      %v1001 = vld [vmem:[%s847 + $0x130] sm:%s840]
      %1002 = vst [vmem:[%s848 + $0x130] sm:%s840] %v1001
      %v1003 = vld [vmem:[%s847 + $0x138] sm:%s840]
      %1004 = vst [vmem:[%s848 + $0x134] sm:%s840] %v1003
      %v1005 = vld [vmem:[%s847 + $0x134] sm:%s840]
      %1006 = vst [vmem:[%s848 + $0x138] sm:%s840] %v1005
      %v1007 = vld [vmem:[%s847 + $0x13c] sm:%s840]
      %1008 = vst [vmem:[%s848 + $0x13c] sm:%s840] %v1007
      %v1009 = vld [vmem:[%s847 + $0x140] sm:%s840]
      %1010 = vst [vmem:[%s848 + $0x140] sm:%s840] %v1009
      %v1011 = vld [vmem:[%s847 + $0x148] sm:%s840]
      %1012 = vst [vmem:[%s848 + $0x144] sm:%s840] %v1011
      %v1013 = vld [vmem:[%s847 + $0x144] sm:%s840]
      %1014 = vst [vmem:[%s848 + $0x148] sm:%s840] %v1013
      %v1015 = vld [vmem:[%s847 + $0x14c] sm:%s840]
      %1016 = vst [vmem:[%s848 + $0x14c] sm:%s840] %v1015
      %v1017 = vld [vmem:[%s847 + $0x150] sm:%s840]
      %1018 = vst [vmem:[%s848 + $0x150] sm:%s840] %v1017
      %v1019 = vld [vmem:[%s847 + $0x158] sm:%s840]
      %1020 = vst [vmem:[%s848 + $0x154] sm:%s840] %v1019
      %v1021 = vld [vmem:[%s847 + $0x154] sm:%s840]
      %1022 = vst [vmem:[%s848 + $0x158] sm:%s840] %v1021
      %v1023 = vld [vmem:[%s847 + $0x15c] sm:%s840]
      %1024 = vst [vmem:[%s848 + $0x15c] sm:%s840] %v1023
      %v1025 = vld [vmem:[%s847 + $0x160] sm:%s840]
      %1026 = vst [vmem:[%s848 + $0x160] sm:%s840] %v1025
      %v1027 = vld [vmem:[%s847 + $0x168] sm:%s840]
      %1028 = vst [vmem:[%s848 + $0x164] sm:%s840] %v1027
      %v1029 = vld [vmem:[%s847 + $0x164] sm:%s840]
      %1030 = vst [vmem:[%s848 + $0x168] sm:%s840] %v1029
      %v1031 = vld [vmem:[%s847 + $0x16c] sm:%s840]
      %1032 = vst [vmem:[%s848 + $0x16c] sm:%s840] %v1031
      %v1033 = vld [vmem:[%s847 + $0x170] sm:%s840]
      %1034 = vst [vmem:[%s848 + $0x170] sm:%s840] %v1033
      %v1035 = vld [vmem:[%s847 + $0x178] sm:%s840]
      %1036 = vst [vmem:[%s848 + $0x174] sm:%s840] %v1035
      %v1037 = vld [vmem:[%s847 + $0x174] sm:%s840]
      %1038 = vst [vmem:[%s848 + $0x178] sm:%s840] %v1037
      %v1039 = vld [vmem:[%s847 + $0x17c] sm:%s840]
      %1040 = vst [vmem:[%s848 + $0x17c] sm:%s840] %v1039
      %v1041 = vld [vmem:[%s847 + $0x180] sm:%s840]
      %1042 = vst [vmem:[%s848 + $0x180] sm:%s840] %v1041
      %v1043 = vld [vmem:[%s847 + $0x188] sm:%s840]
      %1044 = vst [vmem:[%s848 + $0x184] sm:%s840] %v1043
      %v1045 = vld [vmem:[%s847 + $0x184] sm:%s840]
      %1046 = vst [vmem:[%s848 + $0x188] sm:%s840] %v1045
      %v1047 = vld [vmem:[%s847 + $0x18c] sm:%s840]
      %1048 = vst [vmem:[%s848 + $0x18c] sm:%s840] %v1047
      %v1049 = vld [vmem:[%s847 + $0x190] sm:%s840]
      %1050 = vst [vmem:[%s848 + $0x190] sm:%s840] %v1049
      %v1051 = vld [vmem:[%s847 + $0x198] sm:%s840]
      %1052 = vst [vmem:[%s848 + $0x194] sm:%s840] %v1051
      %v1053 = vld [vmem:[%s847 + $0x194] sm:%s840]
      %1054 = vst [vmem:[%s848 + $0x198] sm:%s840] %v1053
      %v1055 = vld [vmem:[%s847 + $0x19c] sm:%s840]
      %1056 = vst [vmem:[%s848 + $0x19c] sm:%s840] %v1055
      %v1057 = vld [vmem:[%s847 + $0x1a0] sm:%s840]
      %1058 = vst [vmem:[%s848 + $0x1a0] sm:%s840] %v1057
      %v1059 = vld [vmem:[%s847 + $0x1a8] sm:%s840]
      %1060 = vst [vmem:[%s848 + $0x1a4] sm:%s840] %v1059
      %v1061 = vld [vmem:[%s847 + $0x1a4] sm:%s840]
      %1062 = vst [vmem:[%s848 + $0x1a8] sm:%s840] %v1061
      %v1063 = vld [vmem:[%s847 + $0x1ac] sm:%s840]
      %1064 = vst [vmem:[%s848 + $0x1ac] sm:%s840] %v1063
      %v1065 = vld [vmem:[%s847 + $0x1b0] sm:%s840]
      %1066 = vst [vmem:[%s848 + $0x1b0] sm:%s840] %v1065
      %v1067 = vld [vmem:[%s847 + $0x1b8] sm:%s840]
      %1068 = vst [vmem:[%s848 + $0x1b4] sm:%s840] %v1067
      %v1069 = vld [vmem:[%s847 + $0x1b4] sm:%s840]
      %1070 = vst [vmem:[%s848 + $0x1b8] sm:%s840] %v1069
      %v1071 = vld [vmem:[%s847 + $0x1bc] sm:%s840]
      %1072 = vst [vmem:[%s848 + $0x1bc] sm:%s840] %v1071
      %v1073 = vld [vmem:[%s847 + $0x1c0] sm:%s840]
      %1074 = vst [vmem:[%s848 + $0x1c0] sm:%s840] %v1073
      %v1075 = vld [vmem:[%s847 + $0x1c8] sm:%s840]
      %1076 = vst [vmem:[%s848 + $0x1c4] sm:%s840] %v1075
      %v1077 = vld [vmem:[%s847 + $0x1c4] sm:%s840]
      %1078 = vst [vmem:[%s848 + $0x1c8] sm:%s840] %v1077
      %v1079 = vld [vmem:[%s847 + $0x1cc] sm:%s840]
      %1080 = vst [vmem:[%s848 + $0x1cc] sm:%s840] %v1079
      %v1081 = vld [vmem:[%s847 + $0x1d0] sm:%s840]
      %1082 = vst [vmem:[%s848 + $0x1d0] sm:%s840] %v1081
      %v1083 = vld [vmem:[%s847 + $0x1d8] sm:%s840]
      %1084 = vst [vmem:[%s848 + $0x1d4] sm:%s840] %v1083
      %v1085 = vld [vmem:[%s847 + $0x1d4] sm:%s840]
      %1086 = vst [vmem:[%s848 + $0x1d8] sm:%s840] %v1085
      %v1087 = vld [vmem:[%s847 + $0x1dc] sm:%s840]
      %1088 = vst [vmem:[%s848 + $0x1dc] sm:%s840] %v1087
      %v1089 = vld [vmem:[%s847 + $0x1e0] sm:%s840]
      %1090 = vst [vmem:[%s848 + $0x1e0] sm:%s840] %v1089
      %v1091 = vld [vmem:[%s847 + $0x1e8] sm:%s840]
      %1092 = vst [vmem:[%s848 + $0x1e4] sm:%s840] %v1091
      %v1093 = vld [vmem:[%s847 + $0x1e4] sm:%s840]
      %1094 = vst [vmem:[%s848 + $0x1e8] sm:%s840] %v1093
      %v1095 = vld [vmem:[%s847 + $0x1ec] sm:%s840]
      %1096 = vst [vmem:[%s848 + $0x1ec] sm:%s840] %v1095
      %v1097 = vld [vmem:[%s847 + $0x1f0] sm:%s840]
      %1098 = vst [vmem:[%s848 + $0x1f0] sm:%s840] %v1097
      %v1099 = vld [vmem:[%s847 + $0x1f8] sm:%s840]
      %1100 = vst [vmem:[%s848 + $0x1f4] sm:%s840] %v1099
      %v1101 = vld [vmem:[%s847 + $0x1f4] sm:%s840]
      %1102 = vst [vmem:[%s848 + $0x1f8] sm:%s840] %v1101
      %v1103 = vld [vmem:[%s847 + $0x1fc] sm:%s840]
      %1104 = vst [vmem:[%s848 + $0x1fc] sm:%s840] %v1103
      %v1105 = vld [vmem:[%s847 + $0x200] sm:%s840]
      %1106 = vst [vmem:[%s848 + $0x200] sm:%s840] %v1105
      %v1107 = vld [vmem:[%s847 + $0x208] sm:%s840]
      %1108 = vst [vmem:[%s848 + $0x204] sm:%s840] %v1107
      %v1109 = vld [vmem:[%s847 + $0x204] sm:%s840]
      %1110 = vst [vmem:[%s848 + $0x208] sm:%s840] %v1109
      %v1111 = vld [vmem:[%s847 + $0x20c] sm:%s840]
      %1112 = vst [vmem:[%s848 + $0x20c] sm:%s840] %v1111
      %v1113 = vld [vmem:[%s847 + $0x210] sm:%s840]
      %1114 = vst [vmem:[%s848 + $0x210] sm:%s840] %v1113
      %v1115 = vld [vmem:[%s847 + $0x218] sm:%s840]
      %1116 = vst [vmem:[%s848 + $0x214] sm:%s840] %v1115
      %v1117 = vld [vmem:[%s847 + $0x214] sm:%s840]
      %1118 = vst [vmem:[%s848 + $0x218] sm:%s840] %v1117
      %v1119 = vld [vmem:[%s847 + $0x21c] sm:%s840]
      %1120 = vst [vmem:[%s848 + $0x21c] sm:%s840] %v1119
      %v1121 = vld [vmem:[%s847 + $0x220] sm:%s840]
      %1122 = vst [vmem:[%s848 + $0x220] sm:%s840] %v1121
      %v1123 = vld [vmem:[%s847 + $0x228] sm:%s840]
      %1124 = vst [vmem:[%s848 + $0x224] sm:%s840] %v1123
      %v1125 = vld [vmem:[%s847 + $0x224] sm:%s840]
      %1126 = vst [vmem:[%s848 + $0x228] sm:%s840] %v1125
      %v1127 = vld [vmem:[%s847 + $0x22c] sm:%s840]
      %1128 = vst [vmem:[%s848 + $0x22c] sm:%s840] %v1127
      %v1129 = vld [vmem:[%s847 + $0x230] sm:%s840]
      %1130 = vst [vmem:[%s848 + $0x230] sm:%s840] %v1129
      %v1131 = vld [vmem:[%s847 + $0x238] sm:%s840]
      %1132 = vst [vmem:[%s848 + $0x234] sm:%s840] %v1131
      %v1133 = vld [vmem:[%s847 + $0x234] sm:%s840]
      %1134 = vst [vmem:[%s848 + $0x238] sm:%s840] %v1133
      %v1135 = vld [vmem:[%s847 + $0x23c] sm:%s840]
      %1136 = vst [vmem:[%s848 + $0x23c] sm:%s840] %v1135
      %v1137 = vld [vmem:[%s847 + $0x240] sm:%s840]
      %1138 = vst [vmem:[%s848 + $0x240] sm:%s840] %v1137
      %v1139 = vld [vmem:[%s847 + $0x248] sm:%s840]
      %1140 = vst [vmem:[%s848 + $0x244] sm:%s840] %v1139
      %v1141 = vld [vmem:[%s847 + $0x244] sm:%s840]
      %1142 = vst [vmem:[%s848 + $0x248] sm:%s840] %v1141
      %v1143 = vld [vmem:[%s847 + $0x24c] sm:%s840]
      %1144 = vst [vmem:[%s848 + $0x24c] sm:%s840] %v1143
      %v1145 = vld [vmem:[%s847 + $0x250] sm:%s840]
      %1146 = vst [vmem:[%s848 + $0x250] sm:%s840] %v1145
      %v1147 = vld [vmem:[%s847 + $0x258] sm:%s840]
      %1148 = vst [vmem:[%s848 + $0x254] sm:%s840] %v1147
      %v1149 = vld [vmem:[%s847 + $0x254] sm:%s840]
      %1150 = vst [vmem:[%s848 + $0x258] sm:%s840] %v1149
      %v1151 = vld [vmem:[%s847 + $0x25c] sm:%s840]
      %1152 = vst [vmem:[%s848 + $0x25c] sm:%s840] %v1151
      %v1153 = vld [vmem:[%s847 + $0x260] sm:%s840]
      %1154 = vst [vmem:[%s848 + $0x260] sm:%s840] %v1153
      %v1155 = vld [vmem:[%s847 + $0x268] sm:%s840]
      %1156 = vst [vmem:[%s848 + $0x264] sm:%s840] %v1155
      %v1157 = vld [vmem:[%s847 + $0x264] sm:%s840]
      %1158 = vst [vmem:[%s848 + $0x268] sm:%s840] %v1157
      %v1159 = vld [vmem:[%s847 + $0x26c] sm:%s840]
      %1160 = vst [vmem:[%s848 + $0x26c] sm:%s840] %v1159
      %v1161 = vld [vmem:[%s847 + $0x270] sm:%s840]
      %1162 = vst [vmem:[%s848 + $0x270] sm:%s840] %v1161
      %v1163 = vld [vmem:[%s847 + $0x278] sm:%s840]
      %1164 = vst [vmem:[%s848 + $0x274] sm:%s840] %v1163
      %v1165 = vld [vmem:[%s847 + $0x274] sm:%s840]
      %1166 = vst [vmem:[%s848 + $0x278] sm:%s840] %v1165
      %v1167 = vld [vmem:[%s847 + $0x27c] sm:%s840]
      %1168 = vst [vmem:[%s848 + $0x27c] sm:%s840] %v1167
      %v1169 = vld [vmem:[%s847 + $0x280] sm:%s840]
      %1170 = vst [vmem:[%s848 + $0x280] sm:%s840] %v1169
      %v1171 = vld [vmem:[%s847 + $0x288] sm:%s840]
      %1172 = vst [vmem:[%s848 + $0x284] sm:%s840] %v1171
      %v1173 = vld [vmem:[%s847 + $0x284] sm:%s840]
      %1174 = vst [vmem:[%s848 + $0x288] sm:%s840] %v1173
      %v1175 = vld [vmem:[%s847 + $0x28c] sm:%s840]
      %1176 = vst [vmem:[%s848 + $0x28c] sm:%s840] %v1175
      %v1177 = vld [vmem:[%s847 + $0x290] sm:%s840]
      %1178 = vst [vmem:[%s848 + $0x290] sm:%s840] %v1177
      %v1179 = vld [vmem:[%s847 + $0x298] sm:%s840]
      %1180 = vst [vmem:[%s848 + $0x294] sm:%s840] %v1179
      %v1181 = vld [vmem:[%s847 + $0x294] sm:%s840]
      %1182 = vst [vmem:[%s848 + $0x298] sm:%s840] %v1181
      %v1183 = vld [vmem:[%s847 + $0x29c] sm:%s840]
      %1184 = vst [vmem:[%s848 + $0x29c] sm:%s840] %v1183
      %v1185 = vld [vmem:[%s847 + $0x2a0] sm:%s840]
      %1186 = vst [vmem:[%s848 + $0x2a0] sm:%s840] %v1185
      %v1187 = vld [vmem:[%s847 + $0x2a8] sm:%s840]
      %1188 = vst [vmem:[%s848 + $0x2a4] sm:%s840] %v1187
      %v1189 = vld [vmem:[%s847 + $0x2a4] sm:%s840]
      %1190 = vst [vmem:[%s848 + $0x2a8] sm:%s840] %v1189
      %v1191 = vld [vmem:[%s847 + $0x2ac] sm:%s840]
      %1192 = vst [vmem:[%s848 + $0x2ac] sm:%s840] %v1191
      %v1193 = vld [vmem:[%s847 + $0x2b0] sm:%s840]
      %1194 = vst [vmem:[%s848 + $0x2b0] sm:%s840] %v1193
      %v1195 = vld [vmem:[%s847 + $0x2b8] sm:%s840]
      %1196 = vst [vmem:[%s848 + $0x2b4] sm:%s840] %v1195
      %v1197 = vld [vmem:[%s847 + $0x2b4] sm:%s840]
      %1198 = vst [vmem:[%s848 + $0x2b8] sm:%s840] %v1197
      %v1199 = vld [vmem:[%s847 + $0x2bc] sm:%s840]
      %1200 = vst [vmem:[%s848 + $0x2bc] sm:%s840] %v1199
      %v1201 = vld [vmem:[%s847 + $0x2c0] sm:%s840]
      %1202 = vst [vmem:[%s848 + $0x2c0] sm:%s840] %v1201
      %v1203 = vld [vmem:[%s847 + $0x2c8] sm:%s840]
      %1204 = vst [vmem:[%s848 + $0x2c4] sm:%s840] %v1203
      %v1205 = vld [vmem:[%s847 + $0x2c4] sm:%s840]
      %1206 = vst [vmem:[%s848 + $0x2c8] sm:%s840] %v1205
      %v1207 = vld [vmem:[%s847 + $0x2cc] sm:%s840]
      %1208 = vst [vmem:[%s848 + $0x2cc] sm:%s840] %v1207
      %v1209 = vld [vmem:[%s847 + $0x2d0] sm:%s840]
      %1210 = vst [vmem:[%s848 + $0x2d0] sm:%s840] %v1209
      %v1211 = vld [vmem:[%s847 + $0x2d8] sm:%s840]
      %1212 = vst [vmem:[%s848 + $0x2d4] sm:%s840] %v1211
      %v1213 = vld [vmem:[%s847 + $0x2d4] sm:%s840]
      %1214 = vst [vmem:[%s848 + $0x2d8] sm:%s840] %v1213
      %v1215 = vld [vmem:[%s847 + $0x2dc] sm:%s840]
      %1216 = vst [vmem:[%s848 + $0x2dc] sm:%s840] %v1215
      %v1217 = vld [vmem:[%s847 + $0x2e0] sm:%s840]
      %1218 = vst [vmem:[%s848 + $0x2e0] sm:%s840] %v1217
      %v1219 = vld [vmem:[%s847 + $0x2e8] sm:%s840]
      %1220 = vst [vmem:[%s848 + $0x2e4] sm:%s840] %v1219
      %v1221 = vld [vmem:[%s847 + $0x2e4] sm:%s840]
      %1222 = vst [vmem:[%s848 + $0x2e8] sm:%s840] %v1221
      %v1223 = vld [vmem:[%s847 + $0x2ec] sm:%s840]
      %1224 = vst [vmem:[%s848 + $0x2ec] sm:%s840] %v1223
      %v1225 = vld [vmem:[%s847 + $0x2f0] sm:%s840]
      %1226 = vst [vmem:[%s848 + $0x2f0] sm:%s840] %v1225
      %v1227 = vld [vmem:[%s847 + $0x2f8] sm:%s840]
      %1228 = vst [vmem:[%s848 + $0x2f4] sm:%s840] %v1227
      %v1229 = vld [vmem:[%s847 + $0x2f4] sm:%s840]
      %1230 = vst [vmem:[%s848 + $0x2f8] sm:%s840] %v1229
      %v1231 = vld [vmem:[%s847 + $0x2fc] sm:%s840]
      %1232 = vst [vmem:[%s848 + $0x2fc] sm:%s840] %v1231
    $region59: #{capsule_net_forward.1} parent=53 // loop_footer
      %s846 = sadd.s32 1, %s842
    $region60: #{capsule_net_forward.1} parent=53 // loop_footer_branch
      %841 = sbr.rel target = $region56
    $region61: #{capsule_net_forward.1} parent=53 // loop_exit
      _
  $region54: #{capsule_net_forward.1} parent=0 // pred_fallthru
    _
  // Predicated region
  $region80: #{capsule_net_forward.1} parent=0 // pred_check
    _
  $region81: #{capsule_net_forward.1} parent=0 // pred_check_branch
    %1646 = sbr.rel (0) target = $region83
  $region82: #{capsule_net_forward.1} parent=0 // pred_region
    %1647 = vsyncadd %s831, 12288
  $region83: #{capsule_net_forward.1} parent=0 // pred_fallthru
    _
  %s1648 = scalar_lea.sflag [#allocation5], 2
  %p1650 = scmp.lt.u32.totalorder 1280, 8
  %p1651 = pneg %p1650
  // Predicated region
  $region84: #{capsule_net_forward.1} parent=0 // pred_check
    _
  $region85: #{capsule_net_forward.1} parent=0 // pred_check_branch
    %1653 = sbr.rel (%p1650) target = $region87
  $region86: #{capsule_net_forward.1} parent=0 // pred_region
    %s1668 = sand.u32 1280, 7
    %p1669 = scmp.eq.s32.totalorder %s1668, 0
    // Predicated region
    $region99: #{capsule_net_forward.1} parent=86 // pred_check
      %p1670 = pneg %p1669
    $region100: #{capsule_net_forward.1} parent=86 // pred_check_branch
      %1672 = sbr.rel (%p1670) target = $region102
    $region101: #{capsule_net_forward.1} parent=86 // pred_region
      loop: start=0, step=1, limit=1
      $region103: #{capsule_net_forward.1} parent=101 // loop_pre_header
        _
      $region104: #{capsule_net_forward.1} parent=101 // loop_header
        %s1674 = sphi 0, %s1678
        %p1675 = scmp.ge.s32.totalorder %s1674, 1
        %s1679 = sphi %s4, %s4
        %s1680 = sphi [#allocation4], [#allocation4]
      $region105: #{capsule_net_forward.1} parent=101 // loop_header_branch
        %1677 = sbr.rel (%p1675) target = $region109
      $region106: #{capsule_net_forward.1} parent=101 // loop_body
        %v1681 = vld [vmem:[%s1679] sm:$0xff]
        %1682 = vst [vmem:[%s1680] sm:$0xff] %v1681
        %v1683 = vld [vmem:[%s1679 + $0x8] sm:$0xff]
        %1684 = vst [vmem:[%s1680 + $0x8] sm:$0xff] %v1683
        %v1685 = vld [vmem:[%s1679 + $0x10] sm:$0xff]
        %1686 = vst [vmem:[%s1680 + $0x10] sm:$0xff] %v1685
        %v1687 = vld [vmem:[%s1679 + $0x18] sm:$0xff]
        %1688 = vst [vmem:[%s1680 + $0x18] sm:$0xff] %v1687
        %v1689 = vld [vmem:[%s1679 + $0x20] sm:$0xff]
        %1690 = vst [vmem:[%s1680 + $0x20] sm:$0xff] %v1689
        %v1691 = vld [vmem:[%s1679 + $0x28] sm:$0xff]
        %1692 = vst [vmem:[%s1680 + $0x28] sm:$0xff] %v1691
        %v1693 = vld [vmem:[%s1679 + $0x30] sm:$0xff]
        %1694 = vst [vmem:[%s1680 + $0x30] sm:$0xff] %v1693
        %v1695 = vld [vmem:[%s1679 + $0x38] sm:$0xff]
        %1696 = vst [vmem:[%s1680 + $0x38] sm:$0xff] %v1695
        %v1697 = vld [vmem:[%s1679 + $0x40] sm:$0xff]
        %1698 = vst [vmem:[%s1680 + $0x40] sm:$0xff] %v1697
        %v1699 = vld [vmem:[%s1679 + $0x48] sm:$0xff]
        %1700 = vst [vmem:[%s1680 + $0x48] sm:$0xff] %v1699
        %v1701 = vld [vmem:[%s1679 + $0x50] sm:$0xff]
        %1702 = vst [vmem:[%s1680 + $0x50] sm:$0xff] %v1701
        %v1703 = vld [vmem:[%s1679 + $0x58] sm:$0xff]
        %1704 = vst [vmem:[%s1680 + $0x58] sm:$0xff] %v1703
        %v1705 = vld [vmem:[%s1679 + $0x60] sm:$0xff]
        %1706 = vst [vmem:[%s1680 + $0x60] sm:$0xff] %v1705
        %v1707 = vld [vmem:[%s1679 + $0x68] sm:$0xff]
        %1708 = vst [vmem:[%s1680 + $0x68] sm:$0xff] %v1707
        %v1709 = vld [vmem:[%s1679 + $0x70] sm:$0xff]
        %1710 = vst [vmem:[%s1680 + $0x70] sm:$0xff] %v1709
        %v1711 = vld [vmem:[%s1679 + $0x78] sm:$0xff]
        %1712 = vst [vmem:[%s1680 + $0x78] sm:$0xff] %v1711
        %v1713 = vld [vmem:[%s1679 + $0x80] sm:$0xff]
        %1714 = vst [vmem:[%s1680 + $0x80] sm:$0xff] %v1713
        %v1715 = vld [vmem:[%s1679 + $0x88] sm:$0xff]
        %1716 = vst [vmem:[%s1680 + $0x88] sm:$0xff] %v1715
        %v1717 = vld [vmem:[%s1679 + $0x90] sm:$0xff]
        %1718 = vst [vmem:[%s1680 + $0x90] sm:$0xff] %v1717
        %v1719 = vld [vmem:[%s1679 + $0x98] sm:$0xff]
        %1720 = vst [vmem:[%s1680 + $0x98] sm:$0xff] %v1719
        %v1721 = vld [vmem:[%s1679 + $0xa0] sm:$0xff]
        %1722 = vst [vmem:[%s1680 + $0xa0] sm:$0xff] %v1721
        %v1723 = vld [vmem:[%s1679 + $0xa8] sm:$0xff]
        %1724 = vst [vmem:[%s1680 + $0xa8] sm:$0xff] %v1723
        %v1725 = vld [vmem:[%s1679 + $0xb0] sm:$0xff]
        %1726 = vst [vmem:[%s1680 + $0xb0] sm:$0xff] %v1725
        %v1727 = vld [vmem:[%s1679 + $0xb8] sm:$0xff]
        %1728 = vst [vmem:[%s1680 + $0xb8] sm:$0xff] %v1727
        %v1729 = vld [vmem:[%s1679 + $0xc0] sm:$0xff]
        %1730 = vst [vmem:[%s1680 + $0xc0] sm:$0xff] %v1729
        %v1731 = vld [vmem:[%s1679 + $0xc8] sm:$0xff]
        %1732 = vst [vmem:[%s1680 + $0xc8] sm:$0xff] %v1731
        %v1733 = vld [vmem:[%s1679 + $0xd0] sm:$0xff]
        %1734 = vst [vmem:[%s1680 + $0xd0] sm:$0xff] %v1733
        %v1735 = vld [vmem:[%s1679 + $0xd8] sm:$0xff]
        %1736 = vst [vmem:[%s1680 + $0xd8] sm:$0xff] %v1735
        %v1737 = vld [vmem:[%s1679 + $0xe0] sm:$0xff]
        %1738 = vst [vmem:[%s1680 + $0xe0] sm:$0xff] %v1737
        %v1739 = vld [vmem:[%s1679 + $0xe8] sm:$0xff]
        %1740 = vst [vmem:[%s1680 + $0xe8] sm:$0xff] %v1739
        %v1741 = vld [vmem:[%s1679 + $0xf0] sm:$0xff]
        %1742 = vst [vmem:[%s1680 + $0xf0] sm:$0xff] %v1741
        %v1743 = vld [vmem:[%s1679 + $0xf8] sm:$0xff]
        %1744 = vst [vmem:[%s1680 + $0xf8] sm:$0xff] %v1743
        %v1745 = vld [vmem:[%s1679 + $0x100] sm:$0xff]
        %1746 = vst [vmem:[%s1680 + $0x100] sm:$0xff] %v1745
        %v1747 = vld [vmem:[%s1679 + $0x108] sm:$0xff]
        %1748 = vst [vmem:[%s1680 + $0x108] sm:$0xff] %v1747
        %v1749 = vld [vmem:[%s1679 + $0x110] sm:$0xff]
        %1750 = vst [vmem:[%s1680 + $0x110] sm:$0xff] %v1749
        %v1751 = vld [vmem:[%s1679 + $0x118] sm:$0xff]
        %1752 = vst [vmem:[%s1680 + $0x118] sm:$0xff] %v1751
        %v1753 = vld [vmem:[%s1679 + $0x120] sm:$0xff]
        %1754 = vst [vmem:[%s1680 + $0x120] sm:$0xff] %v1753
        %v1755 = vld [vmem:[%s1679 + $0x128] sm:$0xff]
        %1756 = vst [vmem:[%s1680 + $0x128] sm:$0xff] %v1755
        %v1757 = vld [vmem:[%s1679 + $0x130] sm:$0xff]
        %1758 = vst [vmem:[%s1680 + $0x130] sm:$0xff] %v1757
        %v1759 = vld [vmem:[%s1679 + $0x138] sm:$0xff]
        %1760 = vst [vmem:[%s1680 + $0x138] sm:$0xff] %v1759
        %v1761 = vld [vmem:[%s1679 + $0x140] sm:$0xff]
        %1762 = vst [vmem:[%s1680 + $0x140] sm:$0xff] %v1761
        %v1763 = vld [vmem:[%s1679 + $0x148] sm:$0xff]
        %1764 = vst [vmem:[%s1680 + $0x148] sm:$0xff] %v1763
        %v1765 = vld [vmem:[%s1679 + $0x150] sm:$0xff]
        %1766 = vst [vmem:[%s1680 + $0x150] sm:$0xff] %v1765
        %v1767 = vld [vmem:[%s1679 + $0x158] sm:$0xff]
        %1768 = vst [vmem:[%s1680 + $0x158] sm:$0xff] %v1767
        %v1769 = vld [vmem:[%s1679 + $0x160] sm:$0xff]
        %1770 = vst [vmem:[%s1680 + $0x160] sm:$0xff] %v1769
        %v1771 = vld [vmem:[%s1679 + $0x168] sm:$0xff]
        %1772 = vst [vmem:[%s1680 + $0x168] sm:$0xff] %v1771
        %v1773 = vld [vmem:[%s1679 + $0x170] sm:$0xff]
        %1774 = vst [vmem:[%s1680 + $0x170] sm:$0xff] %v1773
        %v1775 = vld [vmem:[%s1679 + $0x178] sm:$0xff]
        %1776 = vst [vmem:[%s1680 + $0x178] sm:$0xff] %v1775
        %v1777 = vld [vmem:[%s1679 + $0x180] sm:$0xff]
        %1778 = vst [vmem:[%s1680 + $0x180] sm:$0xff] %v1777
        %v1779 = vld [vmem:[%s1679 + $0x188] sm:$0xff]
        %1780 = vst [vmem:[%s1680 + $0x188] sm:$0xff] %v1779
        %v1781 = vld [vmem:[%s1679 + $0x190] sm:$0xff]
        %1782 = vst [vmem:[%s1680 + $0x190] sm:$0xff] %v1781
        %v1783 = vld [vmem:[%s1679 + $0x198] sm:$0xff]
        %1784 = vst [vmem:[%s1680 + $0x198] sm:$0xff] %v1783
        %v1785 = vld [vmem:[%s1679 + $0x1a0] sm:$0xff]
        %1786 = vst [vmem:[%s1680 + $0x1a0] sm:$0xff] %v1785
        %v1787 = vld [vmem:[%s1679 + $0x1a8] sm:$0xff]
        %1788 = vst [vmem:[%s1680 + $0x1a8] sm:$0xff] %v1787
        %v1789 = vld [vmem:[%s1679 + $0x1b0] sm:$0xff]
        %1790 = vst [vmem:[%s1680 + $0x1b0] sm:$0xff] %v1789
        %v1791 = vld [vmem:[%s1679 + $0x1b8] sm:$0xff]
        %1792 = vst [vmem:[%s1680 + $0x1b8] sm:$0xff] %v1791
        %v1793 = vld [vmem:[%s1679 + $0x1c0] sm:$0xff]
        %1794 = vst [vmem:[%s1680 + $0x1c0] sm:$0xff] %v1793
        %v1795 = vld [vmem:[%s1679 + $0x1c8] sm:$0xff]
        %1796 = vst [vmem:[%s1680 + $0x1c8] sm:$0xff] %v1795
        %v1797 = vld [vmem:[%s1679 + $0x1d0] sm:$0xff]
        %1798 = vst [vmem:[%s1680 + $0x1d0] sm:$0xff] %v1797
        %v1799 = vld [vmem:[%s1679 + $0x1d8] sm:$0xff]
        %1800 = vst [vmem:[%s1680 + $0x1d8] sm:$0xff] %v1799
        %v1801 = vld [vmem:[%s1679 + $0x1e0] sm:$0xff]
        %1802 = vst [vmem:[%s1680 + $0x1e0] sm:$0xff] %v1801
        %v1803 = vld [vmem:[%s1679 + $0x1e8] sm:$0xff]
        %1804 = vst [vmem:[%s1680 + $0x1e8] sm:$0xff] %v1803
        %v1805 = vld [vmem:[%s1679 + $0x1f0] sm:$0xff]
        %1806 = vst [vmem:[%s1680 + $0x1f0] sm:$0xff] %v1805
        %v1807 = vld [vmem:[%s1679 + $0x1f8] sm:$0xff]
        %1808 = vst [vmem:[%s1680 + $0x1f8] sm:$0xff] %v1807
        %v1809 = vld [vmem:[%s1679 + $0x200] sm:$0xff]
        %1810 = vst [vmem:[%s1680 + $0x200] sm:$0xff] %v1809
        %v1811 = vld [vmem:[%s1679 + $0x208] sm:$0xff]
        %1812 = vst [vmem:[%s1680 + $0x208] sm:$0xff] %v1811
        %v1813 = vld [vmem:[%s1679 + $0x210] sm:$0xff]
        %1814 = vst [vmem:[%s1680 + $0x210] sm:$0xff] %v1813
        %v1815 = vld [vmem:[%s1679 + $0x218] sm:$0xff]
        %1816 = vst [vmem:[%s1680 + $0x218] sm:$0xff] %v1815
        %v1817 = vld [vmem:[%s1679 + $0x220] sm:$0xff]
        %1818 = vst [vmem:[%s1680 + $0x220] sm:$0xff] %v1817
        %v1819 = vld [vmem:[%s1679 + $0x228] sm:$0xff]
        %1820 = vst [vmem:[%s1680 + $0x228] sm:$0xff] %v1819
        %v1821 = vld [vmem:[%s1679 + $0x230] sm:$0xff]
        %1822 = vst [vmem:[%s1680 + $0x230] sm:$0xff] %v1821
        %v1823 = vld [vmem:[%s1679 + $0x238] sm:$0xff]
        %1824 = vst [vmem:[%s1680 + $0x238] sm:$0xff] %v1823
        %v1825 = vld [vmem:[%s1679 + $0x240] sm:$0xff]
        %1826 = vst [vmem:[%s1680 + $0x240] sm:$0xff] %v1825
        %v1827 = vld [vmem:[%s1679 + $0x248] sm:$0xff]
        %1828 = vst [vmem:[%s1680 + $0x248] sm:$0xff] %v1827
        %v1829 = vld [vmem:[%s1679 + $0x250] sm:$0xff]
        %1830 = vst [vmem:[%s1680 + $0x250] sm:$0xff] %v1829
        %v1831 = vld [vmem:[%s1679 + $0x258] sm:$0xff]
        %1832 = vst [vmem:[%s1680 + $0x258] sm:$0xff] %v1831
        %v1833 = vld [vmem:[%s1679 + $0x260] sm:$0xff]
        %1834 = vst [vmem:[%s1680 + $0x260] sm:$0xff] %v1833
        %v1835 = vld [vmem:[%s1679 + $0x268] sm:$0xff]
        %1836 = vst [vmem:[%s1680 + $0x268] sm:$0xff] %v1835
        %v1837 = vld [vmem:[%s1679 + $0x270] sm:$0xff]
        %1838 = vst [vmem:[%s1680 + $0x270] sm:$0xff] %v1837
        %v1839 = vld [vmem:[%s1679 + $0x278] sm:$0xff]
        %1840 = vst [vmem:[%s1680 + $0x278] sm:$0xff] %v1839
        %v1841 = vld [vmem:[%s1679 + $0x280] sm:$0xff]
        %1842 = vst [vmem:[%s1680 + $0x280] sm:$0xff] %v1841
        %v1843 = vld [vmem:[%s1679 + $0x288] sm:$0xff]
        %1844 = vst [vmem:[%s1680 + $0x288] sm:$0xff] %v1843
        %v1845 = vld [vmem:[%s1679 + $0x290] sm:$0xff]
        %1846 = vst [vmem:[%s1680 + $0x290] sm:$0xff] %v1845
        %v1847 = vld [vmem:[%s1679 + $0x298] sm:$0xff]
        %1848 = vst [vmem:[%s1680 + $0x298] sm:$0xff] %v1847
        %v1849 = vld [vmem:[%s1679 + $0x2a0] sm:$0xff]
        %1850 = vst [vmem:[%s1680 + $0x2a0] sm:$0xff] %v1849
        %v1851 = vld [vmem:[%s1679 + $0x2a8] sm:$0xff]
        %1852 = vst [vmem:[%s1680 + $0x2a8] sm:$0xff] %v1851
        %v1853 = vld [vmem:[%s1679 + $0x2b0] sm:$0xff]
        %1854 = vst [vmem:[%s1680 + $0x2b0] sm:$0xff] %v1853
        %v1855 = vld [vmem:[%s1679 + $0x2b8] sm:$0xff]
        %1856 = vst [vmem:[%s1680 + $0x2b8] sm:$0xff] %v1855
        %v1857 = vld [vmem:[%s1679 + $0x2c0] sm:$0xff]
        %1858 = vst [vmem:[%s1680 + $0x2c0] sm:$0xff] %v1857
        %v1859 = vld [vmem:[%s1679 + $0x2c8] sm:$0xff]
        %1860 = vst [vmem:[%s1680 + $0x2c8] sm:$0xff] %v1859
        %v1861 = vld [vmem:[%s1679 + $0x2d0] sm:$0xff]
        %1862 = vst [vmem:[%s1680 + $0x2d0] sm:$0xff] %v1861
        %v1863 = vld [vmem:[%s1679 + $0x2d8] sm:$0xff]
        %1864 = vst [vmem:[%s1680 + $0x2d8] sm:$0xff] %v1863
        %v1865 = vld [vmem:[%s1679 + $0x2e0] sm:$0xff]
        %1866 = vst [vmem:[%s1680 + $0x2e0] sm:$0xff] %v1865
        %v1867 = vld [vmem:[%s1679 + $0x2e8] sm:$0xff]
        %1868 = vst [vmem:[%s1680 + $0x2e8] sm:$0xff] %v1867
        %v1869 = vld [vmem:[%s1679 + $0x2f0] sm:$0xff]
        %1870 = vst [vmem:[%s1680 + $0x2f0] sm:$0xff] %v1869
        %v1871 = vld [vmem:[%s1679 + $0x2f8] sm:$0xff]
        %1872 = vst [vmem:[%s1680 + $0x2f8] sm:$0xff] %v1871
        %v1873 = vld [vmem:[%s1679 + $0x300] sm:$0xff]
        %1874 = vst [vmem:[%s1680 + $0x300] sm:$0xff] %v1873
        %v1875 = vld [vmem:[%s1679 + $0x308] sm:$0xff]
        %1876 = vst [vmem:[%s1680 + $0x308] sm:$0xff] %v1875
        %v1877 = vld [vmem:[%s1679 + $0x310] sm:$0xff]
        %1878 = vst [vmem:[%s1680 + $0x310] sm:$0xff] %v1877
        %v1879 = vld [vmem:[%s1679 + $0x318] sm:$0xff]
        %1880 = vst [vmem:[%s1680 + $0x318] sm:$0xff] %v1879
        %v1881 = vld [vmem:[%s1679 + $0x320] sm:$0xff]
        %1882 = vst [vmem:[%s1680 + $0x320] sm:$0xff] %v1881
        %v1883 = vld [vmem:[%s1679 + $0x328] sm:$0xff]
        %1884 = vst [vmem:[%s1680 + $0x328] sm:$0xff] %v1883
        %v1885 = vld [vmem:[%s1679 + $0x330] sm:$0xff]
        %1886 = vst [vmem:[%s1680 + $0x330] sm:$0xff] %v1885
        %v1887 = vld [vmem:[%s1679 + $0x338] sm:$0xff]
        %1888 = vst [vmem:[%s1680 + $0x338] sm:$0xff] %v1887
        %v1889 = vld [vmem:[%s1679 + $0x340] sm:$0xff]
        %1890 = vst [vmem:[%s1680 + $0x340] sm:$0xff] %v1889
        %v1891 = vld [vmem:[%s1679 + $0x348] sm:$0xff]
        %1892 = vst [vmem:[%s1680 + $0x348] sm:$0xff] %v1891
        %v1893 = vld [vmem:[%s1679 + $0x350] sm:$0xff]
        %1894 = vst [vmem:[%s1680 + $0x350] sm:$0xff] %v1893
        %v1895 = vld [vmem:[%s1679 + $0x358] sm:$0xff]
        %1896 = vst [vmem:[%s1680 + $0x358] sm:$0xff] %v1895
        %v1897 = vld [vmem:[%s1679 + $0x360] sm:$0xff]
        %1898 = vst [vmem:[%s1680 + $0x360] sm:$0xff] %v1897
        %v1899 = vld [vmem:[%s1679 + $0x368] sm:$0xff]
        %1900 = vst [vmem:[%s1680 + $0x368] sm:$0xff] %v1899
        %v1901 = vld [vmem:[%s1679 + $0x370] sm:$0xff]
        %1902 = vst [vmem:[%s1680 + $0x370] sm:$0xff] %v1901
        %v1903 = vld [vmem:[%s1679 + $0x378] sm:$0xff]
        %1904 = vst [vmem:[%s1680 + $0x378] sm:$0xff] %v1903
        %v1905 = vld [vmem:[%s1679 + $0x380] sm:$0xff]
        %1906 = vst [vmem:[%s1680 + $0x380] sm:$0xff] %v1905
        %v1907 = vld [vmem:[%s1679 + $0x388] sm:$0xff]
        %1908 = vst [vmem:[%s1680 + $0x388] sm:$0xff] %v1907
        %v1909 = vld [vmem:[%s1679 + $0x390] sm:$0xff]
        %1910 = vst [vmem:[%s1680 + $0x390] sm:$0xff] %v1909
        %v1911 = vld [vmem:[%s1679 + $0x398] sm:$0xff]
        %1912 = vst [vmem:[%s1680 + $0x398] sm:$0xff] %v1911
        %v1913 = vld [vmem:[%s1679 + $0x3a0] sm:$0xff]
        %1914 = vst [vmem:[%s1680 + $0x3a0] sm:$0xff] %v1913
        %v1915 = vld [vmem:[%s1679 + $0x3a8] sm:$0xff]
        %1916 = vst [vmem:[%s1680 + $0x3a8] sm:$0xff] %v1915
        %v1917 = vld [vmem:[%s1679 + $0x3b0] sm:$0xff]
        %1918 = vst [vmem:[%s1680 + $0x3b0] sm:$0xff] %v1917
        %v1919 = vld [vmem:[%s1679 + $0x3b8] sm:$0xff]
        %1920 = vst [vmem:[%s1680 + $0x3b8] sm:$0xff] %v1919
        %v1921 = vld [vmem:[%s1679 + $0x3c0] sm:$0xff]
        %1922 = vst [vmem:[%s1680 + $0x3c0] sm:$0xff] %v1921
        %v1923 = vld [vmem:[%s1679 + $0x3c8] sm:$0xff]
        %1924 = vst [vmem:[%s1680 + $0x3c8] sm:$0xff] %v1923
        %v1925 = vld [vmem:[%s1679 + $0x3d0] sm:$0xff]
        %1926 = vst [vmem:[%s1680 + $0x3d0] sm:$0xff] %v1925
        %v1927 = vld [vmem:[%s1679 + $0x3d8] sm:$0xff]
        %1928 = vst [vmem:[%s1680 + $0x3d8] sm:$0xff] %v1927
        %v1929 = vld [vmem:[%s1679 + $0x3e0] sm:$0xff]
        %1930 = vst [vmem:[%s1680 + $0x3e0] sm:$0xff] %v1929
        %v1931 = vld [vmem:[%s1679 + $0x3e8] sm:$0xff]
        %1932 = vst [vmem:[%s1680 + $0x3e8] sm:$0xff] %v1931
        %v1933 = vld [vmem:[%s1679 + $0x3f0] sm:$0xff]
        %1934 = vst [vmem:[%s1680 + $0x3f0] sm:$0xff] %v1933
        %v1935 = vld [vmem:[%s1679 + $0x3f8] sm:$0xff]
        %1936 = vst [vmem:[%s1680 + $0x3f8] sm:$0xff] %v1935
        %v1937 = vld [vmem:[%s1679 + $0x400] sm:$0xff]
        %1938 = vst [vmem:[%s1680 + $0x400] sm:$0xff] %v1937
        %v1939 = vld [vmem:[%s1679 + $0x408] sm:$0xff]
        %1940 = vst [vmem:[%s1680 + $0x408] sm:$0xff] %v1939
        %v1941 = vld [vmem:[%s1679 + $0x410] sm:$0xff]
        %1942 = vst [vmem:[%s1680 + $0x410] sm:$0xff] %v1941
        %v1943 = vld [vmem:[%s1679 + $0x418] sm:$0xff]
        %1944 = vst [vmem:[%s1680 + $0x418] sm:$0xff] %v1943
        %v1945 = vld [vmem:[%s1679 + $0x420] sm:$0xff]
        %1946 = vst [vmem:[%s1680 + $0x420] sm:$0xff] %v1945
        %v1947 = vld [vmem:[%s1679 + $0x428] sm:$0xff]
        %1948 = vst [vmem:[%s1680 + $0x428] sm:$0xff] %v1947
        %v1949 = vld [vmem:[%s1679 + $0x430] sm:$0xff]
        %1950 = vst [vmem:[%s1680 + $0x430] sm:$0xff] %v1949
        %v1951 = vld [vmem:[%s1679 + $0x438] sm:$0xff]
        %1952 = vst [vmem:[%s1680 + $0x438] sm:$0xff] %v1951
        %v1953 = vld [vmem:[%s1679 + $0x440] sm:$0xff]
        %1954 = vst [vmem:[%s1680 + $0x440] sm:$0xff] %v1953
        %v1955 = vld [vmem:[%s1679 + $0x448] sm:$0xff]
        %1956 = vst [vmem:[%s1680 + $0x448] sm:$0xff] %v1955
        %v1957 = vld [vmem:[%s1679 + $0x450] sm:$0xff]
        %1958 = vst [vmem:[%s1680 + $0x450] sm:$0xff] %v1957
        %v1959 = vld [vmem:[%s1679 + $0x458] sm:$0xff]
        %1960 = vst [vmem:[%s1680 + $0x458] sm:$0xff] %v1959
        %v1961 = vld [vmem:[%s1679 + $0x460] sm:$0xff]
        %1962 = vst [vmem:[%s1680 + $0x460] sm:$0xff] %v1961
        %v1963 = vld [vmem:[%s1679 + $0x468] sm:$0xff]
        %1964 = vst [vmem:[%s1680 + $0x468] sm:$0xff] %v1963
        %v1965 = vld [vmem:[%s1679 + $0x470] sm:$0xff]
        %1966 = vst [vmem:[%s1680 + $0x470] sm:$0xff] %v1965
        %v1967 = vld [vmem:[%s1679 + $0x478] sm:$0xff]
        %1968 = vst [vmem:[%s1680 + $0x478] sm:$0xff] %v1967
        %v1969 = vld [vmem:[%s1679 + $0x480] sm:$0xff]
        %1970 = vst [vmem:[%s1680 + $0x480] sm:$0xff] %v1969
        %v1971 = vld [vmem:[%s1679 + $0x488] sm:$0xff]
        %1972 = vst [vmem:[%s1680 + $0x488] sm:$0xff] %v1971
        %v1973 = vld [vmem:[%s1679 + $0x490] sm:$0xff]
        %1974 = vst [vmem:[%s1680 + $0x490] sm:$0xff] %v1973
        %v1975 = vld [vmem:[%s1679 + $0x498] sm:$0xff]
        %1976 = vst [vmem:[%s1680 + $0x498] sm:$0xff] %v1975
        %v1977 = vld [vmem:[%s1679 + $0x4a0] sm:$0xff]
        %1978 = vst [vmem:[%s1680 + $0x4a0] sm:$0xff] %v1977
        %v1979 = vld [vmem:[%s1679 + $0x4a8] sm:$0xff]
        %1980 = vst [vmem:[%s1680 + $0x4a8] sm:$0xff] %v1979
        %v1981 = vld [vmem:[%s1679 + $0x4b0] sm:$0xff]
        %1982 = vst [vmem:[%s1680 + $0x4b0] sm:$0xff] %v1981
        %v1983 = vld [vmem:[%s1679 + $0x4b8] sm:$0xff]
        %1984 = vst [vmem:[%s1680 + $0x4b8] sm:$0xff] %v1983
        %v1985 = vld [vmem:[%s1679 + $0x4c0] sm:$0xff]
        %1986 = vst [vmem:[%s1680 + $0x4c0] sm:$0xff] %v1985
        %v1987 = vld [vmem:[%s1679 + $0x4c8] sm:$0xff]
        %1988 = vst [vmem:[%s1680 + $0x4c8] sm:$0xff] %v1987
        %v1989 = vld [vmem:[%s1679 + $0x4d0] sm:$0xff]
        %1990 = vst [vmem:[%s1680 + $0x4d0] sm:$0xff] %v1989
        %v1991 = vld [vmem:[%s1679 + $0x4d8] sm:$0xff]
        %1992 = vst [vmem:[%s1680 + $0x4d8] sm:$0xff] %v1991
        %v1993 = vld [vmem:[%s1679 + $0x4e0] sm:$0xff]
        %1994 = vst [vmem:[%s1680 + $0x4e0] sm:$0xff] %v1993
        %v1995 = vld [vmem:[%s1679 + $0x4e8] sm:$0xff]
        %1996 = vst [vmem:[%s1680 + $0x4e8] sm:$0xff] %v1995
        %v1997 = vld [vmem:[%s1679 + $0x4f0] sm:$0xff]
        %1998 = vst [vmem:[%s1680 + $0x4f0] sm:$0xff] %v1997
        %v1999 = vld [vmem:[%s1679 + $0x4f8] sm:$0xff]
        %2000 = vst [vmem:[%s1680 + $0x4f8] sm:$0xff] %v1999
      $region107: #{capsule_net_forward.1} parent=101 // loop_footer
        %s1678 = sadd.s32 1, %s1674
      $region108: #{capsule_net_forward.1} parent=101 // loop_footer_branch
        %1673 = sbr.rel target = $region104
      $region109: #{capsule_net_forward.1} parent=101 // loop_exit
        _
    $region102: #{capsule_net_forward.1} parent=86 // pred_fallthru
      _
    %p2001 = pneg %p1669
    // Predicated region
    $region110: #{capsule_net_forward.1} parent=86 // pred_check
      _
    $region111: #{capsule_net_forward.1} parent=86 // pred_check_branch
      %2003 = sbr.rel (%p1669) target = $region113
    $region112: #{capsule_net_forward.1} parent=86 // pred_region
      %s2004 = sand.u32 1280, 7
    $region113: #{capsule_net_forward.1} parent=86 // pred_fallthru
      _
  $region87: #{capsule_net_forward.1} parent=0 // pred_fallthru
    _
  // Predicated region
  $region88: #{capsule_net_forward.1} parent=0 // pred_check
    %p1654 = pneg %p1650
  $region89: #{capsule_net_forward.1} parent=0 // pred_check_branch
    %1656 = sbr.rel (%p1654) target = $region91
  $region90: #{capsule_net_forward.1} parent=0 // pred_region
    %s1657 = sshllo.u32 0, 1280
    loop: start=0, step=1, limit=1
    $region92: #{capsule_net_forward.1} parent=90 // loop_pre_header
      _
    $region93: #{capsule_net_forward.1} parent=90 // loop_header
      %s1659 = sphi 0, %s1663
      %p1660 = scmp.ge.s32.totalorder %s1659, 1
      %s1664 = sphi %s4, %s4
      %s1665 = sphi [#allocation4], [#allocation4]
    $region94: #{capsule_net_forward.1} parent=90 // loop_header_branch
      %1662 = sbr.rel (%p1660) target = $region98
    $region95: #{capsule_net_forward.1} parent=90 // loop_body
      %v1666 = vld [vmem:[%s1664] sm:%s1657]
      %1667 = vst [vmem:[%s1665] sm:%s1657] %v1666
    $region96: #{capsule_net_forward.1} parent=90 // loop_footer
      %s1663 = sadd.s32 1, %s1659
    $region97: #{capsule_net_forward.1} parent=90 // loop_footer_branch
      %1658 = sbr.rel target = $region93
    $region98: #{capsule_net_forward.1} parent=90 // loop_exit
      _
  $region91: #{capsule_net_forward.1} parent=0 // pred_fallthru
    _
  // Predicated region
  $region114: #{capsule_net_forward.1} parent=0 // pred_check
    _
  $region115: #{capsule_net_forward.1} parent=0 // pred_check_branch
    %2007 = sbr.rel (0) target = $region117
  $region116: #{capsule_net_forward.1} parent=0 // pred_region
    %2008 = vsyncadd %s1648, 20480
  $region117: #{capsule_net_forward.1} parent=0 // pred_fallthru
    _
  %v2009 = vld [vmem:[%s1] sm:$0xff]
  %v2010 = vld [vmem:[%s1 + $0x8] sm:$0xff]
  %v2011 = vlaneseq
  %v2012 = vshrl.u32 %v2011, 7
  %v2013 = vadd.s32 %v2012, 8
  %v2014 = vadd.s32 %v2012, 16
  %v2015 = vadd.s32 %v2012, 24
  %vm2016 = vcmp.lt.s32.totalorder %v2012, 28
  %vm2017 = vcmp.lt.s32.totalorder %v2013, 28
  %vm2018 = vcmp.lt.s32.totalorder %v2014, 28
  %vm2019 = vcmp.lt.s32.totalorder %v2015, 28
  %v2020 = vsel %vm2016, 1, 0
  %v2021 = vsel %vm2017, 1, 0
  %v2022 = vsel %vm2018, 1, 0
  %v2023 = vsel %vm2019, 1, 0
  %v2024 = vcvt.s32.f32 %v2020
  %v2025 = vcvt.s32.f32 %v2021
  %v2026 = vcvt.s32.f32 %v2022
  %v2027 = vcvt.s32.f32 %v2023
  %vm2028 = vcmp.lt.s32.totalorder %v2012, 24
  %vm2029 = vcmp.lt.s32.totalorder %v2013, 24
  %vm2030 = vcmp.lt.s32.totalorder %v2014, 24
  %vm2031 = vcmp.lt.s32.totalorder %v2015, 24
  %v2032 = vsel %vm2028, 1, 0
  %v2033 = vsel %vm2029, 1, 0
  %v2034 = vsel %vm2030, 1, 0
  %v2035 = vsel %vm2031, 1, 0
  %v2036 = vcvt.s32.f32 %v2032
  %v2037 = vcvt.s32.f32 %v2033
  %v2038 = vcvt.s32.f32 %v2034
  %v2039 = vcvt.s32.f32 %v2035
  %v2040 = vld [vmem:[%s0] sm:$0xff]
  %v2041 = vld [vmem:[%s0 + $0x8] sm:$0xff]
  %v2042 = vld [vmem:[%s0 + $0x10] sm:$0xff]
  %v2043 = vld [vmem:[%s0 + $0x18] sm:$0xff]
  %v2044 = vld [vmem:[%s0 + $0x20] sm:$0xff]
  %v2045 = vld [vmem:[%s0 + $0x28] sm:$0xff]
  %v2046 = vld [vmem:[%s0 + $0x30] sm:$0xff]
  %v2047 = vld [vmem:[%s0 + $0x38] sm:$0xff]
  %v2048 = vld [vmem:[%s0 + $0x40] sm:$0xff]
  %v2049 = vld [vmem:[%s0 + $0x48] sm:$0xff]
  %v2050 = vld [vmem:[%s0 + $0x50] sm:$0xff]
  %v2051 = vld [vmem:[%s0 + $0x58] sm:$0xff]
  %v2052 = vld [vmem:[%s0 + $0x60] sm:$0xff]
  %v2053 = vld [vmem:[%s0 + $0x68] sm:$0xff]
  %v2054 = vld [vmem:[%s0 + $0x70] sm:$0xff]
  %v2055 = vld [vmem:[%s0 + $0x78] sm:$0xff]
  %v2056 = vld [vmem:[%s0 + $0x80] sm:$0xff]
  %v2057 = vld [vmem:[%s0 + $0x88] sm:$0xff]
  %v2058 = vld [vmem:[%s0 + $0x90] sm:$0xff]
  %v2059 = vld [vmem:[%s0 + $0x98] sm:$0xff]
  %v2060 = vld [vmem:[%s0 + $0xa0] sm:$0xff]
  %v2061 = vld [vmem:[%s0 + $0xa8] sm:$0xff]
  %v2062 = vld [vmem:[%s0 + $0xb0] sm:$0xff]
  %v2063 = vld [vmem:[%s0 + $0xb8] sm:$0xff]
  %vm2073 = vcmask 1045504
  %v2074 = vrot.slane %v2042, 2
  %v2075 = vrot.slane %v2048, 2
  %v2076 = vsel %vm2073, %v2074, %v2075
  %v2077 = vrot.slane %v2043, 2
  %v2078 = vrot.slane %v2049, 2
  %v2079 = vsel %vm2073, %v2077, %v2078
  %v2080 = vrot.slane %v2054, 2
  %v2081 = vsel %vm2073, %v2075, %v2080
  %v2082 = vrot.slane %v2055, 2
  %v2083 = vsel %vm2073, %v2078, %v2082
  %v2084 = vrot.slane %v2060, 2
  %v2085 = vsel %vm2073, %v2080, %v2084
  %v2086 = vrot.slane %v2061, 2
  %v2087 = vsel %vm2073, %v2082, %v2086
  %v2088 = vrot.slane 0.0, 2
  %v2089 = vsel %vm2073, %v2084, %v2088
  %v2090 = vsel %vm2073, %v2086, %v2088
  %v2099 = vadd.f32 %v2040, %v2076
  %v2100 = vadd.f32 %v2041, %v2079
  %v2101 = vadd.f32 %v2046, %v2081
  %v2102 = vadd.f32 %v2047, %v2083
  %v2103 = vadd.f32 %v2052, %v2085
  %v2104 = vadd.f32 %v2053, %v2087
  %v2105 = vadd.f32 %v2058, %v2089
  %v2106 = vadd.f32 %v2059, %v2090
  %vm2115 = vcmask 1043456
  %v2116 = vrot.slane %v2044, 4
  %v2117 = vrot.slane %v2050, 4
  %v2118 = vsel %vm2115, %v2116, %v2117
  %v2119 = vrot.slane %v2045, 4
  %v2120 = vrot.slane %v2051, 4
  %v2121 = vsel %vm2115, %v2119, %v2120
  %v2122 = vrot.slane %v2056, 4
  %v2123 = vsel %vm2115, %v2117, %v2122
  %v2124 = vrot.slane %v2057, 4
  %v2125 = vsel %vm2115, %v2120, %v2124
  %v2126 = vrot.slane %v2062, 4
  %v2127 = vsel %vm2115, %v2122, %v2126
  %v2128 = vrot.slane %v2063, 4
  %v2129 = vsel %vm2115, %v2124, %v2128
  %v2130 = vrot.slane 0.0, 4
  %v2131 = vsel %vm2115, %v2126, %v2130
  %v2132 = vsel %vm2115, %v2128, %v2130
  %v2141 = vadd.f32 %v2099, %v2118
  %v2142 = vadd.f32 %v2100, %v2121
  %v2143 = vadd.f32 %v2101, %v2123
  %v2144 = vadd.f32 %v2102, %v2125
  %v2145 = vadd.f32 %v2103, %v2127
  %v2146 = vadd.f32 %v2104, %v2129
  %v2147 = vadd.f32 %v2105, %v2131
  %v2148 = vadd.f32 %v2106, %v2132
  %v2149 = vlaneseq
  %v2150 = vshrl.u32 %v2149, 7
  %v2151 = vsub.s32 0, %v2150
  %v2152 = vrot.slane %v2009, %v2151
  %v2153 = vlaneseq
  %v2154 = vshrl.u32 %v2153, 7
  %v2155 = vsub.s32 0, %v2154
  %v2156 = vrot.slane %v2010, %v2155
  %v2157 = vadd.f32 %v2141, %v2152
  %v2158 = vadd.f32 %v2142, %v2156
  %v2159 = vadd.f32 %v2143, %v2152
  %v2160 = vadd.f32 %v2144, %v2156
  %v2161 = vadd.f32 %v2145, %v2152
  %v2162 = vadd.f32 %v2146, %v2156
  %v2163 = vadd.f32 %v2147, %v2152
  %v2164 = vadd.f32 %v2148, %v2156
  %v2165 = vmul.f32 %v2157, %v2024
  %v2166 = vmul.f32 %v2158, %v2024
  %v2167 = vmul.f32 %v2159, %v2025
  %v2168 = vmul.f32 %v2160, %v2025
  %v2169 = vmul.f32 %v2161, %v2026
  %v2170 = vmul.f32 %v2162, %v2026
  %v2171 = vmul.f32 %v2163, %v2027
  %v2172 = vmul.f32 %v2164, %v2027
  %v2173 = vadd.f32 %v2165, %v2167
  %v2174 = vadd.f32 %v2173, %v2169
  %v2175 = vadd.f32 %v2174, %v2171
  %v2176 = vrot.slane %v2175, 4
  %v2177 = vadd.f32 %v2175, %v2176
  %v2178 = vrot.slane %v2177, 2
  %v2179 = vadd.f32 %v2177, %v2178
  %v2180 = vrot.slane %v2179, 1
  %v2181 = vadd.f32 %v2179, %v2180
  %v2182 = vadd.f32 %v2166, %v2168
  %v2183 = vadd.f32 %v2182, %v2170
  %v2184 = vadd.f32 %v2183, %v2172
  %v2185 = vrot.slane %v2184, 4
  %v2186 = vadd.f32 %v2184, %v2185
  %v2187 = vrot.slane %v2186, 2
  %v2188 = vadd.f32 %v2186, %v2187
  %v2189 = vrot.slane %v2188, 1
  %v2190 = vadd.f32 %v2188, %v2189
  %v2191 = vmul.f32 %v2181, 0.035714287
  %v2192 = vmul.f32 %v2190, 0.035714287
  %v2193 = vsub.f32 %v2157, %v2191
  %v2194 = vsub.f32 %v2158, %v2192
  %v2195 = vsub.f32 %v2159, %v2191
  %v2196 = vsub.f32 %v2160, %v2192
  %v2197 = vsub.f32 %v2161, %v2191
  %v2198 = vsub.f32 %v2162, %v2192
  %v2199 = vsub.f32 %v2163, %v2191
  %v2200 = vsub.f32 %v2164, %v2192
  %v2201 = vmul.f32 %v2193, %v2024
  %v2202 = vmul.f32 %v2194, %v2024
  %v2203 = vmul.f32 %v2195, %v2025
  %v2204 = vmul.f32 %v2196, %v2025
  %v2205 = vmul.f32 %v2197, %v2026
  %v2206 = vmul.f32 %v2198, %v2026
  %v2207 = vmul.f32 %v2199, %v2027
  %v2208 = vmul.f32 %v2200, %v2027
  %v2209 = vmul.f32 %v2201, %v2201
  %v2210 = vmul.f32 %v2202, %v2202
  %v2211 = vmul.f32 %v2203, %v2203
  %v2212 = vmul.f32 %v2204, %v2204
  %v2213 = vmul.f32 %v2205, %v2205
  %v2214 = vmul.f32 %v2206, %v2206
  %v2215 = vmul.f32 %v2207, %v2207
  %v2216 = vmul.f32 %v2208, %v2208
  %v2217 = vadd.f32 %v2209, %v2211
  %v2218 = vadd.f32 %v2217, %v2213
  %v2219 = vadd.f32 %v2218, %v2215
  %v2220 = vrot.slane %v2219, 4
  %v2221 = vadd.f32 %v2219, %v2220
  %v2222 = vrot.slane %v2221, 2
  %v2223 = vadd.f32 %v2221, %v2222
  %v2224 = vrot.slane %v2223, 1
  %v2225 = vadd.f32 %v2223, %v2224
  %v2226 = vadd.f32 %v2210, %v2212
  %v2227 = vadd.f32 %v2226, %v2214
  %v2228 = vadd.f32 %v2227, %v2216
  %v2229 = vrot.slane %v2228, 4
  %v2230 = vadd.f32 %v2228, %v2229
  %v2231 = vrot.slane %v2230, 2
  %v2232 = vadd.f32 %v2230, %v2231
  %v2233 = vrot.slane %v2232, 1
  %v2234 = vadd.f32 %v2232, %v2233
  %v2235 = vmul.f32 %v2225, 0.035714287
  %v2236 = vmul.f32 %v2234, 0.035714287
  %v2237 = vadd.f32 %v2235, 1e-05
  %v2238 = vadd.f32 %v2236, 1e-05
  %v2239 = vrsqrt.pop %v2237
  %v2240 = vrsqrt.pop %v2238
  %v2241 = vmul.f32 %v2201, %v2239
  %v2242 = vmul.f32 %v2202, %v2240
  %v2243 = vmul.f32 %v2203, %v2239
  %v2244 = vmul.f32 %v2204, %v2240
  %v2245 = vmul.f32 %v2205, %v2239
  %v2246 = vmul.f32 %v2206, %v2240
  %v2247 = vmul.f32 %v2207, %v2239
  %v2248 = vmul.f32 %v2208, %v2240
  %v2249 = vlaneseq
  %v2250 = vshrl.u32 %v2249, 7
  %v2251 = vsub.s32 1, %v2250
  %v2252 = vrot.slane %v2009, %v2251
  %v2253 = vlaneseq
  %v2254 = vshrl.u32 %v2253, 7
  %v2255 = vsub.s32 1, %v2254
  %v2256 = vrot.slane %v2010, %v2255
  %v2257 = vmul.f32 %v2241, %v2252
  %v2258 = vmul.f32 %v2242, %v2256
  %v2259 = vmul.f32 %v2243, %v2252
  %v2260 = vmul.f32 %v2244, %v2256
  %v2261 = vmul.f32 %v2245, %v2252
  %v2262 = vmul.f32 %v2246, %v2256
  %v2263 = vmul.f32 %v2247, %v2252
  %v2264 = vmul.f32 %v2248, %v2256
  %v2265 = vlaneseq
  %v2266 = vshrl.u32 %v2265, 7
  %v2267 = vsub.s32 2, %v2266
  %v2268 = vrot.slane %v2009, %v2267
  %v2269 = vlaneseq
  %v2270 = vshrl.u32 %v2269, 7
  %v2271 = vsub.s32 2, %v2270
  %v2272 = vrot.slane %v2010, %v2271
  %v2273 = vadd.f32 %v2257, %v2268
  %v2274 = vadd.f32 %v2258, %v2272
  %v2275 = vadd.f32 %v2259, %v2268
  %v2276 = vadd.f32 %v2260, %v2272
  %v2277 = vadd.f32 %v2261, %v2268
  %v2278 = vadd.f32 %v2262, %v2272
  %v2279 = vadd.f32 %v2263, %v2268
  %v2280 = vadd.f32 %v2264, %v2272
  %v2281 = vmax.f32 %v2273, 0.0
  %v2282 = vmax.f32 %v2274, 0.0
  %v2283 = vmax.f32 %v2275, 0.0
  %v2284 = vmax.f32 %v2276, 0.0
  %v2285 = vmax.f32 %v2277, 0.0
  %v2286 = vmax.f32 %v2278, 0.0
  %v2287 = vmax.f32 %v2279, 0.0
  %v2288 = vmax.f32 %v2280, 0.0
  %v2289 = vmul.f32 %v2281, %v2024
  %v2290 = vmul.f32 %v2282, %v2024
  %v2291 = vmul.f32 %v2283, %v2025
  %v2292 = vmul.f32 %v2284, %v2025
  %v2293 = vmul.f32 %v2285, %v2026
  %v2294 = vmul.f32 %v2286, %v2026
  %v2295 = vmul.f32 %v2287, %v2027
  %v2296 = vmul.f32 %v2288, %v2027
  %s2297 = smul.u32 4, 3
  %s2298 = smul.u32 %s2297, 32
  %s2299 = smul.u32 %s2298, 2
  %s2300 = sshll.u32 %s2299, 4
  %2301 = dma.done [#allocation5], %s2300
  %v2302 = vpack.c.bf16 %v2291, %v2289
  %v2303 = vpack.c.bf16 %v2292, %v2290
  %v2304 = vpack.c.bf16 %v2295, %v2293
  %v2305 = vpack.c.bf16 %v2296, %v2294
  %v2306 = vld [vmem:[#allocation2] sm:$0xff]
  %v2307 = vld [vmem:[#allocation2 + $0x8] sm:$0xff]
  %v2308 = vld [vmem:[#allocation2 + $0x10] sm:$0xff]
  %v2309 = vld [vmem:[#allocation2 + $0x18] sm:$0xff]
  %v2310 = vld [vmem:[#allocation2 + $0x20] sm:$0xff]
  %v2311 = vld [vmem:[#allocation2 + $0x28] sm:$0xff]
  %v2312 = vld [vmem:[#allocation2 + $0x30] sm:$0xff]
  %v2313 = vld [vmem:[#allocation2 + $0x38] sm:$0xff]
  %v2314 = vld [vmem:[#allocation2 + $0x40] sm:$0xff]
  %v2315 = vld [vmem:[#allocation2 + $0x48] sm:$0xff]
  %v2316 = vld [vmem:[#allocation2 + $0x50] sm:$0xff]
  %v2317 = vld [vmem:[#allocation2 + $0x58] sm:$0xff]
  %v2318 = vld [vmem:[#allocation2 + $0x60] sm:$0xff]
  %v2319 = vld [vmem:[#allocation2 + $0x68] sm:$0xff]
  %v2320 = vld [vmem:[#allocation2 + $0x70] sm:$0xff]
  %v2321 = vld [vmem:[#allocation2 + $0x78] sm:$0xff]
  %v2322 = vld [vmem:[#allocation2 + $0x80] sm:$0xff]
  %v2323 = vld [vmem:[#allocation2 + $0x88] sm:$0xff]
  %v2324 = vld [vmem:[#allocation2 + $0x90] sm:$0xff]
  %v2325 = vld [vmem:[#allocation2 + $0x98] sm:$0xff]
  %v2326 = vld [vmem:[#allocation2 + $0xa0] sm:$0xff]
  %v2327 = vld [vmem:[#allocation2 + $0xa8] sm:$0xff]
  %v2328 = vld [vmem:[#allocation2 + $0xb0] sm:$0xff]
  %v2329 = vld [vmem:[#allocation2 + $0xb8] sm:$0xff]
  %v2330 = vld [vmem:[#allocation2 + $0xc0] sm:$0xff]
  %v2331 = vld [vmem:[#allocation2 + $0xc8] sm:$0xff]
  %v2332 = vld [vmem:[#allocation2 + $0xd0] sm:$0xff]
  %v2333 = vld [vmem:[#allocation2 + $0xd8] sm:$0xff]
  %v2334 = vld [vmem:[#allocation2 + $0xe0] sm:$0xff]
  %v2335 = vld [vmem:[#allocation2 + $0xe8] sm:$0xff]
  %v2336 = vld [vmem:[#allocation2 + $0xf0] sm:$0xff]
  %v2337 = vld [vmem:[#allocation2 + $0xf8] sm:$0xff]
  %s2338 = scalar_lea.vmem [#allocation2], 256
  %v2339 = vld [vmem:[%s2338] sm:$0xff]
  %v2340 = vld [vmem:[%s2338 + $0x8] sm:$0xff]
  %v2341 = vld [vmem:[%s2338 + $0x10] sm:$0xff]
  %v2342 = vld [vmem:[%s2338 + $0x18] sm:$0xff]
  %v2343 = vld [vmem:[%s2338 + $0x20] sm:$0xff]
  %v2344 = vld [vmem:[%s2338 + $0x28] sm:$0xff]
  %v2345 = vld [vmem:[%s2338 + $0x30] sm:$0xff]
  %v2346 = vld [vmem:[%s2338 + $0x38] sm:$0xff]
  %v2347 = vld [vmem:[%s2338 + $0x40] sm:$0xff]
  %v2348 = vld [vmem:[%s2338 + $0x48] sm:$0xff]
  %v2349 = vld [vmem:[%s2338 + $0x50] sm:$0xff]
  %v2350 = vld [vmem:[%s2338 + $0x58] sm:$0xff]
  %v2351 = vld [vmem:[%s2338 + $0x60] sm:$0xff]
  %v2352 = vld [vmem:[%s2338 + $0x68] sm:$0xff]
  %v2353 = vld [vmem:[%s2338 + $0x70] sm:$0xff]
  %v2354 = vld [vmem:[%s2338 + $0x78] sm:$0xff]
  %v2355 = vld [vmem:[%s2338 + $0x80] sm:$0xff]
  %v2356 = vld [vmem:[%s2338 + $0x88] sm:$0xff]
  %v2357 = vld [vmem:[%s2338 + $0x90] sm:$0xff]
  %v2358 = vld [vmem:[%s2338 + $0x98] sm:$0xff]
  %v2359 = vld [vmem:[%s2338 + $0xa0] sm:$0xff]
  %v2360 = vld [vmem:[%s2338 + $0xa8] sm:$0xff]
  %v2361 = vld [vmem:[%s2338 + $0xb0] sm:$0xff]
  %v2362 = vld [vmem:[%s2338 + $0xb8] sm:$0xff]
  %v2363 = vld [vmem:[%s2338 + $0xc0] sm:$0xff]
  %v2364 = vld [vmem:[%s2338 + $0xc8] sm:$0xff]
  %v2365 = vld [vmem:[%s2338 + $0xd0] sm:$0xff]
  %v2366 = vld [vmem:[%s2338 + $0xd8] sm:$0xff]
  %v2367 = vld [vmem:[%s2338 + $0xe0] sm:$0xff]
  %v2368 = vld [vmem:[%s2338 + $0xe8] sm:$0xff]
  %v2369 = vld [vmem:[%s2338 + $0xf0] sm:$0xff]
  %v2370 = vld [vmem:[%s2338 + $0xf8] sm:$0xff]
  %vm2376 = vcmask 1046528
  %v2377 = vrot.slane %v2302, 1
  %v2378 = vrot.slane %v2304, 1
  %v2379 = vsel %vm2376, %v2377, %v2378
  %v2380 = vrot.slane %v2303, 1
  %v2381 = vrot.slane %v2305, 1
  %v2382 = vsel %vm2376, %v2380, %v2381
  %v2383 = vrot.slane 0, 1
  %v2384 = vsel %vm2376, %v2378, %v2383
  %v2385 = vsel %vm2376, %v2381, %v2383
  %2390 = vmatprep.subr.bf16.mxu0 %v2340
  %2391 = vmatpush1.bf16.msra.mxu0 %v2339
  %2392 = vmatprep.subr.bf16.mxu0 %v2342
  %2393 = vmatpush1.bf16.msra.mxu0 %v2341
  %2394 = vmatprep.subr.bf16.mxu0 %v2344
  %2395 = vmatpush1.bf16.msra.mxu0 %v2343
  %2396 = vmatprep.subr.bf16.mxu0 %v2346
  %2397 = vmatpush1.bf16.msra.mxu0 %v2345
  %2398 = vmatprep.subr.bf16.mxu0 %v2348
  %2399 = vmatpush1.bf16.msra.mxu0 %v2347
  %2400 = vmatprep.subr.bf16.mxu0 %v2350
  %2401 = vmatpush1.bf16.msra.mxu0 %v2349
  %2402 = vmatprep.subr.bf16.mxu0 %v2352
  %2403 = vmatpush1.bf16.msra.mxu0 %v2351
  %2404 = vmatprep.subr.bf16.mxu0 %v2354
  %2405 = vmatpush1.bf16.msra.mxu0 %v2353
  %2406 = vmatprep.subr.bf16.mxu0 %v2356
  %2407 = vmatpush1.bf16.msra.mxu0 %v2355
  %2408 = vmatprep.subr.bf16.mxu0 %v2358
  %2409 = vmatpush1.bf16.msra.mxu0 %v2357
  %2410 = vmatprep.subr.bf16.mxu0 %v2360
  %2411 = vmatpush1.bf16.msra.mxu0 %v2359
  %2412 = vmatprep.subr.bf16.mxu0 %v2362
  %2413 = vmatpush1.bf16.msra.mxu0 %v2361
  %2414 = vmatprep.subr.bf16.mxu0 %v2364
  %2415 = vmatpush1.bf16.msra.mxu0 %v2363
  %2416 = vmatprep.subr.bf16.mxu0 %v2366
  %2417 = vmatpush1.bf16.msra.mxu0 %v2365
  %2418 = vmatprep.subr.bf16.mxu0 %v2368
  %2419 = vmatpush1.bf16.msra.mxu0 %v2367
  %2420 = vmatprep.subr.bf16.mxu0 %v2370
  %2421 = vmatpush1.bf16.msra.mxu0 %v2369
  %2422 = vmatprep.mubr.bf16.mxu0 %v2382
  %2423 = vmatmul.mubr.bf16.gmra.mrb[0].mxu0 %v2379
  %v2424 = vpop.f32.mrb[0].mxu0
  %v2425 = vadd.f32 0.0, %v2424
  %v2426 = vpop.f32.mrb[0].mxu0
  %v2427 = vadd.f32 0.0, %v2426
  %v2428 = vpop.f32.mrb[0].mxu0
  %v2429 = vadd.f32 0.0, %v2428
  %v2430 = vpop.f32.mrb[0].mxu0
  %v2431 = vadd.f32 0.0, %v2430
  %2432 = vmatprep.mubr.bf16.mxu0 %v2385
  %2433 = vmatmul.mubr.bf16.gmra.mrb[0].mxu0 %v2384
  %v2434 = vpop.f32.mrb[0].mxu0
  %v2435 = vadd.f32 0.0, %v2434
  %v2436 = vpop.f32.mrb[0].mxu0
  %v2437 = vadd.f32 0.0, %v2436
  %v2438 = vpop.f32.mrb[0].mxu0
  %v2439 = vadd.f32 0.0, %v2438
  %v2440 = vpop.f32.mrb[0].mxu0
  %v2441 = vadd.f32 0.0, %v2440
  %2442 = vdwg.mxu0
  %2443 = vmatprep.subr.bf16.mxu0 %v2307
  %2444 = vmatpush1.bf16.msra.mxu0 %v2306
  %2445 = vmatprep.subr.bf16.mxu0 %v2309
  %2446 = vmatpush1.bf16.msra.mxu0 %v2308
  %2447 = vmatprep.subr.bf16.mxu0 %v2311
  %2448 = vmatpush1.bf16.msra.mxu0 %v2310
  %2449 = vmatprep.subr.bf16.mxu0 %v2313
  %2450 = vmatpush1.bf16.msra.mxu0 %v2312
  %2451 = vmatprep.subr.bf16.mxu0 %v2315
  %2452 = vmatpush1.bf16.msra.mxu0 %v2314
  %2453 = vmatprep.subr.bf16.mxu0 %v2317
  %2454 = vmatpush1.bf16.msra.mxu0 %v2316
  %2455 = vmatprep.subr.bf16.mxu0 %v2319
  %2456 = vmatpush1.bf16.msra.mxu0 %v2318
  %2457 = vmatprep.subr.bf16.mxu0 %v2321
  %2458 = vmatpush1.bf16.msra.mxu0 %v2320
  %2459 = vmatprep.subr.bf16.mxu0 %v2323
  %2460 = vmatpush1.bf16.msra.mxu0 %v2322
  %2461 = vmatprep.subr.bf16.mxu0 %v2325
  %2462 = vmatpush1.bf16.msra.mxu0 %v2324
  %2463 = vmatprep.subr.bf16.mxu0 %v2327
  %2464 = vmatpush1.bf16.msra.mxu0 %v2326
  %2465 = vmatprep.subr.bf16.mxu0 %v2329
  %2466 = vmatpush1.bf16.msra.mxu0 %v2328
  %2467 = vmatprep.subr.bf16.mxu0 %v2331
  %2468 = vmatpush1.bf16.msra.mxu0 %v2330
  %2469 = vmatprep.subr.bf16.mxu0 %v2333
  %2470 = vmatpush1.bf16.msra.mxu0 %v2332
  %2471 = vmatprep.subr.bf16.mxu0 %v2335
  %2472 = vmatpush1.bf16.msra.mxu0 %v2334
  %2473 = vmatprep.subr.bf16.mxu0 %v2337
  %2474 = vmatpush1.bf16.msra.mxu0 %v2336
  %2475 = vmatprep.mubr.bf16.mxu0 %v2303
  %2476 = vmatmul.mubr.bf16.gmra.mrb[0].mxu0 %v2302
  %v2477 = vpop.f32.mrb[0].mxu0
  %v2478 = vadd.f32 %v2425, %v2477
  %v2479 = vpop.f32.mrb[0].mxu0
  %v2480 = vadd.f32 %v2427, %v2479
  %v2481 = vpop.f32.mrb[0].mxu0
  %v2482 = vadd.f32 %v2429, %v2481
  %v2483 = vpop.f32.mrb[0].mxu0
  %v2484 = vadd.f32 %v2431, %v2483
  %2485 = vmatprep.mubr.bf16.mxu0 %v2305
  %2486 = vmatmul.mubr.bf16.gmra.mrb[0].mxu0 %v2304
  %v2487 = vpop.f32.mrb[0].mxu0
  %v2488 = vadd.f32 %v2435, %v2487
  %v2489 = vpop.f32.mrb[0].mxu0
  %v2490 = vadd.f32 %v2437, %v2489
  %v2491 = vpop.f32.mrb[0].mxu0
  %v2492 = vadd.f32 %v2439, %v2491
  %v2493 = vpop.f32.mrb[0].mxu0
  %v2494 = vadd.f32 %v2441, %v2493
  %2495 = vdwg.mxu0
  %s2496 = scalar_lea.vmem [#allocation2], 512
  %v2497 = vld [vmem:[%s2496] sm:$0xff]
  %v2498 = vld [vmem:[%s2496 + $0x8] sm:$0xff]
  %v2499 = vld [vmem:[%s2496 + $0x10] sm:$0xff]
  %v2500 = vld [vmem:[%s2496 + $0x18] sm:$0xff]
  %v2501 = vld [vmem:[%s2496 + $0x20] sm:$0xff]
  %v2502 = vld [vmem:[%s2496 + $0x28] sm:$0xff]
  %v2503 = vld [vmem:[%s2496 + $0x30] sm:$0xff]
  %v2504 = vld [vmem:[%s2496 + $0x38] sm:$0xff]
  %v2505 = vld [vmem:[%s2496 + $0x40] sm:$0xff]
  %v2506 = vld [vmem:[%s2496 + $0x48] sm:$0xff]
  %v2507 = vld [vmem:[%s2496 + $0x50] sm:$0xff]
  %v2508 = vld [vmem:[%s2496 + $0x58] sm:$0xff]
  %v2509 = vld [vmem:[%s2496 + $0x60] sm:$0xff]
  %v2510 = vld [vmem:[%s2496 + $0x68] sm:$0xff]
  %v2511 = vld [vmem:[%s2496 + $0x70] sm:$0xff]
  %v2512 = vld [vmem:[%s2496 + $0x78] sm:$0xff]
  %v2513 = vld [vmem:[%s2496 + $0x80] sm:$0xff]
  %v2514 = vld [vmem:[%s2496 + $0x88] sm:$0xff]
  %v2515 = vld [vmem:[%s2496 + $0x90] sm:$0xff]
  %v2516 = vld [vmem:[%s2496 + $0x98] sm:$0xff]
  %v2517 = vld [vmem:[%s2496 + $0xa0] sm:$0xff]
  %v2518 = vld [vmem:[%s2496 + $0xa8] sm:$0xff]
  %v2519 = vld [vmem:[%s2496 + $0xb0] sm:$0xff]
  %v2520 = vld [vmem:[%s2496 + $0xb8] sm:$0xff]
  %v2521 = vld [vmem:[%s2496 + $0xc0] sm:$0xff]
  %v2522 = vld [vmem:[%s2496 + $0xc8] sm:$0xff]
  %v2523 = vld [vmem:[%s2496 + $0xd0] sm:$0xff]
  %v2524 = vld [vmem:[%s2496 + $0xd8] sm:$0xff]
  %v2525 = vld [vmem:[%s2496 + $0xe0] sm:$0xff]
  %v2526 = vld [vmem:[%s2496 + $0xe8] sm:$0xff]
  %v2527 = vld [vmem:[%s2496 + $0xf0] sm:$0xff]
  %v2528 = vld [vmem:[%s2496 + $0xf8] sm:$0xff]
  %vm2529 = vcmask 1045504
  %v2530 = vrot.slane %v2302, 2
  %v2531 = vrot.slane %v2304, 2
  %v2532 = vsel %vm2529, %v2530, %v2531
  %v2533 = vrot.slane %v2303, 2
  %v2534 = vrot.slane %v2305, 2
  %v2535 = vsel %vm2529, %v2533, %v2534
  %v2536 = vrot.slane 0, 2
  %v2537 = vsel %vm2529, %v2531, %v2536
  %v2538 = vsel %vm2529, %v2534, %v2536
  %2543 = vmatprep.subr.bf16.mxu0 %v2498
  %2544 = vmatpush1.bf16.msra.mxu0 %v2497
  %2545 = vmatprep.subr.bf16.mxu0 %v2500
  %2546 = vmatpush1.bf16.msra.mxu0 %v2499
  %2547 = vmatprep.subr.bf16.mxu0 %v2502
  %2548 = vmatpush1.bf16.msra.mxu0 %v2501
  %2549 = vmatprep.subr.bf16.mxu0 %v2504
  %2550 = vmatpush1.bf16.msra.mxu0 %v2503
  %2551 = vmatprep.subr.bf16.mxu0 %v2506
  %2552 = vmatpush1.bf16.msra.mxu0 %v2505
  %2553 = vmatprep.subr.bf16.mxu0 %v2508
  %2554 = vmatpush1.bf16.msra.mxu0 %v2507
  %2555 = vmatprep.subr.bf16.mxu0 %v2510
  %2556 = vmatpush1.bf16.msra.mxu0 %v2509
  %2557 = vmatprep.subr.bf16.mxu0 %v2512
  %2558 = vmatpush1.bf16.msra.mxu0 %v2511
  %2559 = vmatprep.subr.bf16.mxu0 %v2514
  %2560 = vmatpush1.bf16.msra.mxu0 %v2513
  %2561 = vmatprep.subr.bf16.mxu0 %v2516
  %2562 = vmatpush1.bf16.msra.mxu0 %v2515
  %2563 = vmatprep.subr.bf16.mxu0 %v2518
  %2564 = vmatpush1.bf16.msra.mxu0 %v2517
  %2565 = vmatprep.subr.bf16.mxu0 %v2520
  %2566 = vmatpush1.bf16.msra.mxu0 %v2519
  %2567 = vmatprep.subr.bf16.mxu0 %v2522
  %2568 = vmatpush1.bf16.msra.mxu0 %v2521
  %2569 = vmatprep.subr.bf16.mxu0 %v2524
  %2570 = vmatpush1.bf16.msra.mxu0 %v2523
  %2571 = vmatprep.subr.bf16.mxu0 %v2526
  %2572 = vmatpush1.bf16.msra.mxu0 %v2525
  %2573 = vmatprep.subr.bf16.mxu0 %v2528
  %2574 = vmatpush1.bf16.msra.mxu0 %v2527
  %2575 = vmatprep.mubr.bf16.mxu0 %v2535
  %2576 = vmatmul.mubr.bf16.gmra.mrb[0].mxu0 %v2532
  %v2577 = vpop.f32.mrb[0].mxu0
  %v2578 = vadd.f32 0.0, %v2577
  %v2579 = vpop.f32.mrb[0].mxu0
  %v2580 = vadd.f32 0.0, %v2579
  %v2581 = vpop.f32.mrb[0].mxu0
  %v2582 = vadd.f32 0.0, %v2581
  %v2583 = vpop.f32.mrb[0].mxu0
  %v2584 = vadd.f32 0.0, %v2583
  %2585 = vmatprep.mubr.bf16.mxu0 %v2538
  %2586 = vmatmul.mubr.bf16.gmra.mrb[0].mxu0 %v2537
  %v2587 = vpop.f32.mrb[0].mxu0
  %v2588 = vadd.f32 0.0, %v2587
  %v2589 = vpop.f32.mrb[0].mxu0
  %v2590 = vadd.f32 0.0, %v2589
  %v2591 = vpop.f32.mrb[0].mxu0
  %v2592 = vadd.f32 0.0, %v2591
  %v2593 = vpop.f32.mrb[0].mxu0
  %v2594 = vadd.f32 0.0, %v2593
  %2595 = vdwg.mxu0
  %v2596 = vadd.f32 %v2478, %v2578
  %v2597 = vadd.f32 %v2480, %v2580
  %v2598 = vadd.f32 %v2482, %v2582
  %v2599 = vadd.f32 %v2484, %v2584
  %v2600 = vadd.f32 %v2488, %v2588
  %v2601 = vadd.f32 %v2490, %v2590
  %v2602 = vadd.f32 %v2492, %v2592
  %v2603 = vadd.f32 %v2494, %v2594
  %v2604 = vlaneseq
  %v2605 = vshrl.u32 %v2604, 7
  %v2606 = vsub.s32 3, %v2605
  %v2607 = vrot.slane %v2009, %v2606
  %v2608 = vlaneseq
  %v2609 = vshrl.u32 %v2608, 7
  %v2610 = vsub.s32 3, %v2609
  %v2611 = vrot.slane %v2010, %v2610
  %v2612 = vadd.f32 %v2596, %v2607
  %v2613 = vadd.f32 %v2597, %v2611
  %v2614 = vadd.f32 %v2598, %v2607
  %v2615 = vadd.f32 %v2599, %v2611
  %v2616 = vadd.f32 %v2600, %v2607
  %v2617 = vadd.f32 %v2601, %v2611
  %v2618 = vadd.f32 %v2602, %v2607
  %v2619 = vadd.f32 %v2603, %v2611
  %v2620 = vmul.f32 %v2612, %v2036
  %v2621 = vmul.f32 %v2613, %v2036
  %v2622 = vmul.f32 %v2614, %v2037
  %v2623 = vmul.f32 %v2615, %v2037
  %v2624 = vmul.f32 %v2616, %v2038
  %v2625 = vmul.f32 %v2617, %v2038
  %v2626 = vmul.f32 %v2618, %v2039
  %v2627 = vmul.f32 %v2619, %v2039
  %v2628 = vadd.f32 %v2620, %v2622
  %v2629 = vadd.f32 %v2628, %v2624
  %v2630 = vadd.f32 %v2629, %v2626
  %v2631 = vrot.slane %v2630, 4
  %v2632 = vadd.f32 %v2630, %v2631
  %v2633 = vrot.slane %v2632, 2
  %v2634 = vadd.f32 %v2632, %v2633
  %v2635 = vrot.slane %v2634, 1
  %v2636 = vadd.f32 %v2634, %v2635
  %v2637 = vadd.f32 %v2621, %v2623
  %v2638 = vadd.f32 %v2637, %v2625
  %v2639 = vadd.f32 %v2638, %v2627
  %v2640 = vrot.slane %v2639, 4
  %v2641 = vadd.f32 %v2639, %v2640
  %v2642 = vrot.slane %v2641, 2
  %v2643 = vadd.f32 %v2641, %v2642
  %v2644 = vrot.slane %v2643, 1
  %v2645 = vadd.f32 %v2643, %v2644
  %v2646 = vmul.f32 %v2636, 0.041666668
  %v2647 = vmul.f32 %v2645, 0.041666668
  %v2648 = vsub.f32 %v2612, %v2646
  %v2649 = vsub.f32 %v2613, %v2647
  %v2650 = vsub.f32 %v2614, %v2646
  %v2651 = vsub.f32 %v2615, %v2647
  %v2652 = vsub.f32 %v2616, %v2646
  %v2653 = vsub.f32 %v2617, %v2647
  %v2654 = vsub.f32 %v2618, %v2646
  %v2655 = vsub.f32 %v2619, %v2647
  %v2656 = vmul.f32 %v2648, %v2036
  %v2657 = vmul.f32 %v2649, %v2036
  %v2658 = vmul.f32 %v2650, %v2037
  %v2659 = vmul.f32 %v2651, %v2037
  %v2660 = vmul.f32 %v2652, %v2038
  %v2661 = vmul.f32 %v2653, %v2038
  %v2662 = vmul.f32 %v2654, %v2039
  %v2663 = vmul.f32 %v2655, %v2039
  %v2664 = vmul.f32 %v2656, %v2656
  %v2665 = vmul.f32 %v2657, %v2657
  %v2666 = vmul.f32 %v2658, %v2658
  %v2667 = vmul.f32 %v2659, %v2659
  %v2668 = vmul.f32 %v2660, %v2660
  %v2669 = vmul.f32 %v2661, %v2661
  %v2670 = vmul.f32 %v2662, %v2662
  %v2671 = vmul.f32 %v2663, %v2663
  %v2672 = vadd.f32 %v2664, %v2666
  %v2673 = vadd.f32 %v2672, %v2668
  %v2674 = vadd.f32 %v2673, %v2670
  %v2675 = vrot.slane %v2674, 4
  %v2676 = vadd.f32 %v2674, %v2675
  %v2677 = vrot.slane %v2676, 2
  %v2678 = vadd.f32 %v2676, %v2677
  %v2679 = vrot.slane %v2678, 1
  %v2680 = vadd.f32 %v2678, %v2679
  %v2681 = vadd.f32 %v2665, %v2667
  %v2682 = vadd.f32 %v2681, %v2669
  %v2683 = vadd.f32 %v2682, %v2671
  %v2684 = vrot.slane %v2683, 4
  %v2685 = vadd.f32 %v2683, %v2684
  %v2686 = vrot.slane %v2685, 2
  %v2687 = vadd.f32 %v2685, %v2686
  %v2688 = vrot.slane %v2687, 1
  %v2689 = vadd.f32 %v2687, %v2688
  %v2690 = vmul.f32 %v2680, 0.041666668
  %v2691 = vmul.f32 %v2689, 0.041666668
  %v2692 = vadd.f32 %v2690, 1e-05
  %v2693 = vadd.f32 %v2691, 1e-05
  %v2694 = vrsqrt.pop %v2692
  %v2695 = vrsqrt.pop %v2693
  %v2696 = vmul.f32 %v2656, %v2694
  %v2697 = vmul.f32 %v2657, %v2695
  %v2698 = vmul.f32 %v2658, %v2694
  %v2699 = vmul.f32 %v2659, %v2695
  %v2700 = vmul.f32 %v2660, %v2694
  %v2701 = vmul.f32 %v2661, %v2695
  %v2702 = vmul.f32 %v2662, %v2694
  %v2703 = vmul.f32 %v2663, %v2695
  %v2704 = vlaneseq
  %v2705 = vshrl.u32 %v2704, 7
  %v2706 = vsub.s32 4, %v2705
  %v2707 = vrot.slane %v2009, %v2706
  %v2708 = vlaneseq
  %v2709 = vshrl.u32 %v2708, 7
  %v2710 = vsub.s32 4, %v2709
  %v2711 = vrot.slane %v2010, %v2710
  %v2712 = vmul.f32 %v2696, %v2707
  %v2713 = vmul.f32 %v2697, %v2711
  %v2714 = vmul.f32 %v2698, %v2707
  %v2715 = vmul.f32 %v2699, %v2711
  %v2716 = vmul.f32 %v2700, %v2707
  %v2717 = vmul.f32 %v2701, %v2711
  %v2718 = vmul.f32 %v2702, %v2707
  %v2719 = vmul.f32 %v2703, %v2711
  %v2720 = vlaneseq
  %v2721 = vshrl.u32 %v2720, 7
  %v2722 = vsub.s32 5, %v2721
  %v2723 = vrot.slane %v2009, %v2722
  %v2724 = vlaneseq
  %v2725 = vshrl.u32 %v2724, 7
  %v2726 = vsub.s32 5, %v2725
  %v2727 = vrot.slane %v2010, %v2726
  %v2728 = vadd.f32 %v2712, %v2723
  %v2729 = vadd.f32 %v2713, %v2727
  %v2730 = vadd.f32 %v2714, %v2723
  %v2731 = vadd.f32 %v2715, %v2727
  %v2732 = vadd.f32 %v2716, %v2723
  %v2733 = vadd.f32 %v2717, %v2727
  %v2734 = vadd.f32 %v2718, %v2723
  %v2735 = vadd.f32 %v2719, %v2727
  %v2736 = vmax.f32 %v2728, 0.0
  %v2737 = vmax.f32 %v2729, 0.0
  %v2738 = vmax.f32 %v2730, 0.0
  %v2739 = vmax.f32 %v2731, 0.0
  %v2740 = vmax.f32 %v2732, 0.0
  %v2741 = vmax.f32 %v2733, 0.0
  %v2742 = vmax.f32 %v2734, 0.0
  %v2743 = vmax.f32 %v2735, 0.0
  %v2744 = vmul.f32 %v2736, %v2036
  %v2745 = vmul.f32 %v2737, %v2036
  %v2746 = vmul.f32 %v2738, %v2037
  %v2747 = vmul.f32 %v2739, %v2037
  %v2748 = vmul.f32 %v2740, %v2038
  %v2749 = vmul.f32 %v2741, %v2038
  %v2750 = vmul.f32 %v2742, %v2039
  %v2751 = vmul.f32 %v2743, %v2039
  %s2752 = sshll.u32 %s2299, 4
  %2753 = dma.done %s831, %s2752
  %v2754 = vpack.c.bf16 %v2746, %v2744
  %v2755 = vpack.c.bf16 %v2747, %v2745
  %v2756 = vpack.c.bf16 %v2750, %v2748
  %v2757 = vpack.c.bf16 %v2751, %v2749
  %v2758 = vld [vmem:[#allocation3] sm:$0xff]
  %v2759 = vld [vmem:[#allocation3 + $0x8] sm:$0xff]
  %v2760 = vld [vmem:[#allocation3 + $0x10] sm:$0xff]
  %v2761 = vld [vmem:[#allocation3 + $0x18] sm:$0xff]
  %v2762 = vld [vmem:[#allocation3 + $0x20] sm:$0xff]
  %v2763 = vld [vmem:[#allocation3 + $0x28] sm:$0xff]
  %v2764 = vld [vmem:[#allocation3 + $0x30] sm:$0xff]
  %v2765 = vld [vmem:[#allocation3 + $0x38] sm:$0xff]
  %v2766 = vld [vmem:[#allocation3 + $0x40] sm:$0xff]
  %v2767 = vld [vmem:[#allocation3 + $0x48] sm:$0xff]
  %v2768 = vld [vmem:[#allocation3 + $0x50] sm:$0xff]
  %v2769 = vld [vmem:[#allocation3 + $0x58] sm:$0xff]
  %v2770 = vld [vmem:[#allocation3 + $0x60] sm:$0xff]
  %v2771 = vld [vmem:[#allocation3 + $0x68] sm:$0xff]
  %v2772 = vld [vmem:[#allocation3 + $0x70] sm:$0xff]
  %v2773 = vld [vmem:[#allocation3 + $0x78] sm:$0xff]
  %v2774 = vld [vmem:[#allocation3 + $0x80] sm:$0xff]
  %v2775 = vld [vmem:[#allocation3 + $0x88] sm:$0xff]
  %v2776 = vld [vmem:[#allocation3 + $0x90] sm:$0xff]
  %v2777 = vld [vmem:[#allocation3 + $0x98] sm:$0xff]
  %v2778 = vld [vmem:[#allocation3 + $0xa0] sm:$0xff]
  %v2779 = vld [vmem:[#allocation3 + $0xa8] sm:$0xff]
  %v2780 = vld [vmem:[#allocation3 + $0xb0] sm:$0xff]
  %v2781 = vld [vmem:[#allocation3 + $0xb8] sm:$0xff]
  %v2782 = vld [vmem:[#allocation3 + $0xc0] sm:$0xff]
  %v2783 = vld [vmem:[#allocation3 + $0xc8] sm:$0xff]
  %v2784 = vld [vmem:[#allocation3 + $0xd0] sm:$0xff]
  %v2785 = vld [vmem:[#allocation3 + $0xd8] sm:$0xff]
  %v2786 = vld [vmem:[#allocation3 + $0xe0] sm:$0xff]
  %v2787 = vld [vmem:[#allocation3 + $0xe8] sm:$0xff]
  %v2788 = vld [vmem:[#allocation3 + $0xf0] sm:$0xff]
  %v2789 = vld [vmem:[#allocation3 + $0xf8] sm:$0xff]
  %s2790 = scalar_lea.vmem [#allocation3], 256
  %v2791 = vld [vmem:[%s2790] sm:$0xff]
  %v2792 = vld [vmem:[%s2790 + $0x8] sm:$0xff]
  %v2793 = vld [vmem:[%s2790 + $0x10] sm:$0xff]
  %v2794 = vld [vmem:[%s2790 + $0x18] sm:$0xff]
  %v2795 = vld [vmem:[%s2790 + $0x20] sm:$0xff]
  %v2796 = vld [vmem:[%s2790 + $0x28] sm:$0xff]
  %v2797 = vld [vmem:[%s2790 + $0x30] sm:$0xff]
  %v2798 = vld [vmem:[%s2790 + $0x38] sm:$0xff]
  %v2799 = vld [vmem:[%s2790 + $0x40] sm:$0xff]
  %v2800 = vld [vmem:[%s2790 + $0x48] sm:$0xff]
  %v2801 = vld [vmem:[%s2790 + $0x50] sm:$0xff]
  %v2802 = vld [vmem:[%s2790 + $0x58] sm:$0xff]
  %v2803 = vld [vmem:[%s2790 + $0x60] sm:$0xff]
  %v2804 = vld [vmem:[%s2790 + $0x68] sm:$0xff]
  %v2805 = vld [vmem:[%s2790 + $0x70] sm:$0xff]
  %v2806 = vld [vmem:[%s2790 + $0x78] sm:$0xff]
  %v2807 = vld [vmem:[%s2790 + $0x80] sm:$0xff]
  %v2808 = vld [vmem:[%s2790 + $0x88] sm:$0xff]
  %v2809 = vld [vmem:[%s2790 + $0x90] sm:$0xff]
  %v2810 = vld [vmem:[%s2790 + $0x98] sm:$0xff]
  %v2811 = vld [vmem:[%s2790 + $0xa0] sm:$0xff]
  %v2812 = vld [vmem:[%s2790 + $0xa8] sm:$0xff]
  %v2813 = vld [vmem:[%s2790 + $0xb0] sm:$0xff]
  %v2814 = vld [vmem:[%s2790 + $0xb8] sm:$0xff]
  %v2815 = vld [vmem:[%s2790 + $0xc0] sm:$0xff]
  %v2816 = vld [vmem:[%s2790 + $0xc8] sm:$0xff]
  %v2817 = vld [vmem:[%s2790 + $0xd0] sm:$0xff]
  %v2818 = vld [vmem:[%s2790 + $0xd8] sm:$0xff]
  %v2819 = vld [vmem:[%s2790 + $0xe0] sm:$0xff]
  %v2820 = vld [vmem:[%s2790 + $0xe8] sm:$0xff]
  %v2821 = vld [vmem:[%s2790 + $0xf0] sm:$0xff]
  %v2822 = vld [vmem:[%s2790 + $0xf8] sm:$0xff]
  %v2827 = vrot.slane %v2754, 1
  %v2828 = vrot.slane %v2756, 1
  %v2829 = vsel %vm2376, %v2827, %v2828
  %v2830 = vrot.slane %v2755, 1
  %v2831 = vrot.slane %v2757, 1
  %v2832 = vsel %vm2376, %v2830, %v2831
  %v2833 = vsel %vm2376, %v2828, %v2383
  %v2834 = vsel %vm2376, %v2831, %v2383
  %2839 = vmatprep.subr.bf16.mxu0 %v2792
  %2840 = vmatpush1.bf16.msra.mxu0 %v2791
  %2841 = vmatprep.subr.bf16.mxu0 %v2794
  %2842 = vmatpush1.bf16.msra.mxu0 %v2793
  %2843 = vmatprep.subr.bf16.mxu0 %v2796
  %2844 = vmatpush1.bf16.msra.mxu0 %v2795
  %2845 = vmatprep.subr.bf16.mxu0 %v2798
  %2846 = vmatpush1.bf16.msra.mxu0 %v2797
  %2847 = vmatprep.subr.bf16.mxu0 %v2800
  %2848 = vmatpush1.bf16.msra.mxu0 %v2799
  %2849 = vmatprep.subr.bf16.mxu0 %v2802
  %2850 = vmatpush1.bf16.msra.mxu0 %v2801
  %2851 = vmatprep.subr.bf16.mxu0 %v2804
  %2852 = vmatpush1.bf16.msra.mxu0 %v2803
  %2853 = vmatprep.subr.bf16.mxu0 %v2806
  %2854 = vmatpush1.bf16.msra.mxu0 %v2805
  %2855 = vmatprep.subr.bf16.mxu0 %v2808
  %2856 = vmatpush1.bf16.msra.mxu0 %v2807
  %2857 = vmatprep.subr.bf16.mxu0 %v2810
  %2858 = vmatpush1.bf16.msra.mxu0 %v2809
  %2859 = vmatprep.subr.bf16.mxu0 %v2812
  %2860 = vmatpush1.bf16.msra.mxu0 %v2811
  %2861 = vmatprep.subr.bf16.mxu0 %v2814
  %2862 = vmatpush1.bf16.msra.mxu0 %v2813
  %2863 = vmatprep.subr.bf16.mxu0 %v2816
  %2864 = vmatpush1.bf16.msra.mxu0 %v2815
  %2865 = vmatprep.subr.bf16.mxu0 %v2818
  %2866 = vmatpush1.bf16.msra.mxu0 %v2817
  %2867 = vmatprep.subr.bf16.mxu0 %v2820
  %2868 = vmatpush1.bf16.msra.mxu0 %v2819
  %2869 = vmatprep.subr.bf16.mxu0 %v2822
  %2870 = vmatpush1.bf16.msra.mxu0 %v2821
  %2871 = vmatprep.mubr.bf16.mxu0 %v2832
  %2872 = vmatmul.mubr.bf16.gmra.mrb[0].mxu0 %v2829
  %v2873 = vpop.f32.mrb[0].mxu0
  %v2874 = vadd.f32 0.0, %v2873
  %v2875 = vpop.f32.mrb[0].mxu0
  %v2876 = vadd.f32 0.0, %v2875
  %v2877 = vpop.f32.mrb[0].mxu0
  %v2878 = vadd.f32 0.0, %v2877
  %v2879 = vpop.f32.mrb[0].mxu0
  %v2880 = vadd.f32 0.0, %v2879
  %2881 = vmatprep.mubr.bf16.mxu0 %v2834
  %2882 = vmatmul.mubr.bf16.gmra.mrb[0].mxu0 %v2833
  %v2883 = vpop.f32.mrb[0].mxu0
  %v2884 = vadd.f32 0.0, %v2883
  %v2885 = vpop.f32.mrb[0].mxu0
  %v2886 = vadd.f32 0.0, %v2885
  %v2887 = vpop.f32.mrb[0].mxu0
  %v2888 = vadd.f32 0.0, %v2887
  %v2889 = vpop.f32.mrb[0].mxu0
  %v2890 = vadd.f32 0.0, %v2889
  %2891 = vdwg.mxu0
  %2892 = vmatprep.subr.bf16.mxu0 %v2759
  %2893 = vmatpush1.bf16.msra.mxu0 %v2758
  %2894 = vmatprep.subr.bf16.mxu0 %v2761
  %2895 = vmatpush1.bf16.msra.mxu0 %v2760
  %2896 = vmatprep.subr.bf16.mxu0 %v2763
  %2897 = vmatpush1.bf16.msra.mxu0 %v2762
  %2898 = vmatprep.subr.bf16.mxu0 %v2765
  %2899 = vmatpush1.bf16.msra.mxu0 %v2764
  %2900 = vmatprep.subr.bf16.mxu0 %v2767
  %2901 = vmatpush1.bf16.msra.mxu0 %v2766
  %2902 = vmatprep.subr.bf16.mxu0 %v2769
  %2903 = vmatpush1.bf16.msra.mxu0 %v2768
  %2904 = vmatprep.subr.bf16.mxu0 %v2771
  %2905 = vmatpush1.bf16.msra.mxu0 %v2770
  %2906 = vmatprep.subr.bf16.mxu0 %v2773
  %2907 = vmatpush1.bf16.msra.mxu0 %v2772
  %2908 = vmatprep.subr.bf16.mxu0 %v2775
  %2909 = vmatpush1.bf16.msra.mxu0 %v2774
  %2910 = vmatprep.subr.bf16.mxu0 %v2777
  %2911 = vmatpush1.bf16.msra.mxu0 %v2776
  %2912 = vmatprep.subr.bf16.mxu0 %v2779
  %2913 = vmatpush1.bf16.msra.mxu0 %v2778
  %2914 = vmatprep.subr.bf16.mxu0 %v2781
  %2915 = vmatpush1.bf16.msra.mxu0 %v2780
  %2916 = vmatprep.subr.bf16.mxu0 %v2783
  %2917 = vmatpush1.bf16.msra.mxu0 %v2782
  %2918 = vmatprep.subr.bf16.mxu0 %v2785
  %2919 = vmatpush1.bf16.msra.mxu0 %v2784
  %2920 = vmatprep.subr.bf16.mxu0 %v2787
  %2921 = vmatpush1.bf16.msra.mxu0 %v2786
  %2922 = vmatprep.subr.bf16.mxu0 %v2789
  %2923 = vmatpush1.bf16.msra.mxu0 %v2788
  %2924 = vmatprep.mubr.bf16.mxu0 %v2755
  %2925 = vmatmul.mubr.bf16.gmra.mrb[0].mxu0 %v2754
  %v2926 = vpop.f32.mrb[0].mxu0
  %v2927 = vadd.f32 %v2874, %v2926
  %v2928 = vpop.f32.mrb[0].mxu0
  %v2929 = vadd.f32 %v2876, %v2928
  %v2930 = vpop.f32.mrb[0].mxu0
  %v2931 = vadd.f32 %v2878, %v2930
  %v2932 = vpop.f32.mrb[0].mxu0
  %v2933 = vadd.f32 %v2880, %v2932
  %2934 = vmatprep.mubr.bf16.mxu0 %v2757
  %2935 = vmatmul.mubr.bf16.gmra.mrb[0].mxu0 %v2756
  %v2936 = vpop.f32.mrb[0].mxu0
  %v2937 = vadd.f32 %v2884, %v2936
  %v2938 = vpop.f32.mrb[0].mxu0
  %v2939 = vadd.f32 %v2886, %v2938
  %v2940 = vpop.f32.mrb[0].mxu0
  %v2941 = vadd.f32 %v2888, %v2940
  %v2942 = vpop.f32.mrb[0].mxu0
  %v2943 = vadd.f32 %v2890, %v2942
  %2944 = vdwg.mxu0
  %s2945 = scalar_lea.vmem [#allocation3], 512
  %v2946 = vld [vmem:[%s2945] sm:$0xff]
  %v2947 = vld [vmem:[%s2945 + $0x8] sm:$0xff]
  %v2948 = vld [vmem:[%s2945 + $0x10] sm:$0xff]
  %v2949 = vld [vmem:[%s2945 + $0x18] sm:$0xff]
  %v2950 = vld [vmem:[%s2945 + $0x20] sm:$0xff]
  %v2951 = vld [vmem:[%s2945 + $0x28] sm:$0xff]
  %v2952 = vld [vmem:[%s2945 + $0x30] sm:$0xff]
  %v2953 = vld [vmem:[%s2945 + $0x38] sm:$0xff]
  %v2954 = vld [vmem:[%s2945 + $0x40] sm:$0xff]
  %v2955 = vld [vmem:[%s2945 + $0x48] sm:$0xff]
  %v2956 = vld [vmem:[%s2945 + $0x50] sm:$0xff]
  %v2957 = vld [vmem:[%s2945 + $0x58] sm:$0xff]
  %v2958 = vld [vmem:[%s2945 + $0x60] sm:$0xff]
  %v2959 = vld [vmem:[%s2945 + $0x68] sm:$0xff]
  %v2960 = vld [vmem:[%s2945 + $0x70] sm:$0xff]
  %v2961 = vld [vmem:[%s2945 + $0x78] sm:$0xff]
  %v2962 = vld [vmem:[%s2945 + $0x80] sm:$0xff]
  %v2963 = vld [vmem:[%s2945 + $0x88] sm:$0xff]
  %v2964 = vld [vmem:[%s2945 + $0x90] sm:$0xff]
  %v2965 = vld [vmem:[%s2945 + $0x98] sm:$0xff]
  %v2966 = vld [vmem:[%s2945 + $0xa0] sm:$0xff]
  %v2967 = vld [vmem:[%s2945 + $0xa8] sm:$0xff]
  %v2968 = vld [vmem:[%s2945 + $0xb0] sm:$0xff]
  %v2969 = vld [vmem:[%s2945 + $0xb8] sm:$0xff]
  %v2970 = vld [vmem:[%s2945 + $0xc0] sm:$0xff]
  %v2971 = vld [vmem:[%s2945 + $0xc8] sm:$0xff]
  %v2972 = vld [vmem:[%s2945 + $0xd0] sm:$0xff]
  %v2973 = vld [vmem:[%s2945 + $0xd8] sm:$0xff]
  %v2974 = vld [vmem:[%s2945 + $0xe0] sm:$0xff]
  %v2975 = vld [vmem:[%s2945 + $0xe8] sm:$0xff]
  %v2976 = vld [vmem:[%s2945 + $0xf0] sm:$0xff]
  %v2977 = vld [vmem:[%s2945 + $0xf8] sm:$0xff]
  %v2978 = vrot.slane %v2754, 2
  %v2979 = vrot.slane %v2756, 2
  %v2980 = vsel %vm2529, %v2978, %v2979
  %v2981 = vrot.slane %v2755, 2
  %v2982 = vrot.slane %v2757, 2
  %v2983 = vsel %vm2529, %v2981, %v2982
  %v2984 = vsel %vm2529, %v2979, %v2536
  %v2985 = vsel %vm2529, %v2982, %v2536
  %2990 = vmatprep.subr.bf16.mxu0 %v2947
  %2991 = vmatpush1.bf16.msra.mxu0 %v2946
  %2992 = vmatprep.subr.bf16.mxu0 %v2949
  %2993 = vmatpush1.bf16.msra.mxu0 %v2948
  %2994 = vmatprep.subr.bf16.mxu0 %v2951
  %2995 = vmatpush1.bf16.msra.mxu0 %v2950
  %2996 = vmatprep.subr.bf16.mxu0 %v2953
  %2997 = vmatpush1.bf16.msra.mxu0 %v2952
  %2998 = vmatprep.subr.bf16.mxu0 %v2955
  %2999 = vmatpush1.bf16.msra.mxu0 %v2954
  %3000 = vmatprep.subr.bf16.mxu0 %v2957
  %3001 = vmatpush1.bf16.msra.mxu0 %v2956
  %3002 = vmatprep.subr.bf16.mxu0 %v2959
  %3003 = vmatpush1.bf16.msra.mxu0 %v2958
  %3004 = vmatprep.subr.bf16.mxu0 %v2961
  %3005 = vmatpush1.bf16.msra.mxu0 %v2960
  %3006 = vmatprep.subr.bf16.mxu0 %v2963
  %3007 = vmatpush1.bf16.msra.mxu0 %v2962
  %3008 = vmatprep.subr.bf16.mxu0 %v2965
  %3009 = vmatpush1.bf16.msra.mxu0 %v2964
  %3010 = vmatprep.subr.bf16.mxu0 %v2967
  %3011 = vmatpush1.bf16.msra.mxu0 %v2966
  %3012 = vmatprep.subr.bf16.mxu0 %v2969
  %3013 = vmatpush1.bf16.msra.mxu0 %v2968
  %3014 = vmatprep.subr.bf16.mxu0 %v2971
  %3015 = vmatpush1.bf16.msra.mxu0 %v2970
  %3016 = vmatprep.subr.bf16.mxu0 %v2973
  %3017 = vmatpush1.bf16.msra.mxu0 %v2972
  %3018 = vmatprep.subr.bf16.mxu0 %v2975
  %3019 = vmatpush1.bf16.msra.mxu0 %v2974
  %3020 = vmatprep.subr.bf16.mxu0 %v2977
  %3021 = vmatpush1.bf16.msra.mxu0 %v2976
  %3022 = vmatprep.mubr.bf16.mxu0 %v2983
  %3023 = vmatmul.mubr.bf16.gmra.mrb[0].mxu0 %v2980
  %v3024 = vpop.f32.mrb[0].mxu0
  %v3025 = vadd.f32 0.0, %v3024
  %v3026 = vpop.f32.mrb[0].mxu0
  %v3027 = vadd.f32 0.0, %v3026
  %v3028 = vpop.f32.mrb[0].mxu0
  %v3029 = vadd.f32 0.0, %v3028
  %v3030 = vpop.f32.mrb[0].mxu0
  %v3031 = vadd.f32 0.0, %v3030
  %3032 = vmatprep.mubr.bf16.mxu0 %v2985
  %3033 = vmatmul.mubr.bf16.gmra.mrb[0].mxu0 %v2984
  %v3034 = vpop.f32.mrb[0].mxu0
  %v3035 = vadd.f32 0.0, %v3034
  %v3036 = vpop.f32.mrb[0].mxu0
  %v3037 = vadd.f32 0.0, %v3036
  %v3038 = vpop.f32.mrb[0].mxu0
  %v3039 = vadd.f32 0.0, %v3038
  %v3040 = vpop.f32.mrb[0].mxu0
  %v3041 = vadd.f32 0.0, %v3040
  %3042 = vdwg.mxu0
  %v3043 = vadd.f32 %v2927, %v3025
  %v3044 = vadd.f32 %v2929, %v3027
  %v3045 = vadd.f32 %v2931, %v3029
  %v3046 = vadd.f32 %v2933, %v3031
  %v3047 = vadd.f32 %v2937, %v3035
  %v3048 = vadd.f32 %v2939, %v3037
  %v3049 = vadd.f32 %v2941, %v3039
  %v3050 = vadd.f32 %v2943, %v3041
  %v3051 = vlaneseq
  %v3052 = vshrl.u32 %v3051, 7
  %v3053 = vsub.s32 6, %v3052
  %v3054 = vrot.slane %v2009, %v3053
  %v3055 = vlaneseq
  %v3056 = vshrl.u32 %v3055, 7
  %v3057 = vsub.s32 6, %v3056
  %v3058 = vrot.slane %v2010, %v3057
  %v3059 = vadd.f32 %v3043, %v3054
  %v3060 = vadd.f32 %v3044, %v3058
  %v3061 = vadd.f32 %v3045, %v3054
  %v3062 = vadd.f32 %v3046, %v3058
  %v3063 = vadd.f32 %v3047, %v3054
  %v3064 = vadd.f32 %v3048, %v3058
  %v3065 = vadd.f32 %v3049, %v3054
  %v3066 = vadd.f32 %v3050, %v3058
  %v3067 = vadd.s32 %v2012, 32
  %v3068 = vadd.s32 %v2012, 40
  %v3069 = vadd.s32 %v2012, 48
  %v3070 = vadd.s32 %v2012, 56
  %v3071 = vadd.s32 %v2012, 64
  %v3072 = vadd.s32 %v2012, 72
  %v3073 = vadd.s32 %v2012, 80
  %v3074 = vadd.s32 %v2012, 88
  %v3075 = vadd.s32 %v2012, 96
  %v3076 = vadd.s32 %v2012, 104
  %v3077 = vadd.s32 %v2012, 112
  %v3078 = vadd.s32 %v2012, 120
  %v3079 = vadd.s32 %v2012, 128
  %v3080 = vadd.s32 %v2012, 136
  %v3081 = vadd.s32 %v2012, 144
  %v3082 = vadd.s32 %v2012, 152
  %v3083 = vadd.s32 %v2012, 160
  %v3084 = vadd.s32 %v2012, 168
  %v3085 = vadd.s32 %v2012, 176
  %v3086 = vadd.s32 %v2012, 184
  %v3087 = vadd.s32 %v2012, 192
  %v3088 = vadd.s32 %v2012, 200
  %v3089 = vadd.s32 %v2012, 208
  %v3090 = vadd.s32 %v2012, 216
  %v3091 = vadd.s32 %v2012, 224
  %v3092 = vadd.s32 %v2012, 232
  %v3093 = vadd.s32 %v2012, 240
  %v3094 = vadd.s32 %v2012, 248
  %v3095 = vlaneseq
  %v3096 = vand.u32 %v3095, 127
  %vm3097 = vcmp.lt.s32.totalorder %v2012, 0
  %v3098 = vsub.s32 0, %v2012
  %v3099 = vsel %vm3097, %v3098, %v2012
  %v3100 = vshrl.u32 %v3099, 5
  %v3101 = vand.u32 %v3099, 31
  %v3102 = vsub.s32 0, %v3101
  %v3103 = vsel %vm3097, %v3102, %v3101
  %vm3104 = vcmp.lt.s32.totalorder %v2013, 0
  %v3105 = vsub.s32 0, %v2013
  %v3106 = vsel %vm3104, %v3105, %v2013
  %v3107 = vshrl.u32 %v3106, 5
  %v3108 = vand.u32 %v3106, 31
  %v3109 = vsub.s32 0, %v3108
  %v3110 = vsel %vm3104, %v3109, %v3108
  %vm3111 = vcmp.lt.s32.totalorder %v2014, 0
  %v3112 = vsub.s32 0, %v2014
  %v3113 = vsel %vm3111, %v3112, %v2014
  %v3114 = vshrl.u32 %v3113, 5
  %v3115 = vand.u32 %v3113, 31
  %v3116 = vsub.s32 0, %v3115
  %v3117 = vsel %vm3111, %v3116, %v3115
  %vm3118 = vcmp.lt.s32.totalorder %v2015, 0
  %v3119 = vsub.s32 0, %v2015
  %v3120 = vsel %vm3118, %v3119, %v2015
  %v3121 = vshrl.u32 %v3120, 5
  %v3122 = vand.u32 %v3120, 31
  %v3123 = vsub.s32 0, %v3122
  %v3124 = vsel %vm3118, %v3123, %v3122
  %vm3125 = vcmp.lt.s32.totalorder %v3067, 0
  %v3126 = vsub.s32 0, %v3067
  %v3127 = vsel %vm3125, %v3126, %v3067
  %v3128 = vshrl.u32 %v3127, 5
  %v3129 = vand.u32 %v3127, 31
  %v3130 = vsub.s32 0, %v3129
  %v3131 = vsel %vm3125, %v3130, %v3129
  %vm3132 = vcmp.lt.s32.totalorder %v3068, 0
  %v3133 = vsub.s32 0, %v3068
  %v3134 = vsel %vm3132, %v3133, %v3068
  %v3135 = vshrl.u32 %v3134, 5
  %v3136 = vand.u32 %v3134, 31
  %v3137 = vsub.s32 0, %v3136
  %v3138 = vsel %vm3132, %v3137, %v3136
  %vm3139 = vcmp.lt.s32.totalorder %v3069, 0
  %v3140 = vsub.s32 0, %v3069
  %v3141 = vsel %vm3139, %v3140, %v3069
  %v3142 = vshrl.u32 %v3141, 5
  %v3143 = vand.u32 %v3141, 31
  %v3144 = vsub.s32 0, %v3143
  %v3145 = vsel %vm3139, %v3144, %v3143
  %vm3146 = vcmp.lt.s32.totalorder %v3070, 0
  %v3147 = vsub.s32 0, %v3070
  %v3148 = vsel %vm3146, %v3147, %v3070
  %v3149 = vshrl.u32 %v3148, 5
  %v3150 = vand.u32 %v3148, 31
  %v3151 = vsub.s32 0, %v3150
  %v3152 = vsel %vm3146, %v3151, %v3150
  %vm3153 = vcmp.lt.s32.totalorder %v3071, 0
  %v3154 = vsub.s32 0, %v3071
  %v3155 = vsel %vm3153, %v3154, %v3071
  %v3156 = vshrl.u32 %v3155, 5
  %v3157 = vand.u32 %v3155, 31
  %v3158 = vsub.s32 0, %v3157
  %v3159 = vsel %vm3153, %v3158, %v3157
  %vm3160 = vcmp.lt.s32.totalorder %v3072, 0
  %v3161 = vsub.s32 0, %v3072
  %v3162 = vsel %vm3160, %v3161, %v3072
  %v3163 = vshrl.u32 %v3162, 5
  %v3164 = vand.u32 %v3162, 31
  %v3165 = vsub.s32 0, %v3164
  %v3166 = vsel %vm3160, %v3165, %v3164
  %vm3167 = vcmp.lt.s32.totalorder %v3073, 0
  %v3168 = vsub.s32 0, %v3073
  %v3169 = vsel %vm3167, %v3168, %v3073
  %v3170 = vshrl.u32 %v3169, 5
  %v3171 = vand.u32 %v3169, 31
  %v3172 = vsub.s32 0, %v3171
  %v3173 = vsel %vm3167, %v3172, %v3171
  %vm3174 = vcmp.lt.s32.totalorder %v3074, 0
  %v3175 = vsub.s32 0, %v3074
  %v3176 = vsel %vm3174, %v3175, %v3074
  %v3177 = vshrl.u32 %v3176, 5
  %v3178 = vand.u32 %v3176, 31
  %v3179 = vsub.s32 0, %v3178
  %v3180 = vsel %vm3174, %v3179, %v3178
  %vm3181 = vcmp.lt.s32.totalorder %v3075, 0
  %v3182 = vsub.s32 0, %v3075
  %v3183 = vsel %vm3181, %v3182, %v3075
  %v3184 = vshrl.u32 %v3183, 5
  %v3185 = vand.u32 %v3183, 31
  %v3186 = vsub.s32 0, %v3185
  %v3187 = vsel %vm3181, %v3186, %v3185
  %vm3188 = vcmp.lt.s32.totalorder %v3076, 0
  %v3189 = vsub.s32 0, %v3076
  %v3190 = vsel %vm3188, %v3189, %v3076
  %v3191 = vshrl.u32 %v3190, 5
  %v3192 = vand.u32 %v3190, 31
  %v3193 = vsub.s32 0, %v3192
  %v3194 = vsel %vm3188, %v3193, %v3192
  %vm3195 = vcmp.lt.s32.totalorder %v3077, 0
  %v3196 = vsub.s32 0, %v3077
  %v3197 = vsel %vm3195, %v3196, %v3077
  %v3198 = vshrl.u32 %v3197, 5
  %v3199 = vand.u32 %v3197, 31
  %v3200 = vsub.s32 0, %v3199
  %v3201 = vsel %vm3195, %v3200, %v3199
  %vm3202 = vcmp.lt.s32.totalorder %v3078, 0
  %v3203 = vsub.s32 0, %v3078
  %v3204 = vsel %vm3202, %v3203, %v3078
  %v3205 = vshrl.u32 %v3204, 5
  %v3206 = vand.u32 %v3204, 31
  %v3207 = vsub.s32 0, %v3206
  %v3208 = vsel %vm3202, %v3207, %v3206
  %vm3209 = vcmp.lt.s32.totalorder %v3079, 0
  %v3210 = vsub.s32 0, %v3079
  %v3211 = vsel %vm3209, %v3210, %v3079
  %v3212 = vshrl.u32 %v3211, 5
  %v3213 = vand.u32 %v3211, 31
  %v3214 = vsub.s32 0, %v3213
  %v3215 = vsel %vm3209, %v3214, %v3213
  %vm3216 = vcmp.lt.s32.totalorder %v3080, 0
  %v3217 = vsub.s32 0, %v3080
  %v3218 = vsel %vm3216, %v3217, %v3080
  %v3219 = vshrl.u32 %v3218, 5
  %v3220 = vand.u32 %v3218, 31
  %v3221 = vsub.s32 0, %v3220
  %v3222 = vsel %vm3216, %v3221, %v3220
  %vm3223 = vcmp.lt.s32.totalorder %v3081, 0
  %v3224 = vsub.s32 0, %v3081
  %v3225 = vsel %vm3223, %v3224, %v3081
  %v3226 = vshrl.u32 %v3225, 5
  %v3227 = vand.u32 %v3225, 31
  %v3228 = vsub.s32 0, %v3227
  %v3229 = vsel %vm3223, %v3228, %v3227
  %vm3230 = vcmp.lt.s32.totalorder %v3082, 0
  %v3231 = vsub.s32 0, %v3082
  %v3232 = vsel %vm3230, %v3231, %v3082
  %v3233 = vshrl.u32 %v3232, 5
  %v3234 = vand.u32 %v3232, 31
  %v3235 = vsub.s32 0, %v3234
  %v3236 = vsel %vm3230, %v3235, %v3234
  %vm3237 = vcmp.lt.s32.totalorder %v3083, 0
  %v3238 = vsub.s32 0, %v3083
  %v3239 = vsel %vm3237, %v3238, %v3083
  %v3240 = vshrl.u32 %v3239, 5
  %v3241 = vand.u32 %v3239, 31
  %v3242 = vsub.s32 0, %v3241
  %v3243 = vsel %vm3237, %v3242, %v3241
  %vm3244 = vcmp.lt.s32.totalorder %v3084, 0
  %v3245 = vsub.s32 0, %v3084
  %v3246 = vsel %vm3244, %v3245, %v3084
  %v3247 = vshrl.u32 %v3246, 5
  %v3248 = vand.u32 %v3246, 31
  %v3249 = vsub.s32 0, %v3248
  %v3250 = vsel %vm3244, %v3249, %v3248
  %vm3251 = vcmp.lt.s32.totalorder %v3085, 0
  %v3252 = vsub.s32 0, %v3085
  %v3253 = vsel %vm3251, %v3252, %v3085
  %v3254 = vshrl.u32 %v3253, 5
  %v3255 = vand.u32 %v3253, 31
  %v3256 = vsub.s32 0, %v3255
  %v3257 = vsel %vm3251, %v3256, %v3255
  %vm3258 = vcmp.lt.s32.totalorder %v3086, 0
  %v3259 = vsub.s32 0, %v3086
  %v3260 = vsel %vm3258, %v3259, %v3086
  %v3261 = vshrl.u32 %v3260, 5
  %v3262 = vand.u32 %v3260, 31
  %v3263 = vsub.s32 0, %v3262
  %v3264 = vsel %vm3258, %v3263, %v3262
  %vm3265 = vcmp.lt.s32.totalorder %v3087, 0
  %v3266 = vsub.s32 0, %v3087
  %v3267 = vsel %vm3265, %v3266, %v3087
  %v3268 = vshrl.u32 %v3267, 5
  %v3269 = vand.u32 %v3267, 31
  %v3270 = vsub.s32 0, %v3269
  %v3271 = vsel %vm3265, %v3270, %v3269
  %vm3272 = vcmp.lt.s32.totalorder %v3088, 0
  %v3273 = vsub.s32 0, %v3088
  %v3274 = vsel %vm3272, %v3273, %v3088
  %v3275 = vshrl.u32 %v3274, 5
  %v3276 = vand.u32 %v3274, 31
  %v3277 = vsub.s32 0, %v3276
  %v3278 = vsel %vm3272, %v3277, %v3276
  %vm3279 = vcmp.lt.s32.totalorder %v3089, 0
  %v3280 = vsub.s32 0, %v3089
  %v3281 = vsel %vm3279, %v3280, %v3089
  %v3282 = vshrl.u32 %v3281, 5
  %v3283 = vand.u32 %v3281, 31
  %v3284 = vsub.s32 0, %v3283
  %v3285 = vsel %vm3279, %v3284, %v3283
  %vm3286 = vcmp.lt.s32.totalorder %v3090, 0
  %v3287 = vsub.s32 0, %v3090
  %v3288 = vsel %vm3286, %v3287, %v3090
  %v3289 = vshrl.u32 %v3288, 5
  %v3290 = vand.u32 %v3288, 31
  %v3291 = vsub.s32 0, %v3290
  %v3292 = vsel %vm3286, %v3291, %v3290
  %vm3293 = vcmp.lt.s32.totalorder %v3091, 0
  %v3294 = vsub.s32 0, %v3091
  %v3295 = vsel %vm3293, %v3294, %v3091
  %v3296 = vshrl.u32 %v3295, 5
  %v3297 = vand.u32 %v3295, 31
  %v3298 = vsub.s32 0, %v3297
  %v3299 = vsel %vm3293, %v3298, %v3297
  %vm3300 = vcmp.lt.s32.totalorder %v3092, 0
  %v3301 = vsub.s32 0, %v3092
  %v3302 = vsel %vm3300, %v3301, %v3092
  %v3303 = vshrl.u32 %v3302, 5
  %v3304 = vand.u32 %v3302, 31
  %v3305 = vsub.s32 0, %v3304
  %v3306 = vsel %vm3300, %v3305, %v3304
  %vm3307 = vcmp.lt.s32.totalorder %v3093, 0
  %v3308 = vsub.s32 0, %v3093
  %v3309 = vsel %vm3307, %v3308, %v3093
  %v3310 = vshrl.u32 %v3309, 5
  %v3311 = vand.u32 %v3309, 31
  %v3312 = vsub.s32 0, %v3311
  %v3313 = vsel %vm3307, %v3312, %v3311
  %vm3314 = vcmp.lt.s32.totalorder %v3094, 0
  %v3315 = vsub.s32 0, %v3094
  %v3316 = vsel %vm3314, %v3315, %v3094
  %v3317 = vshrl.u32 %v3316, 5
  %v3318 = vand.u32 %v3316, 31
  %v3319 = vsub.s32 0, %v3318
  %v3320 = vsel %vm3314, %v3319, %v3318
  %vm3321 = vcmp.ne.s32.totalorder %v3103, 0
  %vm3322 = vcmp.ne.s32.totalorder %v3110, 0
  %vm3323 = vcmp.ne.s32.totalorder %v3117, 0
  %vm3324 = vcmp.ne.s32.totalorder %v3124, 0
  %vm3325 = vcmp.ne.s32.totalorder %v3131, 0
  %vm3326 = vcmp.ne.s32.totalorder %v3138, 0
  %vm3327 = vcmp.ne.s32.totalorder %v3145, 0
  %vm3328 = vcmp.ne.s32.totalorder %v3152, 0
  %vm3329 = vcmp.ne.s32.totalorder %v3159, 0
  %vm3330 = vcmp.ne.s32.totalorder %v3166, 0
  %vm3331 = vcmp.ne.s32.totalorder %v3173, 0
  %vm3332 = vcmp.ne.s32.totalorder %v3180, 0
  %vm3333 = vcmp.ne.s32.totalorder %v3187, 0
  %vm3334 = vcmp.ne.s32.totalorder %v3194, 0
  %vm3335 = vcmp.ne.s32.totalorder %v3201, 0
  %vm3336 = vcmp.ne.s32.totalorder %v3208, 0
  %vm3337 = vcmp.ne.s32.totalorder %v3215, 0
  %vm3338 = vcmp.ne.s32.totalorder %v3222, 0
  %vm3339 = vcmp.ne.s32.totalorder %v3229, 0
  %vm3340 = vcmp.ne.s32.totalorder %v3236, 0
  %vm3341 = vcmp.ne.s32.totalorder %v3243, 0
  %vm3342 = vcmp.ne.s32.totalorder %v3250, 0
  %vm3343 = vcmp.ne.s32.totalorder %v3257, 0
  %vm3344 = vcmp.ne.s32.totalorder %v3264, 0
  %vm3345 = vcmp.ne.s32.totalorder %v3271, 0
  %vm3346 = vcmp.ne.s32.totalorder %v3278, 0
  %vm3347 = vcmp.ne.s32.totalorder %v3285, 0
  %vm3348 = vcmp.ne.s32.totalorder %v3292, 0
  %vm3349 = vcmp.ne.s32.totalorder %v3299, 0
  %vm3350 = vcmp.ne.s32.totalorder %v3306, 0
  %vm3351 = vcmp.ne.s32.totalorder %v3313, 0
  %vm3352 = vcmp.ne.s32.totalorder %v3320, 0
  %vm3353 = vcmp.lt.s32.totalorder %v3103, 0
  %vm3354 = vcmp.lt.s32.totalorder %v3110, 0
  %vm3355 = vcmp.lt.s32.totalorder %v3117, 0
  %vm3356 = vcmp.lt.s32.totalorder %v3124, 0
  %vm3357 = vcmp.lt.s32.totalorder %v3131, 0
  %vm3358 = vcmp.lt.s32.totalorder %v3138, 0
  %vm3359 = vcmp.lt.s32.totalorder %v3145, 0
  %vm3360 = vcmp.lt.s32.totalorder %v3152, 0
  %vm3361 = vcmp.lt.s32.totalorder %v3159, 0
  %vm3362 = vcmp.lt.s32.totalorder %v3166, 0
  %vm3363 = vcmp.lt.s32.totalorder %v3173, 0
  %vm3364 = vcmp.lt.s32.totalorder %v3180, 0
  %vm3365 = vcmp.lt.s32.totalorder %v3187, 0
  %vm3366 = vcmp.lt.s32.totalorder %v3194, 0
  %vm3367 = vcmp.lt.s32.totalorder %v3201, 0
  %vm3368 = vcmp.lt.s32.totalorder %v3208, 0
  %vm3369 = vcmp.lt.s32.totalorder %v3215, 0
  %vm3370 = vcmp.lt.s32.totalorder %v3222, 0
  %vm3371 = vcmp.lt.s32.totalorder %v3229, 0
  %vm3372 = vcmp.lt.s32.totalorder %v3236, 0
  %vm3373 = vcmp.lt.s32.totalorder %v3243, 0
  %vm3374 = vcmp.lt.s32.totalorder %v3250, 0
  %vm3375 = vcmp.lt.s32.totalorder %v3257, 0
  %vm3376 = vcmp.lt.s32.totalorder %v3264, 0
  %vm3377 = vcmp.lt.s32.totalorder %v3271, 0
  %vm3378 = vcmp.lt.s32.totalorder %v3278, 0
  %vm3379 = vcmp.lt.s32.totalorder %v3285, 0
  %vm3380 = vcmp.lt.s32.totalorder %v3292, 0
  %vm3381 = vcmp.lt.s32.totalorder %v3299, 0
  %vm3382 = vcmp.lt.s32.totalorder %v3306, 0
  %vm3383 = vcmp.lt.s32.totalorder %v3313, 0
  %vm3384 = vcmp.lt.s32.totalorder %v3320, 0
  %vm3385 = vmand %vm3353, %vm3321
  %vm3386 = vmand %vm3354, %vm3322
  %vm3387 = vmand %vm3355, %vm3323
  %vm3388 = vmand %vm3356, %vm3324
  %vm3389 = vmand %vm3357, %vm3325
  %vm3390 = vmand %vm3358, %vm3326
  %vm3391 = vmand %vm3359, %vm3327
  %vm3392 = vmand %vm3360, %vm3328
  %vm3393 = vmand %vm3361, %vm3329
  %vm3394 = vmand %vm3362, %vm3330
  %vm3395 = vmand %vm3363, %vm3331
  %vm3396 = vmand %vm3364, %vm3332
  %vm3397 = vmand %vm3365, %vm3333
  %vm3398 = vmand %vm3366, %vm3334
  %vm3399 = vmand %vm3367, %vm3335
  %vm3400 = vmand %vm3368, %vm3336
  %vm3401 = vmand %vm3369, %vm3337
  %vm3402 = vmand %vm3370, %vm3338
  %vm3403 = vmand %vm3371, %vm3339
  %vm3404 = vmand %vm3372, %vm3340
  %vm3405 = vmand %vm3373, %vm3341
  %vm3406 = vmand %vm3374, %vm3342
  %vm3407 = vmand %vm3375, %vm3343
  %vm3408 = vmand %vm3376, %vm3344
  %vm3409 = vmand %vm3377, %vm3345
  %vm3410 = vmand %vm3378, %vm3346
  %vm3411 = vmand %vm3379, %vm3347
  %vm3412 = vmand %vm3380, %vm3348
  %vm3413 = vmand %vm3381, %vm3349
  %vm3414 = vmand %vm3382, %vm3350
  %vm3415 = vmand %vm3383, %vm3351
  %vm3416 = vmand %vm3384, %vm3352
  %v3417 = vadd.s32 %v3103, 32
  %v3418 = vadd.s32 %v3110, 32
  %v3419 = vadd.s32 %v3117, 32
  %v3420 = vadd.s32 %v3124, 32
  %v3421 = vadd.s32 %v3131, 32
  %v3422 = vadd.s32 %v3138, 32
  %v3423 = vadd.s32 %v3145, 32
  %v3424 = vadd.s32 %v3152, 32
  %v3425 = vadd.s32 %v3159, 32
  %v3426 = vadd.s32 %v3166, 32
  %v3427 = vadd.s32 %v3173, 32
  %v3428 = vadd.s32 %v3180, 32
  %v3429 = vadd.s32 %v3187, 32
  %v3430 = vadd.s32 %v3194, 32
  %v3431 = vadd.s32 %v3201, 32
  %v3432 = vadd.s32 %v3208, 32
  %v3433 = vadd.s32 %v3215, 32
  %v3434 = vadd.s32 %v3222, 32
  %v3435 = vadd.s32 %v3229, 32
  %v3436 = vadd.s32 %v3236, 32
  %v3437 = vadd.s32 %v3243, 32
  %v3438 = vadd.s32 %v3250, 32
  %v3439 = vadd.s32 %v3257, 32
  %v3440 = vadd.s32 %v3264, 32
  %v3441 = vadd.s32 %v3271, 32
  %v3442 = vadd.s32 %v3278, 32
  %v3443 = vadd.s32 %v3285, 32
  %v3444 = vadd.s32 %v3292, 32
  %v3445 = vadd.s32 %v3299, 32
  %v3446 = vadd.s32 %v3306, 32
  %v3447 = vadd.s32 %v3313, 32
  %v3448 = vadd.s32 %v3320, 32
  %v3449 = vsel %vm3385, %v3417, %v3103
  %v3450 = vsel %vm3386, %v3418, %v3110
  %v3451 = vsel %vm3387, %v3419, %v3117
  %v3452 = vsel %vm3388, %v3420, %v3124
  %v3453 = vsel %vm3389, %v3421, %v3131
  %v3454 = vsel %vm3390, %v3422, %v3138
  %v3455 = vsel %vm3391, %v3423, %v3145
  %v3456 = vsel %vm3392, %v3424, %v3152
  %v3457 = vsel %vm3393, %v3425, %v3159
  %v3458 = vsel %vm3394, %v3426, %v3166
  %v3459 = vsel %vm3395, %v3427, %v3173
  %v3460 = vsel %vm3396, %v3428, %v3180
  %v3461 = vsel %vm3397, %v3429, %v3187
  %v3462 = vsel %vm3398, %v3430, %v3194
  %v3463 = vsel %vm3399, %v3431, %v3201
  %v3464 = vsel %vm3400, %v3432, %v3208
  %v3465 = vsel %vm3401, %v3433, %v3215
  %v3466 = vsel %vm3402, %v3434, %v3222
  %v3467 = vsel %vm3403, %v3435, %v3229
  %v3468 = vsel %vm3404, %v3436, %v3236
  %v3469 = vsel %vm3405, %v3437, %v3243
  %v3470 = vsel %vm3406, %v3438, %v3250
  %v3471 = vsel %vm3407, %v3439, %v3257
  %v3472 = vsel %vm3408, %v3440, %v3264
  %v3473 = vsel %vm3409, %v3441, %v3271
  %v3474 = vsel %vm3410, %v3442, %v3278
  %v3475 = vsel %vm3411, %v3443, %v3285
  %v3476 = vsel %vm3412, %v3444, %v3292
  %v3477 = vsel %vm3413, %v3445, %v3299
  %v3478 = vsel %vm3414, %v3446, %v3306
  %v3479 = vsel %vm3415, %v3447, %v3313
  %v3480 = vsel %vm3416, %v3448, %v3320
  %vm3481 = vcmp.eq.s32.totalorder %v3449, %v3096
  %vm3482 = vcmp.eq.s32.totalorder %v3450, %v3096
  %vm3483 = vcmp.eq.s32.totalorder %v3451, %v3096
  %vm3484 = vcmp.eq.s32.totalorder %v3452, %v3096
  %vm3485 = vcmp.eq.s32.totalorder %v3453, %v3096
  %vm3486 = vcmp.eq.s32.totalorder %v3454, %v3096
  %vm3487 = vcmp.eq.s32.totalorder %v3455, %v3096
  %vm3488 = vcmp.eq.s32.totalorder %v3456, %v3096
  %vm3489 = vcmp.eq.s32.totalorder %v3457, %v3096
  %vm3490 = vcmp.eq.s32.totalorder %v3458, %v3096
  %vm3491 = vcmp.eq.s32.totalorder %v3459, %v3096
  %vm3492 = vcmp.eq.s32.totalorder %v3460, %v3096
  %vm3493 = vcmp.eq.s32.totalorder %v3461, %v3096
  %vm3494 = vcmp.eq.s32.totalorder %v3462, %v3096
  %vm3495 = vcmp.eq.s32.totalorder %v3463, %v3096
  %vm3496 = vcmp.eq.s32.totalorder %v3464, %v3096
  %vm3497 = vcmp.eq.s32.totalorder %v3465, %v3096
  %vm3498 = vcmp.eq.s32.totalorder %v3466, %v3096
  %vm3499 = vcmp.eq.s32.totalorder %v3467, %v3096
  %vm3500 = vcmp.eq.s32.totalorder %v3468, %v3096
  %vm3501 = vcmp.eq.s32.totalorder %v3469, %v3096
  %vm3502 = vcmp.eq.s32.totalorder %v3470, %v3096
  %vm3503 = vcmp.eq.s32.totalorder %v3471, %v3096
  %vm3504 = vcmp.eq.s32.totalorder %v3472, %v3096
  %vm3505 = vcmp.eq.s32.totalorder %v3473, %v3096
  %vm3506 = vcmp.eq.s32.totalorder %v3474, %v3096
  %vm3507 = vcmp.eq.s32.totalorder %v3475, %v3096
  %vm3508 = vcmp.eq.s32.totalorder %v3476, %v3096
  %vm3509 = vcmp.eq.s32.totalorder %v3477, %v3096
  %vm3510 = vcmp.eq.s32.totalorder %v3478, %v3096
  %vm3511 = vcmp.eq.s32.totalorder %v3479, %v3096
  %vm3512 = vcmp.eq.s32.totalorder %v3480, %v3096
  %v3513 = vsel %vm3481, 1, 0
  %v3514 = vsel %vm3482, 1, 0
  %v3515 = vsel %vm3483, 1, 0
  %v3516 = vsel %vm3484, 1, 0
  %v3517 = vsel %vm3485, 1, 0
  %v3518 = vsel %vm3486, 1, 0
  %v3519 = vsel %vm3487, 1, 0
  %v3520 = vsel %vm3488, 1, 0
  %v3521 = vsel %vm3489, 1, 0
  %v3522 = vsel %vm3490, 1, 0
  %v3523 = vsel %vm3491, 1, 0
  %v3524 = vsel %vm3492, 1, 0
  %v3525 = vsel %vm3493, 1, 0
  %v3526 = vsel %vm3494, 1, 0
  %v3527 = vsel %vm3495, 1, 0
  %v3528 = vsel %vm3496, 1, 0
  %v3529 = vsel %vm3497, 1, 0
  %v3530 = vsel %vm3498, 1, 0
  %v3531 = vsel %vm3499, 1, 0
  %v3532 = vsel %vm3500, 1, 0
  %v3533 = vsel %vm3501, 1, 0
  %v3534 = vsel %vm3502, 1, 0
  %v3535 = vsel %vm3503, 1, 0
  %v3536 = vsel %vm3504, 1, 0
  %v3537 = vsel %vm3505, 1, 0
  %v3538 = vsel %vm3506, 1, 0
  %v3539 = vsel %vm3507, 1, 0
  %v3540 = vsel %vm3508, 1, 0
  %v3541 = vsel %vm3509, 1, 0
  %v3542 = vsel %vm3510, 1, 0
  %v3543 = vsel %vm3511, 1, 0
  %v3544 = vsel %vm3512, 1, 0
  %v3545 = vcvt.s32.f32 %v3513
  %v3546 = vcvt.s32.f32 %v3514
  %v3547 = vcvt.s32.f32 %v3515
  %v3548 = vcvt.s32.f32 %v3516
  %v3549 = vcvt.s32.f32 %v3517
  %v3550 = vcvt.s32.f32 %v3518
  %v3551 = vcvt.s32.f32 %v3519
  %v3552 = vcvt.s32.f32 %v3520
  %v3553 = vcvt.s32.f32 %v3521
  %v3554 = vcvt.s32.f32 %v3522
  %v3555 = vcvt.s32.f32 %v3523
  %v3556 = vcvt.s32.f32 %v3524
  %v3557 = vcvt.s32.f32 %v3525
  %v3558 = vcvt.s32.f32 %v3526
  %v3559 = vcvt.s32.f32 %v3527
  %v3560 = vcvt.s32.f32 %v3528
  %v3561 = vcvt.s32.f32 %v3529
  %v3562 = vcvt.s32.f32 %v3530
  %v3563 = vcvt.s32.f32 %v3531
  %v3564 = vcvt.s32.f32 %v3532
  %v3565 = vcvt.s32.f32 %v3533
  %v3566 = vcvt.s32.f32 %v3534
  %v3567 = vcvt.s32.f32 %v3535
  %v3568 = vcvt.s32.f32 %v3536
  %v3569 = vcvt.s32.f32 %v3537
  %v3570 = vcvt.s32.f32 %v3538
  %v3571 = vcvt.s32.f32 %v3539
  %v3572 = vcvt.s32.f32 %v3540
  %v3573 = vcvt.s32.f32 %v3541
  %v3574 = vcvt.s32.f32 %v3542
  %v3575 = vcvt.s32.f32 %v3543
  %v3576 = vcvt.s32.f32 %v3544
  %v3577 = vadd.s32 %v3096, 128
  %vm3578 = vcmp.lt.s32.totalorder %v3096, 0
  %v3579 = vsub.s32 0, %v3096
  %v3580 = vsel %vm3578, %v3579, %v3096
  %v3581 = vshrl.u32 %v3580, 5
  %v3582 = vand.u32 %v3580, 31
  %v3583 = vsub.s32 0, %v3582
  %v3584 = vsel %vm3578, %v3583, %v3582
  %vm3585 = vcmp.lt.s32.totalorder %v3577, 0
  %v3586 = vsub.s32 0, %v3577
  %v3587 = vsel %vm3585, %v3586, %v3577
  %v3588 = vshrl.u32 %v3587, 5
  %v3589 = vand.u32 %v3587, 31
  %v3590 = vsub.s32 0, %v3589
  %v3591 = vsel %vm3585, %v3590, %v3589
  %vm3592 = vcmp.ne.s32.totalorder %v3584, 0
  %vm3593 = vcmp.ne.s32.totalorder %v3591, 0
  %vm3594 = vcmp.lt.s32.totalorder %v3584, 0
  %vm3595 = vcmp.lt.s32.totalorder %v3591, 0
  %vm3596 = vmand %vm3594, %vm3592
  %vm3597 = vmand %vm3595, %vm3593
  %v3598 = vadd.s32 %v3584, 32
  %v3599 = vadd.s32 %v3591, 32
  %v3600 = vsel %vm3596, %v3598, %v3584
  %v3601 = vsel %vm3597, %v3599, %v3591
  %vm3602 = vcmp.eq.s32.totalorder %v2012, %v3600
  %vm3603 = vcmp.eq.s32.totalorder %v2012, %v3601
  %vm3604 = vcmp.eq.s32.totalorder %v2013, %v3600
  %vm3605 = vcmp.eq.s32.totalorder %v2013, %v3601
  %vm3606 = vcmp.eq.s32.totalorder %v2014, %v3600
  %vm3607 = vcmp.eq.s32.totalorder %v2014, %v3601
  %vm3608 = vcmp.eq.s32.totalorder %v2015, %v3600
  %vm3609 = vcmp.eq.s32.totalorder %v2015, %v3601
  %v3610 = vsel %vm3602, 1, 0
  %v3611 = vsel %vm3603, 1, 0
  %v3612 = vsel %vm3604, 1, 0
  %v3613 = vsel %vm3605, 1, 0
  %v3614 = vsel %vm3606, 1, 0
  %v3615 = vsel %vm3607, 1, 0
  %v3616 = vsel %vm3608, 1, 0
  %v3617 = vsel %vm3609, 1, 0
  %v3618 = vcvt.s32.f32 %v3610
  %v3619 = vcvt.s32.f32 %v3611
  %v3620 = vcvt.s32.f32 %v3612
  %v3621 = vcvt.s32.f32 %v3613
  %v3622 = vcvt.s32.f32 %v3614
  %v3623 = vcvt.s32.f32 %v3615
  %v3624 = vcvt.s32.f32 %v3616
  %v3625 = vcvt.s32.f32 %v3617
  %v3626 = vmul.f32 %v3059, %v3059
  %v3627 = vmul.f32 %v3060, %v3060
  %v3628 = vmul.f32 %v3061, %v3061
  %v3629 = vmul.f32 %v3062, %v3062
  %v3630 = vmul.f32 %v3063, %v3063
  %v3631 = vmul.f32 %v3064, %v3064
  %v3632 = vmul.f32 %v3065, %v3065
  %v3633 = vmul.f32 %v3066, %v3066
  %3634 = vmatprep.subr.mxu0 0.0
  %3635 = vmatpush1.msra.mxu0 %v3545
  %3636 = vmatprep.subr.mxu0 0.0
  %3637 = vmatpush1.msra.mxu0 %v3546
  %3638 = vmatprep.subr.mxu0 0.0
  %3639 = vmatpush1.msra.mxu0 %v3547
  %3640 = vmatprep.subr.mxu0 0.0
  %3641 = vmatpush1.msra.mxu0 %v3548
  %3642 = vmatprep.subr.mxu0 0.0
  %3643 = vmatpush1.msra.mxu0 %v3549
  %3644 = vmatprep.subr.mxu0 0.0
  %3645 = vmatpush1.msra.mxu0 %v3550
  %3646 = vmatprep.subr.mxu0 0.0
  %3647 = vmatpush1.msra.mxu0 %v3551
  %3648 = vmatprep.subr.mxu0 0.0
  %3649 = vmatpush1.msra.mxu0 %v3552
  %3650 = vmatprep.subr.mxu0 0.0
  %3651 = vmatpush1.msra.mxu0 %v3553
  %3652 = vmatprep.subr.mxu0 0.0
  %3653 = vmatpush1.msra.mxu0 %v3554
  %3654 = vmatprep.subr.mxu0 0.0
  %3655 = vmatpush1.msra.mxu0 %v3555
  %3656 = vmatprep.subr.mxu0 0.0
  %3657 = vmatpush1.msra.mxu0 %v3556
  %3658 = vmatprep.subr.mxu0 0.0
  %3659 = vmatpush1.msra.mxu0 %v3557
  %3660 = vmatprep.subr.mxu0 0.0
  %3661 = vmatpush1.msra.mxu0 %v3558
  %3662 = vmatprep.subr.mxu0 0.0
  %3663 = vmatpush1.msra.mxu0 %v3559
  %3664 = vmatprep.subr.mxu0 0.0
  %3665 = vmatpush1.msra.mxu0 %v3560
  %3666 = vmatprep.subr.mxu0 0.0
  %3667 = vmatpush1.msra.mxu0 %v3561
  %3668 = vmatprep.subr.mxu0 0.0
  %3669 = vmatpush1.msra.mxu0 %v3562
  %3670 = vmatprep.subr.mxu0 0.0
  %3671 = vmatpush1.msra.mxu0 %v3563
  %3672 = vmatprep.subr.mxu0 0.0
  %3673 = vmatpush1.msra.mxu0 %v3564
  %3674 = vmatprep.subr.mxu0 0.0
  %3675 = vmatpush1.msra.mxu0 %v3565
  %3676 = vmatprep.subr.mxu0 0.0
  %3677 = vmatpush1.msra.mxu0 %v3566
  %3678 = vmatprep.subr.mxu0 0.0
  %3679 = vmatpush1.msra.mxu0 %v3567
  %3680 = vmatprep.subr.mxu0 0.0
  %3681 = vmatpush1.msra.mxu0 %v3568
  %3682 = vmatprep.subr.mxu0 0.0
  %3683 = vmatpush1.msra.mxu0 %v3569
  %3684 = vmatprep.subr.mxu0 0.0
  %3685 = vmatpush1.msra.mxu0 %v3570
  %3686 = vmatprep.subr.mxu0 0.0
  %3687 = vmatpush1.msra.mxu0 %v3571
  %3688 = vmatprep.subr.mxu0 0.0
  %3689 = vmatpush1.msra.mxu0 %v3572
  %3690 = vmatprep.subr.mxu0 0.0
  %3691 = vmatpush1.msra.mxu0 %v3573
  %3692 = vmatprep.subr.mxu0 0.0
  %3693 = vmatpush1.msra.mxu0 %v3574
  %3694 = vmatprep.subr.mxu0 0.0
  %3695 = vmatpush1.msra.mxu0 %v3575
  %3696 = vmatprep.subr.mxu0 0.0
  %3697 = vmatpush1.msra.mxu0 %v3576
  %3698 = vmatprep.mubr.f32.mxu0 %v3627
  %3699 = vmatmul.mubr.f32.gmra.mrb[0].mxu0 %v3626
  %v3700 = vpop.f32.mrb[0].mxu0
  %v3701 = vadd.f32 0.0, %v3700
  %v3702 = vpop.f32.mrb[0].mxu0
  %3703 = vmatprep.mubr.f32.mxu0 %v3629
  %3704 = vmatmul.mubr.f32.gmra.mrb[0].mxu0 %v3628
  %v3705 = vpop.f32.mrb[0].mxu0
  %v3706 = vadd.f32 0.0, %v3705
  %v3707 = vpop.f32.mrb[0].mxu0
  %3708 = vmatprep.mubr.f32.mxu0 %v3631
  %3709 = vmatmul.mubr.f32.gmra.mrb[0].mxu0 %v3630
  %v3710 = vpop.f32.mrb[0].mxu0
  %v3711 = vadd.f32 0.0, %v3710
  %v3712 = vpop.f32.mrb[0].mxu0
  %3713 = vmatprep.mubr.f32.mxu0 %v3633
  %3714 = vmatmul.mubr.f32.gmra.mrb[0].mxu0 %v3632
  %v3715 = vpop.f32.mrb[0].mxu0
  %v3716 = vadd.f32 0.0, %v3715
  %v3717 = vpop.f32.mrb[0].mxu0
  %3718 = vdwg.mxu0
  %v3719 = vadd.f32 %v3701, 1e-12
  %v3720 = vadd.f32 %v3706, 1e-12
  %v3721 = vadd.f32 %v3711, 1e-12
  %v3722 = vadd.f32 %v3716, 1e-12
  %v3723 = vrsqrt.pop %v3719
  %v3724 = vrsqrt.pop %v3720
  %v3725 = vrsqrt.pop %v3721
  %v3726 = vrsqrt.pop %v3722
  %v3727 = vmul.f32 %v3701, %v3723
  %v3728 = vmul.f32 %v3706, %v3724
  %v3729 = vmul.f32 %v3711, %v3725
  %v3730 = vmul.f32 %v3716, %v3726
  %v3731 = vadd.f32 %v3701, 1.0
  %v3732 = vadd.f32 %v3706, 1.0
  %v3733 = vadd.f32 %v3711, 1.0
  %v3734 = vadd.f32 %v3716, 1.0
  %v3735 = vrcp.pop %v3731
  %v3736 = vmul.f32 %v3727, %v3735
  %v3737 = vrcp.pop %v3732
  %v3738 = vmul.f32 %v3728, %v3737
  %v3739 = vrcp.pop %v3733
  %v3740 = vmul.f32 %v3729, %v3739
  %v3741 = vrcp.pop %v3734
  %v3742 = vmul.f32 %v3730, %v3741
  %vm3743 = vcmask 261120
  %v3745 = vsel %vm3743, %v3736, 0
  %v3748 = vsel %vm3743, %v3738, 0
  %v3751 = vsel %vm3743, %v3740, 0
  %v3754 = vsel %vm3743, %v3742, 0
  %3756 = vmatprep.subr.mxu0 %v3619
  %3757 = vmatpush1.msra.mxu0 %v3618
  %3758 = vmatprep.subr.mxu0 %v3621
  %3759 = vmatpush1.msra.mxu0 %v3620
  %3760 = vmatprep.subr.mxu0 %v3623
  %3761 = vmatpush1.msra.mxu0 %v3622
  %3762 = vmatprep.subr.mxu0 %v3625
  %3763 = vmatpush1.msra.mxu0 %v3624
  %3764 = vmatprep.subr.mxu0 0.0
  %3765 = vmatpush1.msra.mxu0 0.0
  %3766 = vmatprep.subr.mxu0 0.0
  %3767 = vmatpush1.msra.mxu0 0.0
  %3768 = vmatprep.subr.mxu0 0.0
  %3769 = vmatpush1.msra.mxu0 0.0
  %3770 = vmatprep.subr.mxu0 0.0
  %3771 = vmatpush1.msra.mxu0 0.0
  %3772 = vmatprep.subr.mxu0 0.0
  %3773 = vmatpush1.msra.mxu0 0.0
  %3774 = vmatprep.subr.mxu0 0.0
  %3775 = vmatpush1.msra.mxu0 0.0
  %3776 = vmatprep.subr.mxu0 0.0
  %3777 = vmatpush1.msra.mxu0 0.0
  %3778 = vmatprep.subr.mxu0 0.0
  %3779 = vmatpush1.msra.mxu0 0.0
  %3780 = vmatprep.subr.mxu0 0.0
  %3781 = vmatpush1.msra.mxu0 0.0
  %3782 = vmatprep.subr.mxu0 0.0
  %3783 = vmatpush1.msra.mxu0 0.0
  %3784 = vmatprep.subr.mxu0 0.0
  %3785 = vmatpush1.msra.mxu0 0.0
  %3786 = vmatprep.subr.mxu0 0.0
  %3787 = vmatpush1.msra.mxu0 0.0
  %3788 = vmatprep.subr.mxu0 0.0
  %3789 = vmatpush1.msra.mxu0 0.0
  %3790 = vmatprep.subr.mxu0 0.0
  %3791 = vmatpush1.msra.mxu0 0.0
  %3792 = vmatprep.subr.mxu0 0.0
  %3793 = vmatpush1.msra.mxu0 0.0
  %3794 = vmatprep.subr.mxu0 0.0
  %3795 = vmatpush1.msra.mxu0 0.0
  %3796 = vmatprep.subr.mxu0 0.0
  %3797 = vmatpush1.msra.mxu0 0.0
  %3798 = vmatprep.subr.mxu0 0.0
  %3799 = vmatpush1.msra.mxu0 0.0
  %3800 = vmatprep.subr.mxu0 0.0
  %3801 = vmatpush1.msra.mxu0 0.0
  %3802 = vmatprep.subr.mxu0 0.0
  %3803 = vmatpush1.msra.mxu0 0.0
  %3804 = vmatprep.subr.mxu0 0.0
  %3805 = vmatpush1.msra.mxu0 0.0
  %3806 = vmatprep.subr.mxu0 0.0
  %3807 = vmatpush1.msra.mxu0 0.0
  %3808 = vmatprep.subr.mxu0 0.0
  %3809 = vmatpush1.msra.mxu0 0.0
  %3810 = vmatprep.subr.mxu0 0.0
  %3811 = vmatpush1.msra.mxu0 0.0
  %3812 = vmatprep.subr.mxu0 0.0
  %3813 = vmatpush1.msra.mxu0 0.0
  %3814 = vmatprep.subr.mxu0 0.0
  %3815 = vmatpush1.msra.mxu0 0.0
  %3816 = vmatprep.subr.mxu0 0.0
  %3817 = vmatpush1.msra.mxu0 0.0
  %3818 = vmatprep.subr.mxu0 0.0
  %3819 = vmatpush1.msra.mxu0 0.0
  %3820 = vmatprep.mubr.f32.mxu0 0.0
  %3821 = vmatmul.mubr.f32.gmra.mrb[0].mxu0 %v3745
  %v3822 = vpop.f32.mrb[0].mxu0
  %v3823 = vadd.f32 0.0, %v3822
  %v3824 = vpop.f32.mrb[0].mxu0
  %v3825 = vadd.f32 0.0, %v3824
  %3826 = vmatprep.mubr.f32.mxu0 0.0
  %3827 = vmatmul.mubr.f32.gmra.mrb[0].mxu0 %v3748
  %v3828 = vpop.f32.mrb[0].mxu0
  %v3829 = vadd.f32 0.0, %v3828
  %v3830 = vpop.f32.mrb[0].mxu0
  %v3831 = vadd.f32 0.0, %v3830
  %3832 = vmatprep.mubr.f32.mxu0 0.0
  %3833 = vmatmul.mubr.f32.gmra.mrb[0].mxu0 %v3751
  %v3834 = vpop.f32.mrb[0].mxu0
  %v3835 = vadd.f32 0.0, %v3834
  %v3836 = vpop.f32.mrb[0].mxu0
  %v3837 = vadd.f32 0.0, %v3836
  %3838 = vmatprep.mubr.f32.mxu0 0.0
  %3839 = vmatmul.mubr.f32.gmra.mrb[0].mxu0 %v3754
  %v3840 = vpop.f32.mrb[0].mxu0
  %v3841 = vpop.f32.mrb[0].mxu0
  %3842 = vdwg.mxu0
  %v3843 = vmul.f32 %v3059, %v3823
  %v3844 = vmul.f32 %v3060, %v3825
  %v3845 = vmul.f32 %v3061, %v3829
  %v3846 = vmul.f32 %v3062, %v3831
  %v3847 = vmul.f32 %v3063, %v3835
  %v3848 = vmul.f32 %v3064, %v3837
  %s3849 = smul.u32 4, 10
  %s3850 = smul.u32 %s3849, 32
  %s3851 = smul.u32 %s3850, 1
  %s3852 = sshll.u32 %s3851, 4
  %3853 = dma.done %s1648, %s3852
  %v3854 = vpack.c.bf16 %v3845, %v3843
  %v3855 = vpack.c.bf16 %v3846, %v3844
  %v3856 = vpack.c.bf16 %v3847, %v3847
  %v3857 = vpack.c.bf16 %v3848, %v3848
  %v3858 = vld [vmem:[#allocation4] sm:$0xff]
  %v3859 = vld [vmem:[#allocation4 + $0x8] sm:$0xff]
  %v3860 = vld [vmem:[#allocation4 + $0x10] sm:$0xff]
  %v3861 = vld [vmem:[#allocation4 + $0x18] sm:$0xff]
  %v3862 = vld [vmem:[#allocation4 + $0x20] sm:$0xff]
  %v3863 = vld [vmem:[#allocation4 + $0x28] sm:$0xff]
  %v3864 = vld [vmem:[#allocation4 + $0x30] sm:$0xff]
  %v3865 = vld [vmem:[#allocation4 + $0x38] sm:$0xff]
  %v3866 = vld [vmem:[#allocation4 + $0x40] sm:$0xff]
  %v3867 = vld [vmem:[#allocation4 + $0x48] sm:$0xff]
  %v3868 = vld [vmem:[#allocation4 + $0x50] sm:$0xff]
  %v3869 = vld [vmem:[#allocation4 + $0x58] sm:$0xff]
  %v3870 = vld [vmem:[#allocation4 + $0x60] sm:$0xff]
  %v3871 = vld [vmem:[#allocation4 + $0x68] sm:$0xff]
  %v3872 = vld [vmem:[#allocation4 + $0x70] sm:$0xff]
  %v3873 = vld [vmem:[#allocation4 + $0x78] sm:$0xff]
  %s3874 = scalar_lea.vmem [#allocation4], 128
  %v3875 = vld [vmem:[%s3874] sm:$0xff]
  %v3876 = vld [vmem:[%s3874 + $0x8] sm:$0xff]
  %v3877 = vld [vmem:[%s3874 + $0x10] sm:$0xff]
  %v3878 = vld [vmem:[%s3874 + $0x18] sm:$0xff]
  %v3879 = vld [vmem:[%s3874 + $0x20] sm:$0xff]
  %v3880 = vld [vmem:[%s3874 + $0x28] sm:$0xff]
  %v3881 = vld [vmem:[%s3874 + $0x30] sm:$0xff]
  %v3882 = vld [vmem:[%s3874 + $0x38] sm:$0xff]
  %v3883 = vld [vmem:[%s3874 + $0x40] sm:$0xff]
  %v3884 = vld [vmem:[%s3874 + $0x48] sm:$0xff]
  %v3885 = vld [vmem:[%s3874 + $0x50] sm:$0xff]
  %v3886 = vld [vmem:[%s3874 + $0x58] sm:$0xff]
  %v3887 = vld [vmem:[%s3874 + $0x60] sm:$0xff]
  %v3888 = vld [vmem:[%s3874 + $0x68] sm:$0xff]
  %v3889 = vld [vmem:[%s3874 + $0x70] sm:$0xff]
  %v3890 = vld [vmem:[%s3874 + $0x78] sm:$0xff]
  %v3893 = vrot.slane %v3854, 1
  %v3894 = vrot.slane %v3855, 1
  %3897 = vmatprep.subr.bf16.mxu0 0
  %3898 = vmatpush1.bf16.msra.mxu0 %v3875
  %3899 = vmatprep.subr.bf16.mxu0 0
  %3900 = vmatpush1.bf16.msra.mxu0 %v3876
  %3901 = vmatprep.subr.bf16.mxu0 0
  %3902 = vmatpush1.bf16.msra.mxu0 %v3877
  %3903 = vmatprep.subr.bf16.mxu0 0
  %3904 = vmatpush1.bf16.msra.mxu0 %v3878
  %3905 = vmatprep.subr.bf16.mxu0 0
  %3906 = vmatpush1.bf16.msra.mxu0 %v3879
  %3907 = vmatprep.subr.bf16.mxu0 0
  %3908 = vmatpush1.bf16.msra.mxu0 %v3880
  %3909 = vmatprep.subr.bf16.mxu0 0
  %3910 = vmatpush1.bf16.msra.mxu0 %v3881
  %3911 = vmatprep.subr.bf16.mxu0 0
  %3912 = vmatpush1.bf16.msra.mxu0 %v3882
  %3913 = vmatprep.subr.bf16.mxu0 0
  %3914 = vmatpush1.bf16.msra.mxu0 %v3883
  %3915 = vmatprep.subr.bf16.mxu0 0
  %3916 = vmatpush1.bf16.msra.mxu0 %v3884
  %3917 = vmatprep.subr.bf16.mxu0 0
  %3918 = vmatpush1.bf16.msra.mxu0 %v3885
  %3919 = vmatprep.subr.bf16.mxu0 0
  %3920 = vmatpush1.bf16.msra.mxu0 %v3886
  %3921 = vmatprep.subr.bf16.mxu0 0
  %3922 = vmatpush1.bf16.msra.mxu0 %v3887
  %3923 = vmatprep.subr.bf16.mxu0 0
  %3924 = vmatpush1.bf16.msra.mxu0 %v3888
  %3925 = vmatprep.subr.bf16.mxu0 0
  %3926 = vmatpush1.bf16.msra.mxu0 %v3889
  %3927 = vmatprep.subr.bf16.mxu0 0
  %3928 = vmatpush1.bf16.msra.mxu0 %v3890
  %3929 = vmatprep.mubr.bf16.mxu0 %v3894
  %3930 = vmatmul.mubr.bf16.gmra.mrb[0].mxu0 %v3893
  %v3931 = vpop.f32.mrb[0].mxu0
  %v3932 = vadd.f32 0.0, %v3931
  %v3933 = vpop.f32.mrb[0].mxu0
  %v3934 = vpop.f32.mrb[0].mxu0
  %v3935 = vpop.f32.mrb[0].mxu0
  %3936 = vdwg.mxu0
  %3937 = vmatprep.subr.bf16.mxu0 0
  %3938 = vmatpush1.bf16.msra.mxu0 %v3858
  %3939 = vmatprep.subr.bf16.mxu0 0
  %3940 = vmatpush1.bf16.msra.mxu0 %v3859
  %3941 = vmatprep.subr.bf16.mxu0 0
  %3942 = vmatpush1.bf16.msra.mxu0 %v3860
  %3943 = vmatprep.subr.bf16.mxu0 0
  %3944 = vmatpush1.bf16.msra.mxu0 %v3861
  %3945 = vmatprep.subr.bf16.mxu0 0
  %3946 = vmatpush1.bf16.msra.mxu0 %v3862
  %3947 = vmatprep.subr.bf16.mxu0 0
  %3948 = vmatpush1.bf16.msra.mxu0 %v3863
  %3949 = vmatprep.subr.bf16.mxu0 0
  %3950 = vmatpush1.bf16.msra.mxu0 %v3864
  %3951 = vmatprep.subr.bf16.mxu0 0
  %3952 = vmatpush1.bf16.msra.mxu0 %v3865
  %3953 = vmatprep.subr.bf16.mxu0 0
  %3954 = vmatpush1.bf16.msra.mxu0 %v3866
  %3955 = vmatprep.subr.bf16.mxu0 0
  %3956 = vmatpush1.bf16.msra.mxu0 %v3867
  %3957 = vmatprep.subr.bf16.mxu0 0
  %3958 = vmatpush1.bf16.msra.mxu0 %v3868
  %3959 = vmatprep.subr.bf16.mxu0 0
  %3960 = vmatpush1.bf16.msra.mxu0 %v3869
  %3961 = vmatprep.subr.bf16.mxu0 0
  %3962 = vmatpush1.bf16.msra.mxu0 %v3870
  %3963 = vmatprep.subr.bf16.mxu0 0
  %3964 = vmatpush1.bf16.msra.mxu0 %v3871
  %3965 = vmatprep.subr.bf16.mxu0 0
  %3966 = vmatpush1.bf16.msra.mxu0 %v3872
  %3967 = vmatprep.subr.bf16.mxu0 0
  %3968 = vmatpush1.bf16.msra.mxu0 %v3873
  %3969 = vmatprep.mubr.bf16.mxu0 %v3855
  %3970 = vmatmul.mubr.bf16.gmra.mrb[0].mxu0 %v3854
  %v3971 = vpop.f32.mrb[0].mxu0
  %v3972 = vadd.f32 %v3932, %v3971
  %v3973 = vpop.f32.mrb[0].mxu0
  %v3974 = vpop.f32.mrb[0].mxu0
  %v3975 = vpop.f32.mrb[0].mxu0
  %3976 = vdwg.mxu0
  %s3977 = scalar_lea.vmem [#allocation4], 256
  %v3978 = vld [vmem:[%s3977] sm:$0xff]
  %v3979 = vld [vmem:[%s3977 + $0x8] sm:$0xff]
  %v3980 = vld [vmem:[%s3977 + $0x10] sm:$0xff]
  %v3981 = vld [vmem:[%s3977 + $0x18] sm:$0xff]
  %v3982 = vld [vmem:[%s3977 + $0x20] sm:$0xff]
  %v3983 = vld [vmem:[%s3977 + $0x28] sm:$0xff]
  %v3984 = vld [vmem:[%s3977 + $0x30] sm:$0xff]
  %v3985 = vld [vmem:[%s3977 + $0x38] sm:$0xff]
  %v3986 = vld [vmem:[%s3977 + $0x40] sm:$0xff]
  %v3987 = vld [vmem:[%s3977 + $0x48] sm:$0xff]
  %v3988 = vld [vmem:[%s3977 + $0x50] sm:$0xff]
  %v3989 = vld [vmem:[%s3977 + $0x58] sm:$0xff]
  %v3990 = vld [vmem:[%s3977 + $0x60] sm:$0xff]
  %v3991 = vld [vmem:[%s3977 + $0x68] sm:$0xff]
  %v3992 = vld [vmem:[%s3977 + $0x70] sm:$0xff]
  %v3993 = vld [vmem:[%s3977 + $0x78] sm:$0xff]
  %v3994 = vrot.slane %v3854, 2
  %v3995 = vrot.slane %v3855, 2
  %3998 = vmatprep.subr.bf16.mxu0 0
  %3999 = vmatpush1.bf16.msra.mxu0 %v3978
  %4000 = vmatprep.subr.bf16.mxu0 0
  %4001 = vmatpush1.bf16.msra.mxu0 %v3979
  %4002 = vmatprep.subr.bf16.mxu0 0
  %4003 = vmatpush1.bf16.msra.mxu0 %v3980
  %4004 = vmatprep.subr.bf16.mxu0 0
  %4005 = vmatpush1.bf16.msra.mxu0 %v3981
  %4006 = vmatprep.subr.bf16.mxu0 0
  %4007 = vmatpush1.bf16.msra.mxu0 %v3982
  %4008 = vmatprep.subr.bf16.mxu0 0
  %4009 = vmatpush1.bf16.msra.mxu0 %v3983
  %4010 = vmatprep.subr.bf16.mxu0 0
  %4011 = vmatpush1.bf16.msra.mxu0 %v3984
  %4012 = vmatprep.subr.bf16.mxu0 0
  %4013 = vmatpush1.bf16.msra.mxu0 %v3985
  %4014 = vmatprep.subr.bf16.mxu0 0
  %4015 = vmatpush1.bf16.msra.mxu0 %v3986
  %4016 = vmatprep.subr.bf16.mxu0 0
  %4017 = vmatpush1.bf16.msra.mxu0 %v3987
  %4018 = vmatprep.subr.bf16.mxu0 0
  %4019 = vmatpush1.bf16.msra.mxu0 %v3988
  %4020 = vmatprep.subr.bf16.mxu0 0
  %4021 = vmatpush1.bf16.msra.mxu0 %v3989
  %4022 = vmatprep.subr.bf16.mxu0 0
  %4023 = vmatpush1.bf16.msra.mxu0 %v3990
  %4024 = vmatprep.subr.bf16.mxu0 0
  %4025 = vmatpush1.bf16.msra.mxu0 %v3991
  %4026 = vmatprep.subr.bf16.mxu0 0
  %4027 = vmatpush1.bf16.msra.mxu0 %v3992
  %4028 = vmatprep.subr.bf16.mxu0 0
  %4029 = vmatpush1.bf16.msra.mxu0 %v3993
  %4030 = vmatprep.mubr.bf16.mxu0 %v3995
  %4031 = vmatmul.mubr.bf16.gmra.mrb[0].mxu0 %v3994
  %v4032 = vpop.f32.mrb[0].mxu0
  %v4033 = vadd.f32 0.0, %v4032
  %v4034 = vpop.f32.mrb[0].mxu0
  %v4035 = vpop.f32.mrb[0].mxu0
  %v4036 = vpop.f32.mrb[0].mxu0
  %4037 = vdwg.mxu0
  %v4038 = vadd.f32 %v3972, %v4033
  %s4039 = scalar_lea.vmem [#allocation4], 384
  %v4040 = vld [vmem:[%s4039] sm:$0xff]
  %v4041 = vld [vmem:[%s4039 + $0x8] sm:$0xff]
  %v4042 = vld [vmem:[%s4039 + $0x10] sm:$0xff]
  %v4043 = vld [vmem:[%s4039 + $0x18] sm:$0xff]
  %v4044 = vld [vmem:[%s4039 + $0x20] sm:$0xff]
  %v4045 = vld [vmem:[%s4039 + $0x28] sm:$0xff]
  %v4046 = vld [vmem:[%s4039 + $0x30] sm:$0xff]
  %v4047 = vld [vmem:[%s4039 + $0x38] sm:$0xff]
  %v4048 = vld [vmem:[%s4039 + $0x40] sm:$0xff]
  %v4049 = vld [vmem:[%s4039 + $0x48] sm:$0xff]
  %v4050 = vld [vmem:[%s4039 + $0x50] sm:$0xff]
  %v4051 = vld [vmem:[%s4039 + $0x58] sm:$0xff]
  %v4052 = vld [vmem:[%s4039 + $0x60] sm:$0xff]
  %v4053 = vld [vmem:[%s4039 + $0x68] sm:$0xff]
  %v4054 = vld [vmem:[%s4039 + $0x70] sm:$0xff]
  %v4055 = vld [vmem:[%s4039 + $0x78] sm:$0xff]
  %v4056 = vrot.slane %v3854, 3
  %v4057 = vrot.slane %v3855, 3
  %4060 = vmatprep.subr.bf16.mxu0 0
  %4061 = vmatpush1.bf16.msra.mxu0 %v4040
  %4062 = vmatprep.subr.bf16.mxu0 0
  %4063 = vmatpush1.bf16.msra.mxu0 %v4041
  %4064 = vmatprep.subr.bf16.mxu0 0
  %4065 = vmatpush1.bf16.msra.mxu0 %v4042
  %4066 = vmatprep.subr.bf16.mxu0 0
  %4067 = vmatpush1.bf16.msra.mxu0 %v4043
  %4068 = vmatprep.subr.bf16.mxu0 0
  %4069 = vmatpush1.bf16.msra.mxu0 %v4044
  %4070 = vmatprep.subr.bf16.mxu0 0
  %4071 = vmatpush1.bf16.msra.mxu0 %v4045
  %4072 = vmatprep.subr.bf16.mxu0 0
  %4073 = vmatpush1.bf16.msra.mxu0 %v4046
  %4074 = vmatprep.subr.bf16.mxu0 0
  %4075 = vmatpush1.bf16.msra.mxu0 %v4047
  %4076 = vmatprep.subr.bf16.mxu0 0
  %4077 = vmatpush1.bf16.msra.mxu0 %v4048
  %4078 = vmatprep.subr.bf16.mxu0 0
  %4079 = vmatpush1.bf16.msra.mxu0 %v4049
  %4080 = vmatprep.subr.bf16.mxu0 0
  %4081 = vmatpush1.bf16.msra.mxu0 %v4050
  %4082 = vmatprep.subr.bf16.mxu0 0
  %4083 = vmatpush1.bf16.msra.mxu0 %v4051
  %4084 = vmatprep.subr.bf16.mxu0 0
  %4085 = vmatpush1.bf16.msra.mxu0 %v4052
  %4086 = vmatprep.subr.bf16.mxu0 0
  %4087 = vmatpush1.bf16.msra.mxu0 %v4053
  %4088 = vmatprep.subr.bf16.mxu0 0
  %4089 = vmatpush1.bf16.msra.mxu0 %v4054
  %4090 = vmatprep.subr.bf16.mxu0 0
  %4091 = vmatpush1.bf16.msra.mxu0 %v4055
  %4092 = vmatprep.mubr.bf16.mxu0 %v4057
  %4093 = vmatmul.mubr.bf16.gmra.mrb[0].mxu0 %v4056
  %v4094 = vpop.f32.mrb[0].mxu0
  %v4095 = vadd.f32 0.0, %v4094
  %v4096 = vpop.f32.mrb[0].mxu0
  %v4097 = vpop.f32.mrb[0].mxu0
  %v4098 = vpop.f32.mrb[0].mxu0
  %4099 = vdwg.mxu0
  %v4100 = vadd.f32 %v4038, %v4095
  %s4101 = scalar_lea.vmem [#allocation4], 512
  %v4102 = vld [vmem:[%s4101] sm:$0xff]
  %v4103 = vld [vmem:[%s4101 + $0x8] sm:$0xff]
  %v4104 = vld [vmem:[%s4101 + $0x10] sm:$0xff]
  %v4105 = vld [vmem:[%s4101 + $0x18] sm:$0xff]
  %v4106 = vld [vmem:[%s4101 + $0x20] sm:$0xff]
  %v4107 = vld [vmem:[%s4101 + $0x28] sm:$0xff]
  %v4108 = vld [vmem:[%s4101 + $0x30] sm:$0xff]
  %v4109 = vld [vmem:[%s4101 + $0x38] sm:$0xff]
  %v4110 = vld [vmem:[%s4101 + $0x40] sm:$0xff]
  %v4111 = vld [vmem:[%s4101 + $0x48] sm:$0xff]
  %v4112 = vld [vmem:[%s4101 + $0x50] sm:$0xff]
  %v4113 = vld [vmem:[%s4101 + $0x58] sm:$0xff]
  %v4114 = vld [vmem:[%s4101 + $0x60] sm:$0xff]
  %v4115 = vld [vmem:[%s4101 + $0x68] sm:$0xff]
  %v4116 = vld [vmem:[%s4101 + $0x70] sm:$0xff]
  %v4117 = vld [vmem:[%s4101 + $0x78] sm:$0xff]
  %v4118 = vrot.slane %v3854, 4
  %v4119 = vrot.slane %v3855, 4
  %4122 = vmatprep.subr.bf16.mxu0 0
  %4123 = vmatpush1.bf16.msra.mxu0 %v4102
  %4124 = vmatprep.subr.bf16.mxu0 0
  %4125 = vmatpush1.bf16.msra.mxu0 %v4103
  %4126 = vmatprep.subr.bf16.mxu0 0
  %4127 = vmatpush1.bf16.msra.mxu0 %v4104
  %4128 = vmatprep.subr.bf16.mxu0 0
  %4129 = vmatpush1.bf16.msra.mxu0 %v4105
  %4130 = vmatprep.subr.bf16.mxu0 0
  %4131 = vmatpush1.bf16.msra.mxu0 %v4106
  %4132 = vmatprep.subr.bf16.mxu0 0
  %4133 = vmatpush1.bf16.msra.mxu0 %v4107
  %4134 = vmatprep.subr.bf16.mxu0 0
  %4135 = vmatpush1.bf16.msra.mxu0 %v4108
  %4136 = vmatprep.subr.bf16.mxu0 0
  %4137 = vmatpush1.bf16.msra.mxu0 %v4109
  %4138 = vmatprep.subr.bf16.mxu0 0
  %4139 = vmatpush1.bf16.msra.mxu0 %v4110
  %4140 = vmatprep.subr.bf16.mxu0 0
  %4141 = vmatpush1.bf16.msra.mxu0 %v4111
  %4142 = vmatprep.subr.bf16.mxu0 0
  %4143 = vmatpush1.bf16.msra.mxu0 %v4112
  %4144 = vmatprep.subr.bf16.mxu0 0
  %4145 = vmatpush1.bf16.msra.mxu0 %v4113
  %4146 = vmatprep.subr.bf16.mxu0 0
  %4147 = vmatpush1.bf16.msra.mxu0 %v4114
  %4148 = vmatprep.subr.bf16.mxu0 0
  %4149 = vmatpush1.bf16.msra.mxu0 %v4115
  %4150 = vmatprep.subr.bf16.mxu0 0
  %4151 = vmatpush1.bf16.msra.mxu0 %v4116
  %4152 = vmatprep.subr.bf16.mxu0 0
  %4153 = vmatpush1.bf16.msra.mxu0 %v4117
  %4154 = vmatprep.mubr.bf16.mxu0 %v4119
  %4155 = vmatmul.mubr.bf16.gmra.mrb[0].mxu0 %v4118
  %v4156 = vpop.f32.mrb[0].mxu0
  %v4157 = vadd.f32 0.0, %v4156
  %v4158 = vpop.f32.mrb[0].mxu0
  %v4159 = vpop.f32.mrb[0].mxu0
  %v4160 = vpop.f32.mrb[0].mxu0
  %4161 = vdwg.mxu0
  %v4162 = vadd.f32 %v4100, %v4157
  %s4163 = scalar_lea.vmem [#allocation4], 640
  %v4164 = vld [vmem:[%s4163] sm:$0xff]
  %v4165 = vld [vmem:[%s4163 + $0x8] sm:$0xff]
  %v4166 = vld [vmem:[%s4163 + $0x10] sm:$0xff]
  %v4167 = vld [vmem:[%s4163 + $0x18] sm:$0xff]
  %v4168 = vld [vmem:[%s4163 + $0x20] sm:$0xff]
  %v4169 = vld [vmem:[%s4163 + $0x28] sm:$0xff]
  %v4170 = vld [vmem:[%s4163 + $0x30] sm:$0xff]
  %v4171 = vld [vmem:[%s4163 + $0x38] sm:$0xff]
  %v4172 = vld [vmem:[%s4163 + $0x40] sm:$0xff]
  %v4173 = vld [vmem:[%s4163 + $0x48] sm:$0xff]
  %v4174 = vld [vmem:[%s4163 + $0x50] sm:$0xff]
  %v4175 = vld [vmem:[%s4163 + $0x58] sm:$0xff]
  %v4176 = vld [vmem:[%s4163 + $0x60] sm:$0xff]
  %v4177 = vld [vmem:[%s4163 + $0x68] sm:$0xff]
  %v4178 = vld [vmem:[%s4163 + $0x70] sm:$0xff]
  %v4179 = vld [vmem:[%s4163 + $0x78] sm:$0xff]
  %v4180 = vrot.slane %v3854, 5
  %v4181 = vrot.slane %v3855, 5
  %4184 = vmatprep.subr.bf16.mxu0 0
  %4185 = vmatpush1.bf16.msra.mxu0 %v4164
  %4186 = vmatprep.subr.bf16.mxu0 0
  %4187 = vmatpush1.bf16.msra.mxu0 %v4165
  %4188 = vmatprep.subr.bf16.mxu0 0
  %4189 = vmatpush1.bf16.msra.mxu0 %v4166
  %4190 = vmatprep.subr.bf16.mxu0 0
  %4191 = vmatpush1.bf16.msra.mxu0 %v4167
  %4192 = vmatprep.subr.bf16.mxu0 0
  %4193 = vmatpush1.bf16.msra.mxu0 %v4168
  %4194 = vmatprep.subr.bf16.mxu0 0
  %4195 = vmatpush1.bf16.msra.mxu0 %v4169
  %4196 = vmatprep.subr.bf16.mxu0 0
  %4197 = vmatpush1.bf16.msra.mxu0 %v4170
  %4198 = vmatprep.subr.bf16.mxu0 0
  %4199 = vmatpush1.bf16.msra.mxu0 %v4171
  %4200 = vmatprep.subr.bf16.mxu0 0
  %4201 = vmatpush1.bf16.msra.mxu0 %v4172
  %4202 = vmatprep.subr.bf16.mxu0 0
  %4203 = vmatpush1.bf16.msra.mxu0 %v4173
  %4204 = vmatprep.subr.bf16.mxu0 0
  %4205 = vmatpush1.bf16.msra.mxu0 %v4174
  %4206 = vmatprep.subr.bf16.mxu0 0
  %4207 = vmatpush1.bf16.msra.mxu0 %v4175
  %4208 = vmatprep.subr.bf16.mxu0 0
  %4209 = vmatpush1.bf16.msra.mxu0 %v4176
  %4210 = vmatprep.subr.bf16.mxu0 0
  %4211 = vmatpush1.bf16.msra.mxu0 %v4177
  %4212 = vmatprep.subr.bf16.mxu0 0
  %4213 = vmatpush1.bf16.msra.mxu0 %v4178
  %4214 = vmatprep.subr.bf16.mxu0 0
  %4215 = vmatpush1.bf16.msra.mxu0 %v4179
  %4216 = vmatprep.mubr.bf16.mxu0 %v4181
  %4217 = vmatmul.mubr.bf16.gmra.mrb[0].mxu0 %v4180
  %v4218 = vpop.f32.mrb[0].mxu0
  %v4219 = vadd.f32 0.0, %v4218
  %v4220 = vpop.f32.mrb[0].mxu0
  %v4221 = vpop.f32.mrb[0].mxu0
  %v4222 = vpop.f32.mrb[0].mxu0
  %4223 = vdwg.mxu0
  %v4224 = vadd.f32 %v4162, %v4219
  %s4225 = scalar_lea.vmem [#allocation4], 768
  %v4226 = vld [vmem:[%s4225] sm:$0xff]
  %v4227 = vld [vmem:[%s4225 + $0x8] sm:$0xff]
  %v4228 = vld [vmem:[%s4225 + $0x10] sm:$0xff]
  %v4229 = vld [vmem:[%s4225 + $0x18] sm:$0xff]
  %v4230 = vld [vmem:[%s4225 + $0x20] sm:$0xff]
  %v4231 = vld [vmem:[%s4225 + $0x28] sm:$0xff]
  %v4232 = vld [vmem:[%s4225 + $0x30] sm:$0xff]
  %v4233 = vld [vmem:[%s4225 + $0x38] sm:$0xff]
  %v4234 = vld [vmem:[%s4225 + $0x40] sm:$0xff]
  %v4235 = vld [vmem:[%s4225 + $0x48] sm:$0xff]
  %v4236 = vld [vmem:[%s4225 + $0x50] sm:$0xff]
  %v4237 = vld [vmem:[%s4225 + $0x58] sm:$0xff]
  %v4238 = vld [vmem:[%s4225 + $0x60] sm:$0xff]
  %v4239 = vld [vmem:[%s4225 + $0x68] sm:$0xff]
  %v4240 = vld [vmem:[%s4225 + $0x70] sm:$0xff]
  %v4241 = vld [vmem:[%s4225 + $0x78] sm:$0xff]
  %v4242 = vrot.slane %v3854, 6
  %v4243 = vrot.slane %v3855, 6
  %4246 = vmatprep.subr.bf16.mxu0 0
  %4247 = vmatpush1.bf16.msra.mxu0 %v4226
  %4248 = vmatprep.subr.bf16.mxu0 0
  %4249 = vmatpush1.bf16.msra.mxu0 %v4227
  %4250 = vmatprep.subr.bf16.mxu0 0
  %4251 = vmatpush1.bf16.msra.mxu0 %v4228
  %4252 = vmatprep.subr.bf16.mxu0 0
  %4253 = vmatpush1.bf16.msra.mxu0 %v4229
  %4254 = vmatprep.subr.bf16.mxu0 0
  %4255 = vmatpush1.bf16.msra.mxu0 %v4230
  %4256 = vmatprep.subr.bf16.mxu0 0
  %4257 = vmatpush1.bf16.msra.mxu0 %v4231
  %4258 = vmatprep.subr.bf16.mxu0 0
  %4259 = vmatpush1.bf16.msra.mxu0 %v4232
  %4260 = vmatprep.subr.bf16.mxu0 0
  %4261 = vmatpush1.bf16.msra.mxu0 %v4233
  %4262 = vmatprep.subr.bf16.mxu0 0
  %4263 = vmatpush1.bf16.msra.mxu0 %v4234
  %4264 = vmatprep.subr.bf16.mxu0 0
  %4265 = vmatpush1.bf16.msra.mxu0 %v4235
  %4266 = vmatprep.subr.bf16.mxu0 0
  %4267 = vmatpush1.bf16.msra.mxu0 %v4236
  %4268 = vmatprep.subr.bf16.mxu0 0
  %4269 = vmatpush1.bf16.msra.mxu0 %v4237
  %4270 = vmatprep.subr.bf16.mxu0 0
  %4271 = vmatpush1.bf16.msra.mxu0 %v4238
  %4272 = vmatprep.subr.bf16.mxu0 0
  %4273 = vmatpush1.bf16.msra.mxu0 %v4239
  %4274 = vmatprep.subr.bf16.mxu0 0
  %4275 = vmatpush1.bf16.msra.mxu0 %v4240
  %4276 = vmatprep.subr.bf16.mxu0 0
  %4277 = vmatpush1.bf16.msra.mxu0 %v4241
  %4278 = vmatprep.mubr.bf16.mxu0 %v4243
  %4279 = vmatmul.mubr.bf16.gmra.mrb[0].mxu0 %v4242
  %v4280 = vpop.f32.mrb[0].mxu0
  %v4281 = vadd.f32 0.0, %v4280
  %v4282 = vpop.f32.mrb[0].mxu0
  %v4283 = vpop.f32.mrb[0].mxu0
  %v4284 = vpop.f32.mrb[0].mxu0
  %4285 = vdwg.mxu0
  %v4286 = vadd.f32 %v4224, %v4281
  %s4287 = scalar_lea.vmem [#allocation4], 896
  %v4288 = vld [vmem:[%s4287] sm:$0xff]
  %v4289 = vld [vmem:[%s4287 + $0x8] sm:$0xff]
  %v4290 = vld [vmem:[%s4287 + $0x10] sm:$0xff]
  %v4291 = vld [vmem:[%s4287 + $0x18] sm:$0xff]
  %v4292 = vld [vmem:[%s4287 + $0x20] sm:$0xff]
  %v4293 = vld [vmem:[%s4287 + $0x28] sm:$0xff]
  %v4294 = vld [vmem:[%s4287 + $0x30] sm:$0xff]
  %v4295 = vld [vmem:[%s4287 + $0x38] sm:$0xff]
  %v4296 = vld [vmem:[%s4287 + $0x40] sm:$0xff]
  %v4297 = vld [vmem:[%s4287 + $0x48] sm:$0xff]
  %v4298 = vld [vmem:[%s4287 + $0x50] sm:$0xff]
  %v4299 = vld [vmem:[%s4287 + $0x58] sm:$0xff]
  %v4300 = vld [vmem:[%s4287 + $0x60] sm:$0xff]
  %v4301 = vld [vmem:[%s4287 + $0x68] sm:$0xff]
  %v4302 = vld [vmem:[%s4287 + $0x70] sm:$0xff]
  %v4303 = vld [vmem:[%s4287 + $0x78] sm:$0xff]
  %v4304 = vrot.slane %v3854, 7
  %v4305 = vrot.slane %v3855, 7
  %4308 = vmatprep.subr.bf16.mxu0 0
  %4309 = vmatpush1.bf16.msra.mxu0 %v4288
  %4310 = vmatprep.subr.bf16.mxu0 0
  %4311 = vmatpush1.bf16.msra.mxu0 %v4289
  %4312 = vmatprep.subr.bf16.mxu0 0
  %4313 = vmatpush1.bf16.msra.mxu0 %v4290
  %4314 = vmatprep.subr.bf16.mxu0 0
  %4315 = vmatpush1.bf16.msra.mxu0 %v4291
  %4316 = vmatprep.subr.bf16.mxu0 0
  %4317 = vmatpush1.bf16.msra.mxu0 %v4292
  %4318 = vmatprep.subr.bf16.mxu0 0
  %4319 = vmatpush1.bf16.msra.mxu0 %v4293
  %4320 = vmatprep.subr.bf16.mxu0 0
  %4321 = vmatpush1.bf16.msra.mxu0 %v4294
  %4322 = vmatprep.subr.bf16.mxu0 0
  %4323 = vmatpush1.bf16.msra.mxu0 %v4295
  %4324 = vmatprep.subr.bf16.mxu0 0
  %4325 = vmatpush1.bf16.msra.mxu0 %v4296
  %4326 = vmatprep.subr.bf16.mxu0 0
  %4327 = vmatpush1.bf16.msra.mxu0 %v4297
  %4328 = vmatprep.subr.bf16.mxu0 0
  %4329 = vmatpush1.bf16.msra.mxu0 %v4298
  %4330 = vmatprep.subr.bf16.mxu0 0
  %4331 = vmatpush1.bf16.msra.mxu0 %v4299
  %4332 = vmatprep.subr.bf16.mxu0 0
  %4333 = vmatpush1.bf16.msra.mxu0 %v4300
  %4334 = vmatprep.subr.bf16.mxu0 0
  %4335 = vmatpush1.bf16.msra.mxu0 %v4301
  %4336 = vmatprep.subr.bf16.mxu0 0
  %4337 = vmatpush1.bf16.msra.mxu0 %v4302
  %4338 = vmatprep.subr.bf16.mxu0 0
  %4339 = vmatpush1.bf16.msra.mxu0 %v4303
  %4340 = vmatprep.mubr.bf16.mxu0 %v4305
  %4341 = vmatmul.mubr.bf16.gmra.mrb[0].mxu0 %v4304
  %v4342 = vpop.f32.mrb[0].mxu0
  %v4343 = vadd.f32 0.0, %v4342
  %v4344 = vpop.f32.mrb[0].mxu0
  %v4345 = vpop.f32.mrb[0].mxu0
  %v4346 = vpop.f32.mrb[0].mxu0
  %4347 = vdwg.mxu0
  %v4348 = vadd.f32 %v4286, %v4343
  %s4349 = scalar_lea.vmem [#allocation4], 1024
  %v4350 = vld [vmem:[%s4349] sm:$0xff]
  %v4351 = vld [vmem:[%s4349 + $0x8] sm:$0xff]
  %v4352 = vld [vmem:[%s4349 + $0x10] sm:$0xff]
  %v4353 = vld [vmem:[%s4349 + $0x18] sm:$0xff]
  %v4354 = vld [vmem:[%s4349 + $0x20] sm:$0xff]
  %v4355 = vld [vmem:[%s4349 + $0x28] sm:$0xff]
  %v4356 = vld [vmem:[%s4349 + $0x30] sm:$0xff]
  %v4357 = vld [vmem:[%s4349 + $0x38] sm:$0xff]
  %v4358 = vld [vmem:[%s4349 + $0x40] sm:$0xff]
  %v4359 = vld [vmem:[%s4349 + $0x48] sm:$0xff]
  %v4360 = vld [vmem:[%s4349 + $0x50] sm:$0xff]
  %v4361 = vld [vmem:[%s4349 + $0x58] sm:$0xff]
  %v4362 = vld [vmem:[%s4349 + $0x60] sm:$0xff]
  %v4363 = vld [vmem:[%s4349 + $0x68] sm:$0xff]
  %v4364 = vld [vmem:[%s4349 + $0x70] sm:$0xff]
  %v4365 = vld [vmem:[%s4349 + $0x78] sm:$0xff]
  %4366 = vmatprep.subr.bf16.mxu0 0
  %4367 = vmatpush1.bf16.msra.mxu0 %v4350
  %4368 = vmatprep.subr.bf16.mxu0 0
  %4369 = vmatpush1.bf16.msra.mxu0 %v4351
  %4370 = vmatprep.subr.bf16.mxu0 0
  %4371 = vmatpush1.bf16.msra.mxu0 %v4352
  %4372 = vmatprep.subr.bf16.mxu0 0
  %4373 = vmatpush1.bf16.msra.mxu0 %v4353
  %4374 = vmatprep.subr.bf16.mxu0 0
  %4375 = vmatpush1.bf16.msra.mxu0 %v4354
  %4376 = vmatprep.subr.bf16.mxu0 0
  %4377 = vmatpush1.bf16.msra.mxu0 %v4355
  %4378 = vmatprep.subr.bf16.mxu0 0
  %4379 = vmatpush1.bf16.msra.mxu0 %v4356
  %4380 = vmatprep.subr.bf16.mxu0 0
  %4381 = vmatpush1.bf16.msra.mxu0 %v4357
  %4382 = vmatprep.subr.bf16.mxu0 0
  %4383 = vmatpush1.bf16.msra.mxu0 %v4358
  %4384 = vmatprep.subr.bf16.mxu0 0
  %4385 = vmatpush1.bf16.msra.mxu0 %v4359
  %4386 = vmatprep.subr.bf16.mxu0 0
  %4387 = vmatpush1.bf16.msra.mxu0 %v4360
  %4388 = vmatprep.subr.bf16.mxu0 0
  %4389 = vmatpush1.bf16.msra.mxu0 %v4361
  %4390 = vmatprep.subr.bf16.mxu0 0
  %4391 = vmatpush1.bf16.msra.mxu0 %v4362
  %4392 = vmatprep.subr.bf16.mxu0 0
  %4393 = vmatpush1.bf16.msra.mxu0 %v4363
  %4394 = vmatprep.subr.bf16.mxu0 0
  %4395 = vmatpush1.bf16.msra.mxu0 %v4364
  %4396 = vmatprep.subr.bf16.mxu0 0
  %4397 = vmatpush1.bf16.msra.mxu0 %v4365
  %4398 = vmatprep.mubr.bf16.mxu0 %v3857
  %4399 = vmatmul.mubr.bf16.gmra.mrb[0].mxu0 %v3856
  %v4400 = vpop.f32.mrb[0].mxu0
  %v4401 = vadd.f32 0.0, %v4400
  %v4402 = vpop.f32.mrb[0].mxu0
  %v4403 = vpop.f32.mrb[0].mxu0
  %v4404 = vpop.f32.mrb[0].mxu0
  %4405 = vdwg.mxu0
  %v4406 = vadd.f32 %v4348, %v4401
  %s4407 = scalar_lea.vmem [#allocation4], 1152
  %v4408 = vld [vmem:[%s4407] sm:$0xff]
  %v4409 = vld [vmem:[%s4407 + $0x8] sm:$0xff]
  %v4410 = vld [vmem:[%s4407 + $0x10] sm:$0xff]
  %v4411 = vld [vmem:[%s4407 + $0x18] sm:$0xff]
  %v4412 = vld [vmem:[%s4407 + $0x20] sm:$0xff]
  %v4413 = vld [vmem:[%s4407 + $0x28] sm:$0xff]
  %v4414 = vld [vmem:[%s4407 + $0x30] sm:$0xff]
  %v4415 = vld [vmem:[%s4407 + $0x38] sm:$0xff]
  %v4416 = vld [vmem:[%s4407 + $0x40] sm:$0xff]
  %v4417 = vld [vmem:[%s4407 + $0x48] sm:$0xff]
  %v4418 = vld [vmem:[%s4407 + $0x50] sm:$0xff]
  %v4419 = vld [vmem:[%s4407 + $0x58] sm:$0xff]
  %v4420 = vld [vmem:[%s4407 + $0x60] sm:$0xff]
  %v4421 = vld [vmem:[%s4407 + $0x68] sm:$0xff]
  %v4422 = vld [vmem:[%s4407 + $0x70] sm:$0xff]
  %v4423 = vld [vmem:[%s4407 + $0x78] sm:$0xff]
  %v4426 = vrot.slane %v3856, 1
  %v4427 = vrot.slane %v3857, 1
  %4430 = vmatprep.subr.bf16.mxu0 0
  %4431 = vmatpush1.bf16.msra.mxu0 %v4408
  %4432 = vmatprep.subr.bf16.mxu0 0
  %4433 = vmatpush1.bf16.msra.mxu0 %v4409
  %4434 = vmatprep.subr.bf16.mxu0 0
  %4435 = vmatpush1.bf16.msra.mxu0 %v4410
  %4436 = vmatprep.subr.bf16.mxu0 0
  %4437 = vmatpush1.bf16.msra.mxu0 %v4411
  %4438 = vmatprep.subr.bf16.mxu0 0
  %4439 = vmatpush1.bf16.msra.mxu0 %v4412
  %4440 = vmatprep.subr.bf16.mxu0 0
  %4441 = vmatpush1.bf16.msra.mxu0 %v4413
  %4442 = vmatprep.subr.bf16.mxu0 0
  %4443 = vmatpush1.bf16.msra.mxu0 %v4414
  %4444 = vmatprep.subr.bf16.mxu0 0
  %4445 = vmatpush1.bf16.msra.mxu0 %v4415
  %4446 = vmatprep.subr.bf16.mxu0 0
  %4447 = vmatpush1.bf16.msra.mxu0 %v4416
  %4448 = vmatprep.subr.bf16.mxu0 0
  %4449 = vmatpush1.bf16.msra.mxu0 %v4417
  %4450 = vmatprep.subr.bf16.mxu0 0
  %4451 = vmatpush1.bf16.msra.mxu0 %v4418
  %4452 = vmatprep.subr.bf16.mxu0 0
  %4453 = vmatpush1.bf16.msra.mxu0 %v4419
  %4454 = vmatprep.subr.bf16.mxu0 0
  %4455 = vmatpush1.bf16.msra.mxu0 %v4420
  %4456 = vmatprep.subr.bf16.mxu0 0
  %4457 = vmatpush1.bf16.msra.mxu0 %v4421
  %4458 = vmatprep.subr.bf16.mxu0 0
  %4459 = vmatpush1.bf16.msra.mxu0 %v4422
  %4460 = vmatprep.subr.bf16.mxu0 0
  %4461 = vmatpush1.bf16.msra.mxu0 %v4423
  %4462 = vmatprep.mubr.bf16.mxu0 %v4427
  %4463 = vmatmul.mubr.bf16.gmra.mrb[0].mxu0 %v4426
  %v4464 = vpop.f32.mrb[0].mxu0
  %v4465 = vadd.f32 0.0, %v4464
  %v4466 = vpop.f32.mrb[0].mxu0
  %v4467 = vpop.f32.mrb[0].mxu0
  %v4468 = vpop.f32.mrb[0].mxu0
  %4469 = vdwg.mxu0
  %v4470 = vadd.f32 %v4406, %v4465
  %v4471 = vmul.f32 %v4470, 0.003125
  %vm4472 = vcmask 130048
  %v4473 = vsel %vm4472, %v4471, 0.0
  %v4474 = vmul.f32 %v4473, %v4473
  %vm4475 = vcmask 1041408
  %v4476 = vsel %vm4475, %v4474, 0.0
  %4477 = vadd.xlane.f32.xlu0 %v4476
  %v4478 = vpop.xlane.xlu0 %4477
  %v4479 = vadd.f32 %v4478, 1e-12
  %v4480 = vrsqrt.pop %v4479
  %v4481 = vmul.f32 %v4478, %v4480
  %v4482 = vadd.f32 %v4478, 1.0
  %v4483 = vrcp.pop %v4482
  %v4484 = vmul.f32 %v4481, %v4483
  %v4485 = vmul.f32 %v4473, %v4484
  %v4486 = vmul.f32 %v4485, %v4485
  %v4487 = vsel %vm4475, %v4486, 0.0
  %4488 = vadd.xlane.f32.xlu0 %v4487
  %v4489 = vpop.xlane.xlu0 %4488
  %v4490 = vrsqrt.pop %v4489
  %v4491 = vmul.f32 %v4489, %v4490
  %vm4492 = vcmp.eq.f32.partialorder %v4489, inf
  %v4493 = vsel %vm4492, %v4489, %v4491
  %vm4494 = vcmp.eq.f32.partialorder %v4489, 0.0
  %v4495 = vand.u32 %v4489, 2147483648
  %v4496 = vsel %vm4494, %v4495, %v4493
  %vm4497 = vcmp.eq.s32.totalorder %v3096, 16
  %v4498 = vsel %vm4497, %v4496, %v4485
  %4499 = vst [vmem:[%s5] sm:$0x3] %v4498
  // Predicated region
  $region118: #{capsule_net_forward.1} parent=0 // pred_check
    _
  $region119: #{capsule_net_forward.1} parent=0 // pred_check_branch
    %4501 = sbr.rel (0) target = $region121
  $region120: #{capsule_net_forward.1} parent=0 // pred_region
    _
  $region121: #{capsule_net_forward.1} parent=0 // pred_fallthru
    _
  // Predicated region
  $region122: #{capsule_net_forward.1} parent=0 // pred_check
    _
  $region123: #{capsule_net_forward.1} parent=0 // pred_check_branch
    %4503 = sbr.rel (0) target = $region125
  $region124: #{capsule_net_forward.1} parent=0 // pred_region
    _
  $region125: #{capsule_net_forward.1} parent=0 // pred_fallthru
    _
  %4504 = vsyncmov [#allocation5]
  %s4505 = vpop.sfrf %4504
  %p4506 = scmp.eq.s32.totalorder %s4505, 0
  %p4507 = pneg %p4506
  %4509 = shalt.err (%p4507)
  %s4510 = scalar_lea.sflag [#allocation5], 1
  %4511 = vsyncmov %s4510
  %s4512 = vpop.sfrf %4511
  %p4513 = scmp.eq.s32.totalorder %s4512, 0
  %p4514 = pneg %p4513
  %4516 = shalt.err (%p4514)
  %s4517 = scalar_lea.sflag [#allocation5], 2
  %4518 = vsyncmov %s4517
  %s4519 = vpop.sfrf %4518
  %p4520 = scmp.eq.s32.totalorder %s4519, 0
  %p4521 = pneg %p4520
  %4523 = shalt.err (%p4521)

</llo_original>
